<compile_context>
chip_gen: v7x
topology: tpu7x:2x2x1
jax: 0.10.0
libtpu: 0.0.40
codegen_flags: <defaults>
</compile_context>

<pallas_src>
import jax
import jax.numpy as jnp
from jax.experimental import pallas as pl
from jax.experimental.pallas import tpu as pltpu

HIDDEN = 128   # hidden width of the MLP
LANE = 128     # TPU vreg lane width


def mlp_kernel(x_ref, w1_ref, b1_ref, w2_ref, b2_ref, w3_ref, b3_ref, o_ref):
    # layer_in: f32 x @ f32 w1 -> f32 (K = in_features is small; MXU has slack
    # and f32 keeps layer 1 numerically identical to the PyTorch reference).
    h = jnp.dot(x_ref[...], w1_ref[...], preferred_element_type=jnp.float32)
    h = jnp.maximum(h + b1_ref[...], 0.0)
    # hidden1: (TM,128)bf16 @ (128,128)bf16 -> f32 accumulate on the MXU.
    h = jnp.dot(h.astype(jnp.bfloat16), w2_ref[...],
                preferred_element_type=jnp.float32)
    h = jnp.maximum(h + b2_ref[...], 0.0)
    # layer_out (128 -> 1): VPU multiply + XLU lane reduction, producing a
    # lane-dense (TM//128, 128) slab directly (no N=1 matmul, no masked store).
    tm = h.shape[0]
    h3 = h.reshape(tm // LANE, LANE, HIDDEN)       # sublane-only split (free)
    out = jnp.sum(h3 * w3_ref[...], axis=-1)       # w3_ref is (1, HIDDEN)
    out = out + b3_ref[0, 0]                       # scalar bias from SMEM
    o_ref[...] = out.astype(o_ref.dtype)


def _round_up(n, m):
    return ((n + m - 1) // m) * m


def _select_tm(bp, tm_max):
    """Pick the batch tile (rows). Single block for small batches; otherwise
    >=2 grid steps (keeps both v7x TensorCores busy) with tm a multiple of
    1024 so the output block's sublane dim stays a multiple of 8."""
    if bp <= 1024:
        return bp                                  # one block == full array
    tm = _round_up(pl.cdiv(bp, 2), 1024)
    return min(tm, max(tm_max, 1024))


def prepare_params(params):
    """One-time param prep (hoisted out of the per-call forward path)."""
    w1, b1, w2, b2, w3, b3 = params
    return (
        w1.astype(jnp.float32),                    # layer_in stays f32
        b1.reshape(1, HIDDEN).astype(jnp.float32),
        w2.astype(jnp.bfloat16),                   # hidden1 on the bf16 MXU path
        b2.reshape(1, HIDDEN).astype(jnp.float32),
        w3.reshape(1, HIDDEN).astype(jnp.float32), # layer_out weights, lane-major
        b3.reshape(1, 1).astype(jnp.float32),      # scalar bias -> SMEM
    )


def regular_net_forward(x, prepped_params, tm_max=4096):
    """x: [B, in_features] float32. Returns [B, 1] float32."""
    w1, b1, w2b, b2, w3_row, b3_s = prepped_params
    B, F = x.shape
    assert w1.shape == (F, HIDDEN)
    # TODO(synk): for very large in_features add a K grid axis ("arbitrary")
    # with an f32 VMEM accumulator; currently the whole (tm, F) x block and
    # (F, 128) w1 are loaded per grid step.

    Bp = _round_up(B, LANE)            # lane-dense output slab size
    tm = _select_tm(Bp, tm_max)
    grid = (pl.cdiv(Bp, tm),)          # == cdiv(B, tm); boundary blocks masked
    gm = tm // LANE

    y_slab = pl.pallas_call(
        mlp_kernel,
        out_shape=jax.ShapeDtypeStruct((Bp // LANE, LANE), jnp.float32),
        grid=grid,
        in_specs=[
            pl.BlockSpec((tm, F), lambda i: (i, 0)),           # x: tiled over batch
            pl.BlockSpec((F, HIDDEN), lambda i: (0, 0)),       # w1: VMEM-resident
            pl.BlockSpec((1, HIDDEN), lambda i: (0, 0)),       # b1
            pl.BlockSpec((HIDDEN, HIDDEN), lambda i: (0, 0)),  # w2 (bf16)
            pl.BlockSpec((1, HIDDEN), lambda i: (0, 0)),       # b2
            pl.BlockSpec((1, HIDDEN), lambda i: (0, 0)),       # w3 (row vector)
            pl.BlockSpec(memory_space=pltpu.MemorySpace.SMEM), # b3 scalar
        ],
        out_specs=pl.BlockSpec((gm, LANE), lambda i: (i, 0)),  # lane-dense slab
        compiler_params=pltpu.CompilerParams(
            dimension_semantics=("parallel",)),
    )(x, w1, b1, w2b, b2, w3_row, b3_s)

    # Free layout plumbing: slab (Bp//128, 128) -> (Bp, 1) -> drop padded rows.
    return y_slab.reshape(Bp, 1)[:B]


def init_params(key, in_features):
    """Deterministic init matching nn.Linear shapes (weights pre-transposed)."""
    k1, k2, k3, k4, k5, k6 = jax.random.split(key, 6)

    def lin(kw, kb, fan_in, fan_out):
        bound = 1.0 / jnp.sqrt(fan_in)
        w = jax.random.uniform(kw, (fan_in, fan_out), jnp.float32, -bound, bound)
        b = jax.random.uniform(kb, (1, fan_out), jnp.float32, -bound, bound)
        return w, b

    w1, b1 = lin(k1, k2, in_features, HIDDEN)   # layer_in
    w2, b2 = lin(k3, k4, HIDDEN, HIDDEN)        # hidden1
    w3, b3 = lin(k5, k6, HIDDEN, 1)             # layer_out
    return w1, b1, w2, b2, w3, b3


if __name__ == "__main__":
    key = jax.random.PRNGKey(0)
    kx, kp = jax.random.split(key)

    # Non-multiple-of-128 batch + small tm_max -> 3-step grid; exercises both
    # the multi-tile path and Pallas boundary-block read/write masking.
    batch, in_features = 2500, 32
    x = jax.random.normal(kx, (batch, in_features), jnp.float32)
    params = init_params(kp, in_features)
    prepped = prepare_params(params)        # one-time weight prep (hoisted)

    fwd = jax.jit(regular_net_forward, static_argnames=("tm_max",))
    y = fwd(x, prepped, tm_max=1024)
    jax.block_until_ready(y)
    assert y.shape == (batch, 1)

    # Reference in plain JAX with the same math (layer 1 f32, layer 2
    # bf16-in / f32-accumulate, layer 3 f32).
    w1, b1, w2, b2, w3, b3 = params
    h = jnp.maximum(jnp.dot(x, w1, preferred_element_type=jnp.float32) + b1, 0.0)
    h = jnp.maximum(
        jnp.dot(h.astype(jnp.bfloat16), w2.astype(jnp.bfloat16),
                preferred_element_type=jnp.float32) + b2, 0.0)
    ref = jnp.dot(h, w3) + b3

    assert jnp.allclose(y, ref, atol=2e-3, rtol=2e-3), (
        float(jnp.max(jnp.abs(y - ref))))

    # Also check the default (single-tile) path at a tiny batch.
    y_small = jax.jit(regular_net_forward)(x[:7], prepped)
    jax.block_until_ready(y_small)
    assert jnp.allclose(y_small, ref[:7], atol=2e-3, rtol=2e-3)

    print("KERNEL_OK")
</pallas_src>

<mosaic_0001>
module attributes {stable_mosaic.version = 11 : i64} {
  func.func @mlp_kernel(%arg0: i32, %arg1: memref<1024x32xf32, #tpu.memory_space<vmem>>, %arg2: memref<32x128xf32, #tpu.memory_space<vmem>>, %arg3: memref<1x128xf32, #tpu.memory_space<vmem>>, %arg4: memref<128x128xbf16, #tpu.memory_space<vmem>>, %arg5: memref<1x128xf32, #tpu.memory_space<vmem>>, %arg6: memref<1x128xf32, #tpu.memory_space<vmem>>, %arg7: memref<1x1xf32, #tpu.memory_space<smem>>, %arg8: memref<8x128xf32, #tpu.memory_space<vmem>>) attributes {dimension_semantics = [#tpu.dimension_semantics<parallel>], iteration_bounds = array<i64: 3>, scalar_prefetch = 0 : i64, scratch_operands = 0 : i64, tpu.core_type = #tpu.core_type<tc>, window_params = [{transform_indices = @transform_0, window_bounds = array<i64: 1024, 32>}, {pipeline_mode = #tpu.pipeline_mode<synchronous>, transform_indices = @transform_1, window_bounds = array<i64: 32, 128>}, {pipeline_mode = #tpu.pipeline_mode<synchronous>, transform_indices = @transform_2, window_bounds = array<i64: 1, 128>}, {pipeline_mode = #tpu.pipeline_mode<synchronous>, transform_indices = @transform_3, window_bounds = array<i64: 128, 128>}, {pipeline_mode = #tpu.pipeline_mode<synchronous>, transform_indices = @transform_4, window_bounds = array<i64: 1, 128>}, {pipeline_mode = #tpu.pipeline_mode<synchronous>, transform_indices = @transform_5, window_bounds = array<i64: 1, 128>}, {transform_indices = @transform_6, window_bounds = array<i64: 1, 1>}, {transform_indices = @transform_7, window_bounds = array<i64: 8, 128>}]} {
    %c0 = arith.constant 0 : index
    %c0_0 = arith.constant 0 : index
    %0 = vector.load %arg1[%c0, %c0_0] : memref<1024x32xf32, #tpu.memory_space<vmem>>, vector<1024x32xf32>
    %c0_1 = arith.constant 0 : index
    %c0_2 = arith.constant 0 : index
    %1 = vector.load %arg2[%c0_1, %c0_2] : memref<32x128xf32, #tpu.memory_space<vmem>>, vector<32x128xf32>
    %cst = arith.constant dense<0.000000e+00> : vector<1024x128xf32>
    %2 = tpu.matmul %0, %1, %cst {dimension_numbers = #tpu.dot_dimension_numbers<[1], [0], [0], [1], [0, 0, 1, 1], [], []>} : vector<1024x32xf32>, vector<32x128xf32>, vector<1024x128xf32> -> vector<1024x128xf32>
    %c0_3 = arith.constant 0 : index
    %c0_4 = arith.constant 0 : index
    %3 = vector.load %arg3[%c0_3, %c0_4] : memref<1x128xf32, #tpu.memory_space<vmem>>, vector<1x128xf32>
    %4 = vector.broadcast %3 : vector<1x128xf32> to vector<1024x128xf32>
    %5 = arith.addf %2, %4 : vector<1024x128xf32>
    %cst_5 = arith.constant 0.000000e+00 : f32
    %6 = vector.broadcast %cst_5 : f32 to vector<1024x128xf32>
    %7 = arith.maximumf %5, %6 : vector<1024x128xf32>
    %8 = arith.truncf %7 : vector<1024x128xf32> to vector<1024x128xbf16>
    %c0_6 = arith.constant 0 : index
    %c0_7 = arith.constant 0 : index
    %9 = vector.load %arg4[%c0_6, %c0_7] : memref<128x128xbf16, #tpu.memory_space<vmem>>, vector<128x128xbf16>
    %cst_8 = arith.constant dense<0.000000e+00> : vector<1024x128xf32>
    %10 = tpu.matmul %8, %9, %cst_8 {dimension_numbers = #tpu.dot_dimension_numbers<[1], [0], [0], [1], [0, 0, 1, 1], [], []>} : vector<1024x128xbf16>, vector<128x128xbf16>, vector<1024x128xf32> -> vector<1024x128xf32>
    %c0_9 = arith.constant 0 : index
    %c0_10 = arith.constant 0 : index
    %11 = vector.load %arg5[%c0_9, %c0_10] : memref<1x128xf32, #tpu.memory_space<vmem>>, vector<1x128xf32>
    %12 = vector.broadcast %11 : vector<1x128xf32> to vector<1024x128xf32>
    %13 = arith.addf %10, %12 : vector<1024x128xf32>
    %cst_11 = arith.constant 0.000000e+00 : f32
    %14 = vector.broadcast %cst_11 : f32 to vector<1024x128xf32>
    %15 = arith.maximumf %13, %14 : vector<1024x128xf32>
    %16 = vector.shape_cast %15 : vector<1024x128xf32> to vector<8x128x128xf32>
    %c0_12 = arith.constant 0 : index
    %c0_13 = arith.constant 0 : index
    %17 = vector.load %arg6[%c0_12, %c0_13] : memref<1x128xf32, #tpu.memory_space<vmem>>, vector<1x128xf32>
    %18 = vector.shape_cast %17 : vector<1x128xf32> to vector<1x1x128xf32>
    %19 = vector.broadcast %18 : vector<1x1x128xf32> to vector<8x128x128xf32>
    %20 = arith.mulf %16, %19 : vector<8x128x128xf32>
    %cst_14 = arith.constant dense<0.000000e+00> : vector<8x128xf32>
    %21 = vector.multi_reduction <add>, %20, %cst_14 [2] : vector<8x128x128xf32> to vector<8x128xf32>
    %c0_15 = arith.constant 0 : index
    %c0_16 = arith.constant 0 : index
    %22 = memref.load %arg7[%c0_15, %c0_16] : memref<1x1xf32, #tpu.memory_space<smem>>
    %23 = vector.broadcast %22 : f32 to vector<8x128xf32>
    %24 = arith.addf %21, %23 : vector<8x128xf32>
    %c0_17 = arith.constant 0 : index
    %c0_18 = arith.constant 0 : index
    %25 = vector.load %arg8[%c0_17, %c0_18] : memref<8x128xf32, #tpu.memory_space<vmem>>, vector<8x128xf32>
    tpu.vector_store %arg8[%c0_17, %c0_18], %24 {strides = array<i32>} : memref<8x128xf32, #tpu.memory_space<vmem>>, vector<8x128xf32>,
    return
  }
  func.func @transform_0(%arg0: i32) -> (i32, i32) {
    %c0_i32 = arith.constant 0 : i32
    %c0_i32_0 = arith.constant 0 : i32
    return %arg0, %c0_i32 : i32, i32
  }
  func.func @transform_1(%arg0: i32) -> (i32, i32) {
    %c0_i32 = arith.constant 0 : i32
    %c0_i32_0 = arith.constant 0 : i32
    %c0_i32_1 = arith.constant 0 : i32
    return %c0_i32, %c0_i32_0 : i32, i32
  }
  func.func @transform_2(%arg0: i32) -> (i32, i32) {
    %c0_i32 = arith.constant 0 : i32
    %c0_i32_0 = arith.constant 0 : i32
    %c0_i32_1 = arith.constant 0 : i32
    return %c0_i32, %c0_i32_0 : i32, i32
  }
  func.func @transform_3(%arg0: i32) -> (i32, i32) {
    %c0_i32 = arith.constant 0 : i32
    %c0_i32_0 = arith.constant 0 : i32
    %c0_i32_1 = arith.constant 0 : i32
    return %c0_i32, %c0_i32_0 : i32, i32
  }
  func.func @transform_4(%arg0: i32) -> (i32, i32) {
    %c0_i32 = arith.constant 0 : i32
    %c0_i32_0 = arith.constant 0 : i32
    %c0_i32_1 = arith.constant 0 : i32
    return %c0_i32, %c0_i32_0 : i32, i32
  }
  func.func @transform_5(%arg0: i32) -> (i32, i32) {
    %c0_i32 = arith.constant 0 : i32
    %c0_i32_0 = arith.constant 0 : i32
    %c0_i32_1 = arith.constant 0 : i32
    return %c0_i32, %c0_i32_0 : i32, i32
  }
  func.func @transform_6(%arg0: i32) -> (i32, i32) {
    %c0_i32 = arith.constant 0 : i32
    %c0_i32_0 = arith.constant 0 : i32
    %c0_i32_1 = arith.constant 0 : i32
    return %c0_i32, %c0_i32_0 : i32, i32
  }
  func.func @transform_7(%arg0: i32) -> (i32, i32) {
    %c0_i32 = arith.constant 0 : i32
    %c0_i32_0 = arith.constant 0 : i32
    return %arg0, %c0_i32 : i32, i32
  }
}

</mosaic_0001>

<llo_original>
// kernel: regular_net_forward.1
$region0: #{regular_net_forward.1}
  #allocation0 [shape = 'u32[]', space=smem, size = 0x4, offset = 0x4, fixed_abs, tag = 'smem constant byte address 0x4 - core index']
  #allocation1 [shape = 'u32[144,128]{1,0:T(1,128)}', space=vmem, size = 0x12000, scoped, tag = 'internal scratch']
  #allocation2 [shape = 'f32[1,1]{1,0:T(1,128)S(6)}', space=smem, size = 0x200, scoped, tag = 'scoped memory for regular_net_forward.1']
  %s0 = inlined_call_operand.vmem [shape: f32[2500,32], index: 0, kind: input, shape index: {}]
  %s1 = inlined_call_operand.vmem [shape: f32[32,128], index: 1, kind: input, shape index: {}]
  %s2 = inlined_call_operand.vmem [shape: f32[1,128], index: 2, kind: input, shape index: {}]
  %s3 = inlined_call_operand.vmem [shape: bf16[128,128], index: 3, kind: input, shape index: {}]
  %s4 = inlined_call_operand.vmem [shape: f32[1,128], index: 4, kind: input, shape index: {}]
  %s5 = inlined_call_operand.vmem [shape: f32[1,128], index: 5, kind: input, shape index: {}]
  %s6 = inlined_call_operand.<no memory space> [shape: f32[1,1], index: 6, kind: input, shape index: {}]
  %s7 = inlined_call_operand.vmem [shape: f32[20,128], index: 7, kind: output, shape index: {}]
  %s8 = sld [smem:[#allocation0]]
  $region61: #{regular_net_forward.1} parent=0
    _
  %s10 = ssub.s32 1, %s8
  %s11 = scalar_select 0, %s10, %s8
  %12 = sst [smem:[#allocation2]] %s6
  loop: start=0, step=1, limit=5
  $region2: #{regular_net_forward.1} parent=0 // loop_pre_header
    _
  $region3: #{regular_net_forward.1} parent=0 // loop_header
    %s14 = sphi 0, %s18
    %p15 = scmp.ge.s32.totalorder %s14, 5
    %s24 = sphi 0, %s26
    %s27 = sphi 0, %s24
    %s28 = sphi 0, %s27
    %s44 = sphi 0, %s28
    %s48 = sphi 0, %s48
    %s50 = sphi 0, %s48
    %s51 = sphi 0, %s50
    %s65 = sphi 0, %s51
    %s69 = sphi 0, %s69
    %s71 = sphi 0, %s69
    %s72 = sphi 0, %s71
    %s86 = sphi 0, %s72
    %s90 = sphi 0, %s90
    %s92 = sphi 0, %s90
    %s93 = sphi 0, %s92
    %s107 = sphi 0, %s93
    %s111 = sphi 0, %s111
    %s113 = sphi 0, %s111
    %s114 = sphi 0, %s113
    %s128 = sphi 0, %s114
    %s132 = sphi 0, %s132
    %s134 = sphi 0, %s132
    %s135 = sphi 0, %s134
    %s149 = sphi 0, %s135
    %s153 = sphi 0, %s153
    %s155 = sphi 0, %s153
    %s156 = sphi 0, %s155
    %s170 = sphi 0, %s156
    %s176 = sphi 0, %s178
    %s179 = sphi 0, %s176
    %s180 = sphi 0, %s179
    %s196 = sphi 0, %s180
  $region4: #{regular_net_forward.1} parent=0 // loop_header_branch
    %17 = sbr.rel (%p15) target = $region8
  $region5: #{regular_net_forward.1} parent=0 // loop_body
    %s19 = ssub.s32 %s14, 1
    %s20 = ssub.s32 %s14, 2
    %s21 = sadd.s32 %s14, 1
    %s22 = ssub.s32 %s14, %s21
    %p23 = scmp.eq.s32.totalorder %s22, 0
    %s25 = sadd.s32 %s24, 1
    %s26 = scalar_select %p23, %s24, %s25
    %p29 = pneg %p23
    %p30 = scmp.eq.s32.totalorder %s14, 2
    %p31 = por %p29, %p30
    %p32 = scmp.ne.s32.totalorder %s24, %s27
    %p33 = scmp.eq.s32.totalorder %s14, 0
    %p34 = por %p32, %p33
    %p35 = scmp.ne.s32.totalorder %s24, %s27
    %p36 = scmp.eq.s32.totalorder %s19, 2
    %p37 = por %p35, %p36
    %p38 = scmp.ne.s32.totalorder %s27, %s28
    %p39 = scmp.eq.s32.totalorder %s19, 0
    %p40 = por %p38, %p39
    %p41 = scmp.ne.s32.totalorder %s27, %s28
    %p42 = scmp.eq.s32.totalorder %s20, 2
    %p43 = por %p41, %p42
    %p45 = scmp.ne.s32.totalorder %s28, %s44
    %p46 = scmp.eq.s32.totalorder %s20, 0
    %p47 = por %p45, %p46
    %s49 = sadd.s32 %s48, 1
    %p52 = scmp.eq.s32.totalorder %s14, 2
    %p53 = scmp.ne.s32.totalorder %s48, %s50
    %p54 = scmp.eq.s32.totalorder %s14, 0
    %p55 = por %p53, %p54
    %p56 = scmp.ne.s32.totalorder %s48, %s50
    %p57 = scmp.eq.s32.totalorder %s19, 2
    %p58 = por %p56, %p57
    %p59 = scmp.ne.s32.totalorder %s50, %s51
    %p60 = scmp.eq.s32.totalorder %s19, 0
    %p61 = por %p59, %p60
    %p62 = scmp.ne.s32.totalorder %s50, %s51
    %p63 = scmp.eq.s32.totalorder %s20, 2
    %p64 = por %p62, %p63
    %p66 = scmp.ne.s32.totalorder %s51, %s65
    %p67 = scmp.eq.s32.totalorder %s20, 0
    %p68 = por %p66, %p67
    %s70 = sadd.s32 %s69, 1
    %p73 = scmp.eq.s32.totalorder %s14, 2
    %p74 = scmp.ne.s32.totalorder %s69, %s71
    %p75 = scmp.eq.s32.totalorder %s14, 0
    %p76 = por %p74, %p75
    %p77 = scmp.ne.s32.totalorder %s69, %s71
    %p78 = scmp.eq.s32.totalorder %s19, 2
    %p79 = por %p77, %p78
    %p80 = scmp.ne.s32.totalorder %s71, %s72
    %p81 = scmp.eq.s32.totalorder %s19, 0
    %p82 = por %p80, %p81
    %p83 = scmp.ne.s32.totalorder %s71, %s72
    %p84 = scmp.eq.s32.totalorder %s20, 2
    %p85 = por %p83, %p84
    %p87 = scmp.ne.s32.totalorder %s72, %s86
    %p88 = scmp.eq.s32.totalorder %s20, 0
    %p89 = por %p87, %p88
    %s91 = sadd.s32 %s90, 1
    %p94 = scmp.eq.s32.totalorder %s14, 2
    %p95 = scmp.ne.s32.totalorder %s90, %s92
    %p96 = scmp.eq.s32.totalorder %s14, 0
    %p97 = por %p95, %p96
    %p98 = scmp.ne.s32.totalorder %s90, %s92
    %p99 = scmp.eq.s32.totalorder %s19, 2
    %p100 = por %p98, %p99
    %p101 = scmp.ne.s32.totalorder %s92, %s93
    %p102 = scmp.eq.s32.totalorder %s19, 0
    %p103 = por %p101, %p102
    %p104 = scmp.ne.s32.totalorder %s92, %s93
    %p105 = scmp.eq.s32.totalorder %s20, 2
    %p106 = por %p104, %p105
    %p108 = scmp.ne.s32.totalorder %s93, %s107
    %p109 = scmp.eq.s32.totalorder %s20, 0
    %p110 = por %p108, %p109
    %s112 = sadd.s32 %s111, 1
    %p115 = scmp.eq.s32.totalorder %s14, 2
    %p116 = scmp.ne.s32.totalorder %s111, %s113
    %p117 = scmp.eq.s32.totalorder %s14, 0
    %p118 = por %p116, %p117
    %p119 = scmp.ne.s32.totalorder %s111, %s113
    %p120 = scmp.eq.s32.totalorder %s19, 2
    %p121 = por %p119, %p120
    %p122 = scmp.ne.s32.totalorder %s113, %s114
    %p123 = scmp.eq.s32.totalorder %s19, 0
    %p124 = por %p122, %p123
    %p125 = scmp.ne.s32.totalorder %s113, %s114
    %p126 = scmp.eq.s32.totalorder %s20, 2
    %p127 = por %p125, %p126
    %p129 = scmp.ne.s32.totalorder %s114, %s128
    %p130 = scmp.eq.s32.totalorder %s20, 0
    %p131 = por %p129, %p130
    %s133 = sadd.s32 %s132, 1
    %p136 = scmp.eq.s32.totalorder %s14, 2
    %p137 = scmp.ne.s32.totalorder %s132, %s134
    %p138 = scmp.eq.s32.totalorder %s14, 0
    %p139 = por %p137, %p138
    %p140 = scmp.ne.s32.totalorder %s132, %s134
    %p141 = scmp.eq.s32.totalorder %s19, 2
    %p142 = por %p140, %p141
    %p143 = scmp.ne.s32.totalorder %s134, %s135
    %p144 = scmp.eq.s32.totalorder %s19, 0
    %p145 = por %p143, %p144
    %p146 = scmp.ne.s32.totalorder %s134, %s135
    %p147 = scmp.eq.s32.totalorder %s20, 2
    %p148 = por %p146, %p147
    %p150 = scmp.ne.s32.totalorder %s135, %s149
    %p151 = scmp.eq.s32.totalorder %s20, 0
    %p152 = por %p150, %p151
    %s154 = sadd.s32 %s153, 1
    %p157 = scmp.eq.s32.totalorder %s14, 2
    %p158 = scmp.ne.s32.totalorder %s153, %s155
    %p159 = scmp.eq.s32.totalorder %s14, 0
    %p160 = por %p158, %p159
    %p161 = scmp.ne.s32.totalorder %s153, %s155
    %p162 = scmp.eq.s32.totalorder %s19, 2
    %p163 = por %p161, %p162
    %p164 = scmp.ne.s32.totalorder %s155, %s156
    %p165 = scmp.eq.s32.totalorder %s19, 0
    %p166 = por %p164, %p165
    %p167 = scmp.ne.s32.totalorder %s155, %s156
    %p168 = scmp.eq.s32.totalorder %s20, 2
    %p169 = por %p167, %p168
    %p171 = scmp.ne.s32.totalorder %s156, %s170
    %p172 = scmp.eq.s32.totalorder %s20, 0
    %p173 = por %p171, %p172
    %s174 = ssub.s32 %s14, %s21
    %p175 = scmp.eq.s32.totalorder %s174, 0
    %s177 = sadd.s32 %s176, 1
    %s178 = scalar_select %p175, %s176, %s177
    %p181 = pneg %p175
    %p182 = scmp.eq.s32.totalorder %s14, 2
    %p183 = por %p181, %p182
    %p184 = scmp.ne.s32.totalorder %s176, %s179
    %p185 = scmp.eq.s32.totalorder %s14, 0
    %p186 = por %p184, %p185
    %p187 = scmp.ne.s32.totalorder %s176, %s179
    %p188 = scmp.eq.s32.totalorder %s19, 2
    %p189 = por %p187, %p188
    %p190 = scmp.ne.s32.totalorder %s179, %s180
    %p191 = scmp.eq.s32.totalorder %s19, 0
    %p192 = por %p190, %p191
    %p193 = scmp.ne.s32.totalorder %s179, %s180
    %p194 = scmp.eq.s32.totalorder %s20, 2
    %p195 = por %p193, %p194
    %p197 = scmp.ne.s32.totalorder %s180, %s196
    %p198 = scmp.eq.s32.totalorder %s20, 0
    %p199 = por %p197, %p198
    %p200 = scmp.le.s32.totalorder 1, %s14
    %p201 = scmp.lt.s32.totalorder %s14, 4
    %p202 = pnand %p200, %p201
    %p203 = pneg %p202
    // Predicated region
    $region9: #{regular_net_forward.1} parent=5 // pred_check
      _
    $region10: #{regular_net_forward.1} parent=5 // pred_check_branch
      %205 = sbr.rel (%p202) target = $region12
    $region11: #{regular_net_forward.1} parent=5 // pred_region
      %s206 = ssub.s32 %s14, 1
      // Predicated region
      $region13: #{regular_net_forward.1} parent=11 // pred_check
        %p207 = pneg %p61
      $region14: #{regular_net_forward.1} parent=11 // pred_check_branch
        %209 = sbr.rel (%p207) target = $region16
      $region15: #{regular_net_forward.1} parent=11 // pred_region
        _
      $region16: #{regular_net_forward.1} parent=11 // pred_fallthru
        _
      // Predicated region
      $region17: #{regular_net_forward.1} parent=11 // pred_check
        %p210 = pneg %p82
      $region18: #{regular_net_forward.1} parent=11 // pred_check_branch
        %212 = sbr.rel (%p210) target = $region20
      $region19: #{regular_net_forward.1} parent=11 // pred_region
        _
      $region20: #{regular_net_forward.1} parent=11 // pred_fallthru
        _
      // Predicated region
      $region21: #{regular_net_forward.1} parent=11 // pred_check
        %p213 = pneg %p103
      $region22: #{regular_net_forward.1} parent=11 // pred_check_branch
        %215 = sbr.rel (%p213) target = $region24
      $region23: #{regular_net_forward.1} parent=11 // pred_region
        _
      $region24: #{regular_net_forward.1} parent=11 // pred_fallthru
        _
      // Predicated region
      $region25: #{regular_net_forward.1} parent=11 // pred_check
        %p216 = pneg %p124
      $region26: #{regular_net_forward.1} parent=11 // pred_check_branch
        %218 = sbr.rel (%p216) target = $region28
      $region27: #{regular_net_forward.1} parent=11 // pred_region
        _
      $region28: #{regular_net_forward.1} parent=11 // pred_fallthru
        _
      // Predicated region
      $region29: #{regular_net_forward.1} parent=11 // pred_check
        %p219 = pneg %p145
      $region30: #{regular_net_forward.1} parent=11 // pred_check_branch
        %221 = sbr.rel (%p219) target = $region32
      $region31: #{regular_net_forward.1} parent=11 // pred_region
        _
      $region32: #{regular_net_forward.1} parent=11 // pred_fallthru
        _
      // Predicated region
      $region33: #{regular_net_forward.1} parent=11 // pred_check
        %p222 = pneg %p166
      $region34: #{regular_net_forward.1} parent=11 // pred_check_branch
        %224 = sbr.rel (%p222) target = $region36
      $region35: #{regular_net_forward.1} parent=11 // pred_region
        _
      $region36: #{regular_net_forward.1} parent=11 // pred_fallthru
        _
    $region12: #{regular_net_forward.1} parent=5 // pred_fallthru
      _
    %p225 = scmp.lt.s32.totalorder %s14, 3
    // Predicated region
    $region37: #{regular_net_forward.1} parent=5 // pred_check
      %p226 = pneg %p225
    $region38: #{regular_net_forward.1} parent=5 // pred_check_branch
      %228 = sbr.rel (%p226) target = $region40
    $region39: #{regular_net_forward.1} parent=5 // pred_region
      // Predicated region
      $region41: #{regular_net_forward.1} parent=39 // pred_check
        %p229 = pneg %p34
      $region42: #{regular_net_forward.1} parent=39 // pred_check_branch
        %231 = sbr.rel (%p229) target = $region44
      $region43: #{regular_net_forward.1} parent=39 // pred_region
        %s232 = smul.u32 128, %s14
        %s233 = ssub.s32 313, %s232
        %p234 = scmp.lt.s32.totalorder %s233, 128
        %s235 = scalar_select %p234, %s233, 128
        %s236 = smul.u32 128, %s235
        %p237 = scmp.lt.s32.totalorder %s232, 312
        %s238 = scalar_select %p237, %s232, 312
        %s239 = smul.addr %s238, 8
        %s240 = scalar_lea.vmem %s0, %s239
        %s241 = smul.u32 128, %s14
        %s242 = ssub.s32 313, %s241
        %p243 = scmp.lt.s32.totalorder %s242, 128
        %s244 = scalar_select %p243, %s242, 128
        %s245 = smul.u32 128, %s244
      $region44: #{regular_net_forward.1} parent=39 // pred_fallthru
        _
    $region40: #{regular_net_forward.1} parent=5 // pred_fallthru
      _
    %p246 = scmp.le.s32.totalorder 1, %s14
    %p247 = scmp.lt.s32.totalorder %s14, 4
    %p248 = pnand %p246, %p247
    %p249 = pneg %p248
    // Predicated region
    $region45: #{regular_net_forward.1} parent=5 // pred_check
      _
    $region46: #{regular_net_forward.1} parent=5 // pred_check_branch
      %251 = sbr.rel (%p248) target = $region48
    $region47: #{regular_net_forward.1} parent=5 // pred_region
      %s252 = ssub.s32 %s14, 1
      %s253 = smul.u32 128, %s19
      %s254 = ssub.s32 313, %s253
      %p255 = scmp.lt.s32.totalorder %s254, 128
      %s256 = scalar_select %p255, %s254, 128
      %s257 = smul.u32 128, %s256
      %p258 = scmp.lt.s32.totalorder %s253, 312
      %s259 = scalar_select %p258, %s253, 312
      %s260 = smul.addr %s259, 8
      %s261 = scalar_lea.vmem %s0, %s260
      %p262 = pneg %p40
      %p263 = pneg %p37
      %p264 = pneg %p61
      %p265 = pneg %p58
      %p266 = pneg %p82
      %p267 = pneg %p79
      %p268 = pneg %p103
      %p269 = pneg %p100
      %p270 = pneg %p124
      %p271 = pneg %p121
      %p272 = pneg %p145
      %p273 = pneg %p142
      %p274 = pneg %p166
      %p275 = pneg %p163
      %p276 = pneg %p192
      %p277 = pneg %p189
      %p278 = scmp.lt.s32.totalorder %s19, 2
      %s279 = scalar_select %p278, %s19, 2
      %s280 = smul.addr %s279, 8
      %s281 = scalar_lea.vmem %s7, %s280
      %s282 = smul.u32 128, %s19
      %s283 = ssub.s32 313, %s282
      %p284 = scmp.lt.s32.totalorder %s283, 128
      %s285 = scalar_select %p284, %s283, 128
      %s286 = smul.u32 128, %s285
      %p287 = scmp.lt.s32.totalorder %s282, 312
      %s288 = scalar_select %p287, %s282, 312
      %s289 = smul.addr %s288, 8
      %s290 = scalar_lea.vmem %s0, %s289
      %s291 = smul.u32 128, %s19
      %s292 = ssub.s32 313, %s291
      %p293 = scmp.lt.s32.totalorder %s292, 128
      %s294 = scalar_select %p293, %s292, 128
      %s295 = smul.u32 128, %s294
      %p296 = scmp.lt.s32.totalorder %s19, 2
      %s297 = scalar_select %p296, %s19, 2
      %s298 = smul.addr %s297, 8
      %s299 = scalar_lea.vmem %s7, %s298
      %v301 = vld [vmem:[%s290] sm:$0xff]
      %v302 = vld [vmem:[%s290 + $0x8] sm:$0xff]
      %v303 = vld [vmem:[%s290 + $0x10] sm:$0xff]
      %v304 = vld [vmem:[%s290 + $0x18] sm:$0xff]
      %v305 = vld [vmem:[%s290 + $0x20] sm:$0xff]
      %v306 = vld [vmem:[%s290 + $0x28] sm:$0xff]
      %v307 = vld [vmem:[%s290 + $0x30] sm:$0xff]
      %v308 = vld [vmem:[%s290 + $0x38] sm:$0xff]
      %v309 = vld [vmem:[%s290 + $0x40] sm:$0xff]
      %v310 = vld [vmem:[%s290 + $0x48] sm:$0xff]
      %v311 = vld [vmem:[%s290 + $0x50] sm:$0xff]
      %v312 = vld [vmem:[%s290 + $0x58] sm:$0xff]
      %v313 = vld [vmem:[%s290 + $0x60] sm:$0xff]
      %v314 = vld [vmem:[%s290 + $0x68] sm:$0xff]
      %v315 = vld [vmem:[%s290 + $0x70] sm:$0xff]
      %v316 = vld [vmem:[%s290 + $0x78] sm:$0xff]
      %v317 = vld [vmem:[%s290 + $0x80] sm:$0xff]
      %v318 = vld [vmem:[%s290 + $0x88] sm:$0xff]
      %v319 = vld [vmem:[%s290 + $0x90] sm:$0xff]
      %v320 = vld [vmem:[%s290 + $0x98] sm:$0xff]
      %v321 = vld [vmem:[%s290 + $0xa0] sm:$0xff]
      %v322 = vld [vmem:[%s290 + $0xa8] sm:$0xff]
      %v323 = vld [vmem:[%s290 + $0xb0] sm:$0xff]
      %v324 = vld [vmem:[%s290 + $0xb8] sm:$0xff]
      %v325 = vld [vmem:[%s290 + $0xc0] sm:$0xff]
      %v326 = vld [vmem:[%s290 + $0xc8] sm:$0xff]
      %v327 = vld [vmem:[%s290 + $0xd0] sm:$0xff]
      %v328 = vld [vmem:[%s290 + $0xd8] sm:$0xff]
      %v329 = vld [vmem:[%s290 + $0xe0] sm:$0xff]
      %v330 = vld [vmem:[%s290 + $0xe8] sm:$0xff]
      %v331 = vld [vmem:[%s290 + $0xf0] sm:$0xff]
      %v332 = vld [vmem:[%s290 + $0xf8] sm:$0xff]
      %v333 = vld [vmem:[%s290 + $0x100] sm:$0xff]
      %v334 = vld [vmem:[%s290 + $0x108] sm:$0xff]
      %v335 = vld [vmem:[%s290 + $0x110] sm:$0xff]
      %v336 = vld [vmem:[%s290 + $0x118] sm:$0xff]
      %v337 = vld [vmem:[%s290 + $0x120] sm:$0xff]
      %v338 = vld [vmem:[%s290 + $0x128] sm:$0xff]
      %v339 = vld [vmem:[%s290 + $0x130] sm:$0xff]
      %v340 = vld [vmem:[%s290 + $0x138] sm:$0xff]
      %v341 = vld [vmem:[%s290 + $0x140] sm:$0xff]
      %v342 = vld [vmem:[%s290 + $0x148] sm:$0xff]
      %v343 = vld [vmem:[%s290 + $0x150] sm:$0xff]
      %v344 = vld [vmem:[%s290 + $0x158] sm:$0xff]
      %v345 = vld [vmem:[%s290 + $0x160] sm:$0xff]
      %v346 = vld [vmem:[%s290 + $0x168] sm:$0xff]
      %v347 = vld [vmem:[%s290 + $0x170] sm:$0xff]
      %v348 = vld [vmem:[%s290 + $0x178] sm:$0xff]
      %v349 = vld [vmem:[%s290 + $0x180] sm:$0xff]
      %v350 = vld [vmem:[%s290 + $0x188] sm:$0xff]
      %v351 = vld [vmem:[%s290 + $0x190] sm:$0xff]
      %v352 = vld [vmem:[%s290 + $0x198] sm:$0xff]
      %v353 = vld [vmem:[%s290 + $0x1a0] sm:$0xff]
      %v354 = vld [vmem:[%s290 + $0x1a8] sm:$0xff]
      %v355 = vld [vmem:[%s290 + $0x1b0] sm:$0xff]
      %v356 = vld [vmem:[%s290 + $0x1b8] sm:$0xff]
      %v357 = vld [vmem:[%s290 + $0x1c0] sm:$0xff]
      %v358 = vld [vmem:[%s290 + $0x1c8] sm:$0xff]
      %v359 = vld [vmem:[%s290 + $0x1d0] sm:$0xff]
      %v360 = vld [vmem:[%s290 + $0x1d8] sm:$0xff]
      %v361 = vld [vmem:[%s290 + $0x1e0] sm:$0xff]
      %v362 = vld [vmem:[%s290 + $0x1e8] sm:$0xff]
      %v363 = vld [vmem:[%s290 + $0x1f0] sm:$0xff]
      %v364 = vld [vmem:[%s290 + $0x1f8] sm:$0xff]
      %v365 = vld [vmem:[%s290 + $0x200] sm:$0xff]
      %v366 = vld [vmem:[%s290 + $0x208] sm:$0xff]
      %v367 = vld [vmem:[%s290 + $0x210] sm:$0xff]
      %v368 = vld [vmem:[%s290 + $0x218] sm:$0xff]
      %v369 = vld [vmem:[%s290 + $0x220] sm:$0xff]
      %v370 = vld [vmem:[%s290 + $0x228] sm:$0xff]
      %v371 = vld [vmem:[%s290 + $0x230] sm:$0xff]
      %v372 = vld [vmem:[%s290 + $0x238] sm:$0xff]
      %v373 = vld [vmem:[%s290 + $0x240] sm:$0xff]
      %v374 = vld [vmem:[%s290 + $0x248] sm:$0xff]
      %v375 = vld [vmem:[%s290 + $0x250] sm:$0xff]
      %v376 = vld [vmem:[%s290 + $0x258] sm:$0xff]
      %v377 = vld [vmem:[%s290 + $0x260] sm:$0xff]
      %v378 = vld [vmem:[%s290 + $0x268] sm:$0xff]
      %v379 = vld [vmem:[%s290 + $0x270] sm:$0xff]
      %v380 = vld [vmem:[%s290 + $0x278] sm:$0xff]
      %v381 = vld [vmem:[%s290 + $0x280] sm:$0xff]
      %v382 = vld [vmem:[%s290 + $0x288] sm:$0xff]
      %v383 = vld [vmem:[%s290 + $0x290] sm:$0xff]
      %v384 = vld [vmem:[%s290 + $0x298] sm:$0xff]
      %v385 = vld [vmem:[%s290 + $0x2a0] sm:$0xff]
      %v386 = vld [vmem:[%s290 + $0x2a8] sm:$0xff]
      %v387 = vld [vmem:[%s290 + $0x2b0] sm:$0xff]
      %v388 = vld [vmem:[%s290 + $0x2b8] sm:$0xff]
      %v389 = vld [vmem:[%s290 + $0x2c0] sm:$0xff]
      %v390 = vld [vmem:[%s290 + $0x2c8] sm:$0xff]
      %v391 = vld [vmem:[%s290 + $0x2d0] sm:$0xff]
      %v392 = vld [vmem:[%s290 + $0x2d8] sm:$0xff]
      %v393 = vld [vmem:[%s290 + $0x2e0] sm:$0xff]
      %v394 = vld [vmem:[%s290 + $0x2e8] sm:$0xff]
      %v395 = vld [vmem:[%s290 + $0x2f0] sm:$0xff]
      %v396 = vld [vmem:[%s290 + $0x2f8] sm:$0xff]
      %v397 = vld [vmem:[%s290 + $0x300] sm:$0xff]
      %v398 = vld [vmem:[%s290 + $0x308] sm:$0xff]
      %v399 = vld [vmem:[%s290 + $0x310] sm:$0xff]
      %v400 = vld [vmem:[%s290 + $0x318] sm:$0xff]
      %v401 = vld [vmem:[%s290 + $0x320] sm:$0xff]
      %v402 = vld [vmem:[%s290 + $0x328] sm:$0xff]
      %v403 = vld [vmem:[%s290 + $0x330] sm:$0xff]
      %v404 = vld [vmem:[%s290 + $0x338] sm:$0xff]
      %v405 = vld [vmem:[%s290 + $0x340] sm:$0xff]
      %v406 = vld [vmem:[%s290 + $0x348] sm:$0xff]
      %v407 = vld [vmem:[%s290 + $0x350] sm:$0xff]
      %v408 = vld [vmem:[%s290 + $0x358] sm:$0xff]
      %v409 = vld [vmem:[%s290 + $0x360] sm:$0xff]
      %v410 = vld [vmem:[%s290 + $0x368] sm:$0xff]
      %v411 = vld [vmem:[%s290 + $0x370] sm:$0xff]
      %v412 = vld [vmem:[%s290 + $0x378] sm:$0xff]
      %v413 = vld [vmem:[%s290 + $0x380] sm:$0xff]
      %v414 = vld [vmem:[%s290 + $0x388] sm:$0xff]
      %v415 = vld [vmem:[%s290 + $0x390] sm:$0xff]
      %v416 = vld [vmem:[%s290 + $0x398] sm:$0xff]
      %v417 = vld [vmem:[%s290 + $0x3a0] sm:$0xff]
      %v418 = vld [vmem:[%s290 + $0x3a8] sm:$0xff]
      %v419 = vld [vmem:[%s290 + $0x3b0] sm:$0xff]
      %v420 = vld [vmem:[%s290 + $0x3b8] sm:$0xff]
      %v421 = vld [vmem:[%s290 + $0x3c0] sm:$0xff]
      %v422 = vld [vmem:[%s290 + $0x3c8] sm:$0xff]
      %v423 = vld [vmem:[%s290 + $0x3d0] sm:$0xff]
      %v424 = vld [vmem:[%s290 + $0x3d8] sm:$0xff]
      %v425 = vld [vmem:[%s290 + $0x3e0] sm:$0xff]
      %v426 = vld [vmem:[%s290 + $0x3e8] sm:$0xff]
      %v427 = vld [vmem:[%s290 + $0x3f0] sm:$0xff]
      %v428 = vld [vmem:[%s290 + $0x3f8] sm:$0xff]
      %v429 = vld [vmem:[%s1] sm:$0xff]
      %v430 = vld [vmem:[%s1 + $0x8] sm:$0xff]
      %v431 = vld [vmem:[%s1 + $0x10] sm:$0xff]
      %v432 = vld [vmem:[%s1 + $0x18] sm:$0xff]
      %v433 = vld [vmem:[%s2] sm:$0x1]
      %v435 = vlaneseq
      %v436 = vshrl.u32 %v435, 7
      %v437 = vsub.s32 0, %v436
      %v438 = vrot.slane %v433, %v437
      %vm440 = vcmask 261120
      %v442 = vsel %vm440, %v301, 0
      %v445 = vsel %vm440, %v302, 0
      %v448 = vsel %vm440, %v303, 0
      %v451 = vsel %vm440, %v304, 0
      %v454 = vsel %vm440, %v305, 0
      %v457 = vsel %vm440, %v306, 0
      %v460 = vsel %vm440, %v307, 0
      %v463 = vsel %vm440, %v308, 0
      %v466 = vsel %vm440, %v309, 0
      %v469 = vsel %vm440, %v310, 0
      %v472 = vsel %vm440, %v311, 0
      %v475 = vsel %vm440, %v312, 0
      %v478 = vsel %vm440, %v313, 0
      %v481 = vsel %vm440, %v314, 0
      %v484 = vsel %vm440, %v315, 0
      %v487 = vsel %vm440, %v316, 0
      %v490 = vsel %vm440, %v317, 0
      %v493 = vsel %vm440, %v318, 0
      %v496 = vsel %vm440, %v319, 0
      %v499 = vsel %vm440, %v320, 0
      %v502 = vsel %vm440, %v321, 0
      %v505 = vsel %vm440, %v322, 0
      %v508 = vsel %vm440, %v323, 0
      %v511 = vsel %vm440, %v324, 0
      %v514 = vsel %vm440, %v325, 0
      %v517 = vsel %vm440, %v326, 0
      %v520 = vsel %vm440, %v327, 0
      %v523 = vsel %vm440, %v328, 0
      %v526 = vsel %vm440, %v329, 0
      %v529 = vsel %vm440, %v330, 0
      %v532 = vsel %vm440, %v331, 0
      %v535 = vsel %vm440, %v332, 0
      %v538 = vsel %vm440, %v333, 0
      %v541 = vsel %vm440, %v334, 0
      %v544 = vsel %vm440, %v335, 0
      %v547 = vsel %vm440, %v336, 0
      %v550 = vsel %vm440, %v337, 0
      %v553 = vsel %vm440, %v338, 0
      %v556 = vsel %vm440, %v339, 0
      %v559 = vsel %vm440, %v340, 0
      %v562 = vsel %vm440, %v341, 0
      %v565 = vsel %vm440, %v342, 0
      %v568 = vsel %vm440, %v343, 0
      %v571 = vsel %vm440, %v344, 0
      %v574 = vsel %vm440, %v345, 0
      %v577 = vsel %vm440, %v346, 0
      %v580 = vsel %vm440, %v347, 0
      %v583 = vsel %vm440, %v348, 0
      %v586 = vsel %vm440, %v349, 0
      %v589 = vsel %vm440, %v350, 0
      %v592 = vsel %vm440, %v351, 0
      %v595 = vsel %vm440, %v352, 0
      %v598 = vsel %vm440, %v353, 0
      %v601 = vsel %vm440, %v354, 0
      %v604 = vsel %vm440, %v355, 0
      %v607 = vsel %vm440, %v356, 0
      %v610 = vsel %vm440, %v357, 0
      %v613 = vsel %vm440, %v358, 0
      %v616 = vsel %vm440, %v359, 0
      %v619 = vsel %vm440, %v360, 0
      %v622 = vsel %vm440, %v361, 0
      %v625 = vsel %vm440, %v362, 0
      %v628 = vsel %vm440, %v363, 0
      %v631 = vsel %vm440, %v364, 0
      %v634 = vsel %vm440, %v365, 0
      %v637 = vsel %vm440, %v366, 0
      %v640 = vsel %vm440, %v367, 0
      %v643 = vsel %vm440, %v368, 0
      %v646 = vsel %vm440, %v369, 0
      %v649 = vsel %vm440, %v370, 0
      %v652 = vsel %vm440, %v371, 0
      %v655 = vsel %vm440, %v372, 0
      %v658 = vsel %vm440, %v373, 0
      %v661 = vsel %vm440, %v374, 0
      %v664 = vsel %vm440, %v375, 0
      %v667 = vsel %vm440, %v376, 0
      %v670 = vsel %vm440, %v377, 0
      %v673 = vsel %vm440, %v378, 0
      %v676 = vsel %vm440, %v379, 0
      %v679 = vsel %vm440, %v380, 0
      %v682 = vsel %vm440, %v381, 0
      %v685 = vsel %vm440, %v382, 0
      %v688 = vsel %vm440, %v383, 0
      %v691 = vsel %vm440, %v384, 0
      %v694 = vsel %vm440, %v385, 0
      %v697 = vsel %vm440, %v386, 0
      %v700 = vsel %vm440, %v387, 0
      %v703 = vsel %vm440, %v388, 0
      %v706 = vsel %vm440, %v389, 0
      %v709 = vsel %vm440, %v390, 0
      %v712 = vsel %vm440, %v391, 0
      %v715 = vsel %vm440, %v392, 0
      %v718 = vsel %vm440, %v393, 0
      %v721 = vsel %vm440, %v394, 0
      %v724 = vsel %vm440, %v395, 0
      %v727 = vsel %vm440, %v396, 0
      %v730 = vsel %vm440, %v397, 0
      %v733 = vsel %vm440, %v398, 0
      %v736 = vsel %vm440, %v399, 0
      %v739 = vsel %vm440, %v400, 0
      %v742 = vsel %vm440, %v401, 0
      %v745 = vsel %vm440, %v402, 0
      %v748 = vsel %vm440, %v403, 0
      %v751 = vsel %vm440, %v404, 0
      %v754 = vsel %vm440, %v405, 0
      %v757 = vsel %vm440, %v406, 0
      %v760 = vsel %vm440, %v407, 0
      %v763 = vsel %vm440, %v408, 0
      %v766 = vsel %vm440, %v409, 0
      %v769 = vsel %vm440, %v410, 0
      %v772 = vsel %vm440, %v411, 0
      %v775 = vsel %vm440, %v412, 0
      %v778 = vsel %vm440, %v413, 0
      %v781 = vsel %vm440, %v414, 0
      %v784 = vsel %vm440, %v415, 0
      %v787 = vsel %vm440, %v416, 0
      %v790 = vsel %vm440, %v417, 0
      %v793 = vsel %vm440, %v418, 0
      %v796 = vsel %vm440, %v419, 0
      %v799 = vsel %vm440, %v420, 0
      %v802 = vsel %vm440, %v421, 0
      %v805 = vsel %vm440, %v422, 0
      %v808 = vsel %vm440, %v423, 0
      %v811 = vsel %vm440, %v424, 0
      %v814 = vsel %vm440, %v425, 0
      %v817 = vsel %vm440, %v426, 0
      %v820 = vsel %vm440, %v427, 0
      %v823 = vsel %vm440, %v428, 0
      %825 = vmatprep.subr.mxu0 0.0
      %826 = vmatpush1.msra.mxu0 %v429
      %827 = vmatprep.subr.mxu0 0.0
      %828 = vmatpush1.msra.mxu0 %v430
      %829 = vmatprep.subr.mxu0 0.0
      %830 = vmatpush1.msra.mxu0 %v431
      %831 = vmatprep.subr.mxu0 0.0
      %832 = vmatpush1.msra.mxu0 %v432
      %833 = vmatprep.subr.mxu0 0.0
      %834 = vmatpush1.msra.mxu0 0.0
      %835 = vmatprep.subr.mxu0 0.0
      %836 = vmatpush1.msra.mxu0 0.0
      %837 = vmatprep.subr.mxu0 0.0
      %838 = vmatpush1.msra.mxu0 0.0
      %839 = vmatprep.subr.mxu0 0.0
      %840 = vmatpush1.msra.mxu0 0.0
      %841 = vmatprep.subr.mxu0 0.0
      %842 = vmatpush1.msra.mxu0 0.0
      %843 = vmatprep.subr.mxu0 0.0
      %844 = vmatpush1.msra.mxu0 0.0
      %845 = vmatprep.subr.mxu0 0.0
      %846 = vmatpush1.msra.mxu0 0.0
      %847 = vmatprep.subr.mxu0 0.0
      %848 = vmatpush1.msra.mxu0 0.0
      %849 = vmatprep.subr.mxu0 0.0
      %850 = vmatpush1.msra.mxu0 0.0
      %851 = vmatprep.subr.mxu0 0.0
      %852 = vmatpush1.msra.mxu0 0.0
      %853 = vmatprep.subr.mxu0 0.0
      %854 = vmatpush1.msra.mxu0 0.0
      %855 = vmatprep.subr.mxu0 0.0
      %856 = vmatpush1.msra.mxu0 0.0
      %857 = vmatprep.subr.mxu0 0.0
      %858 = vmatpush1.msra.mxu0 0.0
      %859 = vmatprep.subr.mxu0 0.0
      %860 = vmatpush1.msra.mxu0 0.0
      %861 = vmatprep.subr.mxu0 0.0
      %862 = vmatpush1.msra.mxu0 0.0
      %863 = vmatprep.subr.mxu0 0.0
      %864 = vmatpush1.msra.mxu0 0.0
      %865 = vmatprep.subr.mxu0 0.0
      %866 = vmatpush1.msra.mxu0 0.0
      %867 = vmatprep.subr.mxu0 0.0
      %868 = vmatpush1.msra.mxu0 0.0
      %869 = vmatprep.subr.mxu0 0.0
      %870 = vmatpush1.msra.mxu0 0.0
      %871 = vmatprep.subr.mxu0 0.0
      %872 = vmatpush1.msra.mxu0 0.0
      %873 = vmatprep.subr.mxu0 0.0
      %874 = vmatpush1.msra.mxu0 0.0
      %875 = vmatprep.subr.mxu0 0.0
      %876 = vmatpush1.msra.mxu0 0.0
      %877 = vmatprep.subr.mxu0 0.0
      %878 = vmatpush1.msra.mxu0 0.0
      %879 = vmatprep.subr.mxu0 0.0
      %880 = vmatpush1.msra.mxu0 0.0
      %881 = vmatprep.subr.mxu0 0.0
      %882 = vmatpush1.msra.mxu0 0.0
      %883 = vmatprep.subr.mxu0 0.0
      %884 = vmatpush1.msra.mxu0 0.0
      %885 = vmatprep.subr.mxu0 0.0
      %886 = vmatpush1.msra.mxu0 0.0
      %887 = vmatprep.subr.mxu0 0.0
      %888 = vmatpush1.msra.mxu0 0.0
      %889 = vmatprep.mubr.f32.mxu0 0.0
      %890 = vmatmul.mubr.f32.gmra.mrb[0].mxu0 %v442
      %v891 = vpop.f32.mrb[0].mxu0
      %v892 = vadd.f32 %v438, %v891
      %v893 = vpop.f32.mrb[0].mxu0
      %894 = vmatprep.mubr.f32.mxu0 0.0
      %895 = vmatmul.mubr.f32.gmra.mrb[0].mxu0 %v445
      %v896 = vpop.f32.mrb[0].mxu0
      %v897 = vadd.f32 %v438, %v896
      %v898 = vpop.f32.mrb[0].mxu0
      %899 = vmatprep.mubr.f32.mxu0 0.0
      %900 = vmatmul.mubr.f32.gmra.mrb[0].mxu0 %v448
      %v901 = vpop.f32.mrb[0].mxu0
      %v902 = vadd.f32 %v438, %v901
      %v903 = vpop.f32.mrb[0].mxu0
      %904 = vmatprep.mubr.f32.mxu0 0.0
      %905 = vmatmul.mubr.f32.gmra.mrb[0].mxu0 %v451
      %v906 = vpop.f32.mrb[0].mxu0
      %v907 = vadd.f32 %v438, %v906
      %v908 = vpop.f32.mrb[0].mxu0
      %909 = vmatprep.mubr.f32.mxu0 0.0
      %910 = vmatmul.mubr.f32.gmra.mrb[0].mxu0 %v454
      %v911 = vpop.f32.mrb[0].mxu0
      %v912 = vadd.f32 %v438, %v911
      %v913 = vpop.f32.mrb[0].mxu0
      %914 = vmatprep.mubr.f32.mxu0 0.0
      %915 = vmatmul.mubr.f32.gmra.mrb[0].mxu0 %v457
      %v916 = vpop.f32.mrb[0].mxu0
      %v917 = vadd.f32 %v438, %v916
      %v918 = vpop.f32.mrb[0].mxu0
      %919 = vmatprep.mubr.f32.mxu0 0.0
      %920 = vmatmul.mubr.f32.gmra.mrb[0].mxu0 %v460
      %v921 = vpop.f32.mrb[0].mxu0
      %v922 = vadd.f32 %v438, %v921
      %v923 = vpop.f32.mrb[0].mxu0
      %924 = vmatprep.mubr.f32.mxu0 0.0
      %925 = vmatmul.mubr.f32.gmra.mrb[0].mxu0 %v463
      %v926 = vpop.f32.mrb[0].mxu0
      %v927 = vadd.f32 %v438, %v926
      %v928 = vpop.f32.mrb[0].mxu0
      %929 = vmatprep.mubr.f32.mxu0 0.0
      %930 = vmatmul.mubr.f32.gmra.mrb[0].mxu0 %v466
      %v931 = vpop.f32.mrb[0].mxu0
      %v932 = vadd.f32 %v438, %v931
      %v933 = vpop.f32.mrb[0].mxu0
      %934 = vmatprep.mubr.f32.mxu0 0.0
      %935 = vmatmul.mubr.f32.gmra.mrb[0].mxu0 %v469
      %v936 = vpop.f32.mrb[0].mxu0
      %v937 = vadd.f32 %v438, %v936
      %v938 = vpop.f32.mrb[0].mxu0
      %939 = vmatprep.mubr.f32.mxu0 0.0
      %940 = vmatmul.mubr.f32.gmra.mrb[0].mxu0 %v472
      %v941 = vpop.f32.mrb[0].mxu0
      %v942 = vadd.f32 %v438, %v941
      %v943 = vpop.f32.mrb[0].mxu0
      %944 = vmatprep.mubr.f32.mxu0 0.0
      %945 = vmatmul.mubr.f32.gmra.mrb[0].mxu0 %v475
      %v946 = vpop.f32.mrb[0].mxu0
      %v947 = vadd.f32 %v438, %v946
      %v948 = vpop.f32.mrb[0].mxu0
      %949 = vmatprep.mubr.f32.mxu0 0.0
      %950 = vmatmul.mubr.f32.gmra.mrb[0].mxu0 %v478
      %v951 = vpop.f32.mrb[0].mxu0
      %v952 = vadd.f32 %v438, %v951
      %v953 = vpop.f32.mrb[0].mxu0
      %954 = vmatprep.mubr.f32.mxu0 0.0
      %955 = vmatmul.mubr.f32.gmra.mrb[0].mxu0 %v481
      %v956 = vpop.f32.mrb[0].mxu0
      %v957 = vadd.f32 %v438, %v956
      %v958 = vpop.f32.mrb[0].mxu0
      %959 = vmatprep.mubr.f32.mxu0 0.0
      %960 = vmatmul.mubr.f32.gmra.mrb[0].mxu0 %v484
      %v961 = vpop.f32.mrb[0].mxu0
      %v962 = vadd.f32 %v438, %v961
      %v963 = vpop.f32.mrb[0].mxu0
      %964 = vmatprep.mubr.f32.mxu0 0.0
      %965 = vmatmul.mubr.f32.gmra.mrb[0].mxu0 %v487
      %v966 = vpop.f32.mrb[0].mxu0
      %v967 = vadd.f32 %v438, %v966
      %v968 = vpop.f32.mrb[0].mxu0
      %969 = vmatprep.mubr.f32.mxu0 0.0
      %970 = vmatmul.mubr.f32.gmra.mrb[0].mxu0 %v490
      %v971 = vpop.f32.mrb[0].mxu0
      %v972 = vadd.f32 %v438, %v971
      %v973 = vpop.f32.mrb[0].mxu0
      %974 = vmatprep.mubr.f32.mxu0 0.0
      %975 = vmatmul.mubr.f32.gmra.mrb[0].mxu0 %v493
      %v976 = vpop.f32.mrb[0].mxu0
      %v977 = vadd.f32 %v438, %v976
      %v978 = vpop.f32.mrb[0].mxu0
      %979 = vmatprep.mubr.f32.mxu0 0.0
      %980 = vmatmul.mubr.f32.gmra.mrb[0].mxu0 %v496
      %v981 = vpop.f32.mrb[0].mxu0
      %v982 = vadd.f32 %v438, %v981
      %v983 = vpop.f32.mrb[0].mxu0
      %984 = vmatprep.mubr.f32.mxu0 0.0
      %985 = vmatmul.mubr.f32.gmra.mrb[0].mxu0 %v499
      %v986 = vpop.f32.mrb[0].mxu0
      %v987 = vadd.f32 %v438, %v986
      %v988 = vpop.f32.mrb[0].mxu0
      %989 = vmatprep.mubr.f32.mxu0 0.0
      %990 = vmatmul.mubr.f32.gmra.mrb[0].mxu0 %v502
      %v991 = vpop.f32.mrb[0].mxu0
      %v992 = vadd.f32 %v438, %v991
      %v993 = vpop.f32.mrb[0].mxu0
      %994 = vmatprep.mubr.f32.mxu0 0.0
      %995 = vmatmul.mubr.f32.gmra.mrb[0].mxu0 %v505
      %v996 = vpop.f32.mrb[0].mxu0
      %v997 = vadd.f32 %v438, %v996
      %v998 = vpop.f32.mrb[0].mxu0
      %999 = vmatprep.mubr.f32.mxu0 0.0
      %1000 = vmatmul.mubr.f32.gmra.mrb[0].mxu0 %v508
      %v1001 = vpop.f32.mrb[0].mxu0
      %v1002 = vadd.f32 %v438, %v1001
      %v1003 = vpop.f32.mrb[0].mxu0
      %1004 = vmatprep.mubr.f32.mxu0 0.0
      %1005 = vmatmul.mubr.f32.gmra.mrb[0].mxu0 %v511
      %v1006 = vpop.f32.mrb[0].mxu0
      %v1007 = vadd.f32 %v438, %v1006
      %v1008 = vpop.f32.mrb[0].mxu0
      %1009 = vmatprep.mubr.f32.mxu0 0.0
      %1010 = vmatmul.mubr.f32.gmra.mrb[0].mxu0 %v514
      %v1011 = vpop.f32.mrb[0].mxu0
      %v1012 = vadd.f32 %v438, %v1011
      %v1013 = vpop.f32.mrb[0].mxu0
      %1014 = vmatprep.mubr.f32.mxu0 0.0
      %1015 = vmatmul.mubr.f32.gmra.mrb[0].mxu0 %v517
      %v1016 = vpop.f32.mrb[0].mxu0
      %v1017 = vadd.f32 %v438, %v1016
      %v1018 = vpop.f32.mrb[0].mxu0
      %1019 = vmatprep.mubr.f32.mxu0 0.0
      %1020 = vmatmul.mubr.f32.gmra.mrb[0].mxu0 %v520
      %v1021 = vpop.f32.mrb[0].mxu0
      %v1022 = vadd.f32 %v438, %v1021
      %v1023 = vpop.f32.mrb[0].mxu0
      %1024 = vmatprep.mubr.f32.mxu0 0.0
      %1025 = vmatmul.mubr.f32.gmra.mrb[0].mxu0 %v523
      %v1026 = vpop.f32.mrb[0].mxu0
      %v1027 = vadd.f32 %v438, %v1026
      %v1028 = vpop.f32.mrb[0].mxu0
      %1029 = vmatprep.mubr.f32.mxu0 0.0
      %1030 = vmatmul.mubr.f32.gmra.mrb[0].mxu0 %v526
      %v1031 = vpop.f32.mrb[0].mxu0
      %v1032 = vadd.f32 %v438, %v1031
      %v1033 = vpop.f32.mrb[0].mxu0
      %1034 = vmatprep.mubr.f32.mxu0 0.0
      %1035 = vmatmul.mubr.f32.gmra.mrb[0].mxu0 %v529
      %v1036 = vpop.f32.mrb[0].mxu0
      %v1037 = vadd.f32 %v438, %v1036
      %v1038 = vpop.f32.mrb[0].mxu0
      %1039 = vmatprep.mubr.f32.mxu0 0.0
      %1040 = vmatmul.mubr.f32.gmra.mrb[0].mxu0 %v532
      %v1041 = vpop.f32.mrb[0].mxu0
      %v1042 = vadd.f32 %v438, %v1041
      %v1043 = vpop.f32.mrb[0].mxu0
      %1044 = vmatprep.mubr.f32.mxu0 0.0
      %1045 = vmatmul.mubr.f32.gmra.mrb[0].mxu0 %v535
      %v1046 = vpop.f32.mrb[0].mxu0
      %v1047 = vadd.f32 %v438, %v1046
      %v1048 = vpop.f32.mrb[0].mxu0
      %1049 = vmatprep.mubr.f32.mxu0 0.0
      %1050 = vmatmul.mubr.f32.gmra.mrb[0].mxu0 %v538
      %v1051 = vpop.f32.mrb[0].mxu0
      %v1052 = vadd.f32 %v438, %v1051
      %v1053 = vpop.f32.mrb[0].mxu0
      %1054 = vmatprep.mubr.f32.mxu0 0.0
      %1055 = vmatmul.mubr.f32.gmra.mrb[0].mxu0 %v541
      %v1056 = vpop.f32.mrb[0].mxu0
      %v1057 = vadd.f32 %v438, %v1056
      %v1058 = vpop.f32.mrb[0].mxu0
      %1059 = vmatprep.mubr.f32.mxu0 0.0
      %1060 = vmatmul.mubr.f32.gmra.mrb[0].mxu0 %v544
      %v1061 = vpop.f32.mrb[0].mxu0
      %v1062 = vadd.f32 %v438, %v1061
      %v1063 = vpop.f32.mrb[0].mxu0
      %1064 = vmatprep.mubr.f32.mxu0 0.0
      %1065 = vmatmul.mubr.f32.gmra.mrb[0].mxu0 %v547
      %v1066 = vpop.f32.mrb[0].mxu0
      %v1067 = vadd.f32 %v438, %v1066
      %v1068 = vpop.f32.mrb[0].mxu0
      %1069 = vmatprep.mubr.f32.mxu0 0.0
      %1070 = vmatmul.mubr.f32.gmra.mrb[0].mxu0 %v550
      %v1071 = vpop.f32.mrb[0].mxu0
      %v1072 = vadd.f32 %v438, %v1071
      %v1073 = vpop.f32.mrb[0].mxu0
      %1074 = vmatprep.mubr.f32.mxu0 0.0
      %1075 = vmatmul.mubr.f32.gmra.mrb[0].mxu0 %v553
      %v1076 = vpop.f32.mrb[0].mxu0
      %v1077 = vadd.f32 %v438, %v1076
      %v1078 = vpop.f32.mrb[0].mxu0
      %1079 = vmatprep.mubr.f32.mxu0 0.0
      %1080 = vmatmul.mubr.f32.gmra.mrb[0].mxu0 %v556
      %v1081 = vpop.f32.mrb[0].mxu0
      %v1082 = vadd.f32 %v438, %v1081
      %v1083 = vpop.f32.mrb[0].mxu0
      %1084 = vmatprep.mubr.f32.mxu0 0.0
      %1085 = vmatmul.mubr.f32.gmra.mrb[0].mxu0 %v559
      %v1086 = vpop.f32.mrb[0].mxu0
      %v1087 = vadd.f32 %v438, %v1086
      %v1088 = vpop.f32.mrb[0].mxu0
      %1089 = vmatprep.mubr.f32.mxu0 0.0
      %1090 = vmatmul.mubr.f32.gmra.mrb[0].mxu0 %v562
      %v1091 = vpop.f32.mrb[0].mxu0
      %v1092 = vadd.f32 %v438, %v1091
      %v1093 = vpop.f32.mrb[0].mxu0
      %1094 = vmatprep.mubr.f32.mxu0 0.0
      %1095 = vmatmul.mubr.f32.gmra.mrb[0].mxu0 %v565
      %v1096 = vpop.f32.mrb[0].mxu0
      %v1097 = vadd.f32 %v438, %v1096
      %v1098 = vpop.f32.mrb[0].mxu0
      %1099 = vmatprep.mubr.f32.mxu0 0.0
      %1100 = vmatmul.mubr.f32.gmra.mrb[0].mxu0 %v568
      %v1101 = vpop.f32.mrb[0].mxu0
      %v1102 = vadd.f32 %v438, %v1101
      %v1103 = vpop.f32.mrb[0].mxu0
      %1104 = vmatprep.mubr.f32.mxu0 0.0
      %1105 = vmatmul.mubr.f32.gmra.mrb[0].mxu0 %v571
      %v1106 = vpop.f32.mrb[0].mxu0
      %v1107 = vadd.f32 %v438, %v1106
      %v1108 = vpop.f32.mrb[0].mxu0
      %1109 = vmatprep.mubr.f32.mxu0 0.0
      %1110 = vmatmul.mubr.f32.gmra.mrb[0].mxu0 %v574
      %v1111 = vpop.f32.mrb[0].mxu0
      %v1112 = vadd.f32 %v438, %v1111
      %v1113 = vpop.f32.mrb[0].mxu0
      %1114 = vmatprep.mubr.f32.mxu0 0.0
      %1115 = vmatmul.mubr.f32.gmra.mrb[0].mxu0 %v577
      %v1116 = vpop.f32.mrb[0].mxu0
      %v1117 = vadd.f32 %v438, %v1116
      %v1118 = vpop.f32.mrb[0].mxu0
      %1119 = vmatprep.mubr.f32.mxu0 0.0
      %1120 = vmatmul.mubr.f32.gmra.mrb[0].mxu0 %v580
      %v1121 = vpop.f32.mrb[0].mxu0
      %v1122 = vadd.f32 %v438, %v1121
      %v1123 = vpop.f32.mrb[0].mxu0
      %1124 = vmatprep.mubr.f32.mxu0 0.0
      %1125 = vmatmul.mubr.f32.gmra.mrb[0].mxu0 %v583
      %v1126 = vpop.f32.mrb[0].mxu0
      %v1127 = vadd.f32 %v438, %v1126
      %v1128 = vpop.f32.mrb[0].mxu0
      %1129 = vmatprep.mubr.f32.mxu0 0.0
      %1130 = vmatmul.mubr.f32.gmra.mrb[0].mxu0 %v586
      %v1131 = vpop.f32.mrb[0].mxu0
      %v1132 = vadd.f32 %v438, %v1131
      %v1133 = vpop.f32.mrb[0].mxu0
      %1134 = vmatprep.mubr.f32.mxu0 0.0
      %1135 = vmatmul.mubr.f32.gmra.mrb[0].mxu0 %v589
      %v1136 = vpop.f32.mrb[0].mxu0
      %v1137 = vadd.f32 %v438, %v1136
      %v1138 = vpop.f32.mrb[0].mxu0
      %1139 = vmatprep.mubr.f32.mxu0 0.0
      %1140 = vmatmul.mubr.f32.gmra.mrb[0].mxu0 %v592
      %v1141 = vpop.f32.mrb[0].mxu0
      %v1142 = vadd.f32 %v438, %v1141
      %v1143 = vpop.f32.mrb[0].mxu0
      %1144 = vmatprep.mubr.f32.mxu0 0.0
      %1145 = vmatmul.mubr.f32.gmra.mrb[0].mxu0 %v595
      %v1146 = vpop.f32.mrb[0].mxu0
      %v1147 = vadd.f32 %v438, %v1146
      %v1148 = vpop.f32.mrb[0].mxu0
      %1149 = vmatprep.mubr.f32.mxu0 0.0
      %1150 = vmatmul.mubr.f32.gmra.mrb[0].mxu0 %v598
      %v1151 = vpop.f32.mrb[0].mxu0
      %v1152 = vadd.f32 %v438, %v1151
      %v1153 = vpop.f32.mrb[0].mxu0
      %1154 = vmatprep.mubr.f32.mxu0 0.0
      %1155 = vmatmul.mubr.f32.gmra.mrb[0].mxu0 %v601
      %v1156 = vpop.f32.mrb[0].mxu0
      %v1157 = vadd.f32 %v438, %v1156
      %v1158 = vpop.f32.mrb[0].mxu0
      %1159 = vmatprep.mubr.f32.mxu0 0.0
      %1160 = vmatmul.mubr.f32.gmra.mrb[0].mxu0 %v604
      %v1161 = vpop.f32.mrb[0].mxu0
      %v1162 = vadd.f32 %v438, %v1161
      %v1163 = vpop.f32.mrb[0].mxu0
      %1164 = vmatprep.mubr.f32.mxu0 0.0
      %1165 = vmatmul.mubr.f32.gmra.mrb[0].mxu0 %v607
      %v1166 = vpop.f32.mrb[0].mxu0
      %v1167 = vadd.f32 %v438, %v1166
      %v1168 = vpop.f32.mrb[0].mxu0
      %1169 = vmatprep.mubr.f32.mxu0 0.0
      %1170 = vmatmul.mubr.f32.gmra.mrb[0].mxu0 %v610
      %v1171 = vpop.f32.mrb[0].mxu0
      %v1172 = vadd.f32 %v438, %v1171
      %v1173 = vpop.f32.mrb[0].mxu0
      %1174 = vmatprep.mubr.f32.mxu0 0.0
      %1175 = vmatmul.mubr.f32.gmra.mrb[0].mxu0 %v613
      %v1176 = vpop.f32.mrb[0].mxu0
      %v1177 = vadd.f32 %v438, %v1176
      %v1178 = vpop.f32.mrb[0].mxu0
      %1179 = vmatprep.mubr.f32.mxu0 0.0
      %1180 = vmatmul.mubr.f32.gmra.mrb[0].mxu0 %v616
      %v1181 = vpop.f32.mrb[0].mxu0
      %v1182 = vadd.f32 %v438, %v1181
      %v1183 = vpop.f32.mrb[0].mxu0
      %1184 = vmatprep.mubr.f32.mxu0 0.0
      %1185 = vmatmul.mubr.f32.gmra.mrb[0].mxu0 %v619
      %v1186 = vpop.f32.mrb[0].mxu0
      %v1187 = vadd.f32 %v438, %v1186
      %v1188 = vpop.f32.mrb[0].mxu0
      %1189 = vmatprep.mubr.f32.mxu0 0.0
      %1190 = vmatmul.mubr.f32.gmra.mrb[0].mxu0 %v622
      %v1191 = vpop.f32.mrb[0].mxu0
      %v1192 = vadd.f32 %v438, %v1191
      %v1193 = vpop.f32.mrb[0].mxu0
      %1194 = vmatprep.mubr.f32.mxu0 0.0
      %1195 = vmatmul.mubr.f32.gmra.mrb[0].mxu0 %v625
      %v1196 = vpop.f32.mrb[0].mxu0
      %v1197 = vadd.f32 %v438, %v1196
      %v1198 = vpop.f32.mrb[0].mxu0
      %1199 = vmatprep.mubr.f32.mxu0 0.0
      %1200 = vmatmul.mubr.f32.gmra.mrb[0].mxu0 %v628
      %v1201 = vpop.f32.mrb[0].mxu0
      %v1202 = vadd.f32 %v438, %v1201
      %v1203 = vpop.f32.mrb[0].mxu0
      %1204 = vmatprep.mubr.f32.mxu0 0.0
      %1205 = vmatmul.mubr.f32.gmra.mrb[0].mxu0 %v631
      %v1206 = vpop.f32.mrb[0].mxu0
      %v1207 = vadd.f32 %v438, %v1206
      %v1208 = vpop.f32.mrb[0].mxu0
      %1209 = vmatprep.mubr.f32.mxu0 0.0
      %1210 = vmatmul.mubr.f32.gmra.mrb[0].mxu0 %v634
      %v1211 = vpop.f32.mrb[0].mxu0
      %v1212 = vadd.f32 %v438, %v1211
      %v1213 = vpop.f32.mrb[0].mxu0
      %1214 = vmatprep.mubr.f32.mxu0 0.0
      %1215 = vmatmul.mubr.f32.gmra.mrb[0].mxu0 %v637
      %v1216 = vpop.f32.mrb[0].mxu0
      %v1217 = vadd.f32 %v438, %v1216
      %v1218 = vpop.f32.mrb[0].mxu0
      %1219 = vmatprep.mubr.f32.mxu0 0.0
      %1220 = vmatmul.mubr.f32.gmra.mrb[0].mxu0 %v640
      %v1221 = vpop.f32.mrb[0].mxu0
      %v1222 = vadd.f32 %v438, %v1221
      %v1223 = vpop.f32.mrb[0].mxu0
      %1224 = vmatprep.mubr.f32.mxu0 0.0
      %1225 = vmatmul.mubr.f32.gmra.mrb[0].mxu0 %v643
      %v1226 = vpop.f32.mrb[0].mxu0
      %v1227 = vadd.f32 %v438, %v1226
      %v1228 = vpop.f32.mrb[0].mxu0
      %1229 = vmatprep.mubr.f32.mxu0 0.0
      %1230 = vmatmul.mubr.f32.gmra.mrb[0].mxu0 %v646
      %v1231 = vpop.f32.mrb[0].mxu0
      %v1232 = vadd.f32 %v438, %v1231
      %v1233 = vpop.f32.mrb[0].mxu0
      %1234 = vmatprep.mubr.f32.mxu0 0.0
      %1235 = vmatmul.mubr.f32.gmra.mrb[0].mxu0 %v649
      %v1236 = vpop.f32.mrb[0].mxu0
      %v1237 = vadd.f32 %v438, %v1236
      %v1238 = vpop.f32.mrb[0].mxu0
      %1239 = vmatprep.mubr.f32.mxu0 0.0
      %1240 = vmatmul.mubr.f32.gmra.mrb[0].mxu0 %v652
      %v1241 = vpop.f32.mrb[0].mxu0
      %v1242 = vadd.f32 %v438, %v1241
      %v1243 = vpop.f32.mrb[0].mxu0
      %1244 = vmatprep.mubr.f32.mxu0 0.0
      %1245 = vmatmul.mubr.f32.gmra.mrb[0].mxu0 %v655
      %v1246 = vpop.f32.mrb[0].mxu0
      %v1247 = vadd.f32 %v438, %v1246
      %v1248 = vpop.f32.mrb[0].mxu0
      %1249 = vmatprep.mubr.f32.mxu0 0.0
      %1250 = vmatmul.mubr.f32.gmra.mrb[0].mxu0 %v658
      %v1251 = vpop.f32.mrb[0].mxu0
      %v1252 = vadd.f32 %v438, %v1251
      %v1253 = vpop.f32.mrb[0].mxu0
      %1254 = vmatprep.mubr.f32.mxu0 0.0
      %1255 = vmatmul.mubr.f32.gmra.mrb[0].mxu0 %v661
      %v1256 = vpop.f32.mrb[0].mxu0
      %v1257 = vadd.f32 %v438, %v1256
      %v1258 = vpop.f32.mrb[0].mxu0
      %1259 = vmatprep.mubr.f32.mxu0 0.0
      %1260 = vmatmul.mubr.f32.gmra.mrb[0].mxu0 %v664
      %v1261 = vpop.f32.mrb[0].mxu0
      %v1262 = vadd.f32 %v438, %v1261
      %v1263 = vpop.f32.mrb[0].mxu0
      %1264 = vmatprep.mubr.f32.mxu0 0.0
      %1265 = vmatmul.mubr.f32.gmra.mrb[0].mxu0 %v667
      %v1266 = vpop.f32.mrb[0].mxu0
      %v1267 = vadd.f32 %v438, %v1266
      %v1268 = vpop.f32.mrb[0].mxu0
      %1269 = vmatprep.mubr.f32.mxu0 0.0
      %1270 = vmatmul.mubr.f32.gmra.mrb[0].mxu0 %v670
      %v1271 = vpop.f32.mrb[0].mxu0
      %v1272 = vadd.f32 %v438, %v1271
      %v1273 = vpop.f32.mrb[0].mxu0
      %1274 = vmatprep.mubr.f32.mxu0 0.0
      %1275 = vmatmul.mubr.f32.gmra.mrb[0].mxu0 %v673
      %v1276 = vpop.f32.mrb[0].mxu0
      %v1277 = vadd.f32 %v438, %v1276
      %v1278 = vpop.f32.mrb[0].mxu0
      %1279 = vmatprep.mubr.f32.mxu0 0.0
      %1280 = vmatmul.mubr.f32.gmra.mrb[0].mxu0 %v676
      %v1281 = vpop.f32.mrb[0].mxu0
      %v1282 = vadd.f32 %v438, %v1281
      %v1283 = vpop.f32.mrb[0].mxu0
      %1284 = vmatprep.mubr.f32.mxu0 0.0
      %1285 = vmatmul.mubr.f32.gmra.mrb[0].mxu0 %v679
      %v1286 = vpop.f32.mrb[0].mxu0
      %v1287 = vadd.f32 %v438, %v1286
      %v1288 = vpop.f32.mrb[0].mxu0
      %1289 = vmatprep.mubr.f32.mxu0 0.0
      %1290 = vmatmul.mubr.f32.gmra.mrb[0].mxu0 %v682
      %v1291 = vpop.f32.mrb[0].mxu0
      %v1292 = vadd.f32 %v438, %v1291
      %v1293 = vpop.f32.mrb[0].mxu0
      %1294 = vmatprep.mubr.f32.mxu0 0.0
      %1295 = vmatmul.mubr.f32.gmra.mrb[0].mxu0 %v685
      %v1296 = vpop.f32.mrb[0].mxu0
      %v1297 = vadd.f32 %v438, %v1296
      %v1298 = vpop.f32.mrb[0].mxu0
      %1299 = vmatprep.mubr.f32.mxu0 0.0
      %1300 = vmatmul.mubr.f32.gmra.mrb[0].mxu0 %v688
      %v1301 = vpop.f32.mrb[0].mxu0
      %v1302 = vadd.f32 %v438, %v1301
      %v1303 = vpop.f32.mrb[0].mxu0
      %1304 = vmatprep.mubr.f32.mxu0 0.0
      %1305 = vmatmul.mubr.f32.gmra.mrb[0].mxu0 %v691
      %v1306 = vpop.f32.mrb[0].mxu0
      %v1307 = vadd.f32 %v438, %v1306
      %v1308 = vpop.f32.mrb[0].mxu0
      %1309 = vmatprep.mubr.f32.mxu0 0.0
      %1310 = vmatmul.mubr.f32.gmra.mrb[0].mxu0 %v694
      %v1311 = vpop.f32.mrb[0].mxu0
      %v1312 = vadd.f32 %v438, %v1311
      %v1313 = vpop.f32.mrb[0].mxu0
      %1314 = vmatprep.mubr.f32.mxu0 0.0
      %1315 = vmatmul.mubr.f32.gmra.mrb[0].mxu0 %v697
      %v1316 = vpop.f32.mrb[0].mxu0
      %v1317 = vadd.f32 %v438, %v1316
      %v1318 = vpop.f32.mrb[0].mxu0
      %1319 = vmatprep.mubr.f32.mxu0 0.0
      %1320 = vmatmul.mubr.f32.gmra.mrb[0].mxu0 %v700
      %v1321 = vpop.f32.mrb[0].mxu0
      %v1322 = vadd.f32 %v438, %v1321
      %v1323 = vpop.f32.mrb[0].mxu0
      %1324 = vmatprep.mubr.f32.mxu0 0.0
      %1325 = vmatmul.mubr.f32.gmra.mrb[0].mxu0 %v703
      %v1326 = vpop.f32.mrb[0].mxu0
      %v1327 = vadd.f32 %v438, %v1326
      %v1328 = vpop.f32.mrb[0].mxu0
      %1329 = vmatprep.mubr.f32.mxu0 0.0
      %1330 = vmatmul.mubr.f32.gmra.mrb[0].mxu0 %v706
      %v1331 = vpop.f32.mrb[0].mxu0
      %v1332 = vadd.f32 %v438, %v1331
      %v1333 = vpop.f32.mrb[0].mxu0
      %1334 = vmatprep.mubr.f32.mxu0 0.0
      %1335 = vmatmul.mubr.f32.gmra.mrb[0].mxu0 %v709
      %v1336 = vpop.f32.mrb[0].mxu0
      %v1337 = vadd.f32 %v438, %v1336
      %v1338 = vpop.f32.mrb[0].mxu0
      %1339 = vmatprep.mubr.f32.mxu0 0.0
      %1340 = vmatmul.mubr.f32.gmra.mrb[0].mxu0 %v712
      %v1341 = vpop.f32.mrb[0].mxu0
      %v1342 = vadd.f32 %v438, %v1341
      %v1343 = vpop.f32.mrb[0].mxu0
      %1344 = vmatprep.mubr.f32.mxu0 0.0
      %1345 = vmatmul.mubr.f32.gmra.mrb[0].mxu0 %v715
      %v1346 = vpop.f32.mrb[0].mxu0
      %v1347 = vadd.f32 %v438, %v1346
      %v1348 = vpop.f32.mrb[0].mxu0
      %1349 = vmatprep.mubr.f32.mxu0 0.0
      %1350 = vmatmul.mubr.f32.gmra.mrb[0].mxu0 %v718
      %v1351 = vpop.f32.mrb[0].mxu0
      %v1352 = vadd.f32 %v438, %v1351
      %v1353 = vpop.f32.mrb[0].mxu0
      %1354 = vmatprep.mubr.f32.mxu0 0.0
      %1355 = vmatmul.mubr.f32.gmra.mrb[0].mxu0 %v721
      %v1356 = vpop.f32.mrb[0].mxu0
      %v1357 = vadd.f32 %v438, %v1356
      %v1358 = vpop.f32.mrb[0].mxu0
      %1359 = vmatprep.mubr.f32.mxu0 0.0
      %1360 = vmatmul.mubr.f32.gmra.mrb[0].mxu0 %v724
      %v1361 = vpop.f32.mrb[0].mxu0
      %v1362 = vadd.f32 %v438, %v1361
      %v1363 = vpop.f32.mrb[0].mxu0
      %1364 = vmatprep.mubr.f32.mxu0 0.0
      %1365 = vmatmul.mubr.f32.gmra.mrb[0].mxu0 %v727
      %v1366 = vpop.f32.mrb[0].mxu0
      %v1367 = vadd.f32 %v438, %v1366
      %v1368 = vpop.f32.mrb[0].mxu0
      %1369 = vmatprep.mubr.f32.mxu0 0.0
      %1370 = vmatmul.mubr.f32.gmra.mrb[0].mxu0 %v730
      %v1371 = vpop.f32.mrb[0].mxu0
      %v1372 = vadd.f32 %v438, %v1371
      %v1373 = vpop.f32.mrb[0].mxu0
      %1374 = vmatprep.mubr.f32.mxu0 0.0
      %1375 = vmatmul.mubr.f32.gmra.mrb[0].mxu0 %v733
      %v1376 = vpop.f32.mrb[0].mxu0
      %v1377 = vadd.f32 %v438, %v1376
      %v1378 = vpop.f32.mrb[0].mxu0
      %1379 = vmatprep.mubr.f32.mxu0 0.0
      %1380 = vmatmul.mubr.f32.gmra.mrb[0].mxu0 %v736
      %v1381 = vpop.f32.mrb[0].mxu0
      %v1382 = vadd.f32 %v438, %v1381
      %v1383 = vpop.f32.mrb[0].mxu0
      %1384 = vmatprep.mubr.f32.mxu0 0.0
      %1385 = vmatmul.mubr.f32.gmra.mrb[0].mxu0 %v739
      %v1386 = vpop.f32.mrb[0].mxu0
      %v1387 = vadd.f32 %v438, %v1386
      %v1388 = vpop.f32.mrb[0].mxu0
      %1389 = vmatprep.mubr.f32.mxu0 0.0
      %1390 = vmatmul.mubr.f32.gmra.mrb[0].mxu0 %v742
      %v1391 = vpop.f32.mrb[0].mxu0
      %v1392 = vadd.f32 %v438, %v1391
      %v1393 = vpop.f32.mrb[0].mxu0
      %1394 = vmatprep.mubr.f32.mxu0 0.0
      %1395 = vmatmul.mubr.f32.gmra.mrb[0].mxu0 %v745
      %v1396 = vpop.f32.mrb[0].mxu0
      %v1397 = vadd.f32 %v438, %v1396
      %v1398 = vpop.f32.mrb[0].mxu0
      %1399 = vmatprep.mubr.f32.mxu0 0.0
      %1400 = vmatmul.mubr.f32.gmra.mrb[0].mxu0 %v748
      %v1401 = vpop.f32.mrb[0].mxu0
      %v1402 = vadd.f32 %v438, %v1401
      %v1403 = vpop.f32.mrb[0].mxu0
      %1404 = vmatprep.mubr.f32.mxu0 0.0
      %1405 = vmatmul.mubr.f32.gmra.mrb[0].mxu0 %v751
      %v1406 = vpop.f32.mrb[0].mxu0
      %v1407 = vadd.f32 %v438, %v1406
      %v1408 = vpop.f32.mrb[0].mxu0
      %1409 = vmatprep.mubr.f32.mxu0 0.0
      %1410 = vmatmul.mubr.f32.gmra.mrb[0].mxu0 %v754
      %v1411 = vpop.f32.mrb[0].mxu0
      %v1412 = vadd.f32 %v438, %v1411
      %v1413 = vpop.f32.mrb[0].mxu0
      %1414 = vmatprep.mubr.f32.mxu0 0.0
      %1415 = vmatmul.mubr.f32.gmra.mrb[0].mxu0 %v757
      %v1416 = vpop.f32.mrb[0].mxu0
      %v1417 = vadd.f32 %v438, %v1416
      %v1418 = vpop.f32.mrb[0].mxu0
      %1419 = vmatprep.mubr.f32.mxu0 0.0
      %1420 = vmatmul.mubr.f32.gmra.mrb[0].mxu0 %v760
      %v1421 = vpop.f32.mrb[0].mxu0
      %v1422 = vadd.f32 %v438, %v1421
      %v1423 = vpop.f32.mrb[0].mxu0
      %1424 = vmatprep.mubr.f32.mxu0 0.0
      %1425 = vmatmul.mubr.f32.gmra.mrb[0].mxu0 %v763
      %v1426 = vpop.f32.mrb[0].mxu0
      %v1427 = vadd.f32 %v438, %v1426
      %v1428 = vpop.f32.mrb[0].mxu0
      %1429 = vmatprep.mubr.f32.mxu0 0.0
      %1430 = vmatmul.mubr.f32.gmra.mrb[0].mxu0 %v766
      %v1431 = vpop.f32.mrb[0].mxu0
      %v1432 = vadd.f32 %v438, %v1431
      %v1433 = vpop.f32.mrb[0].mxu0
      %1434 = vmatprep.mubr.f32.mxu0 0.0
      %1435 = vmatmul.mubr.f32.gmra.mrb[0].mxu0 %v769
      %v1436 = vpop.f32.mrb[0].mxu0
      %v1437 = vadd.f32 %v438, %v1436
      %v1438 = vpop.f32.mrb[0].mxu0
      %1439 = vmatprep.mubr.f32.mxu0 0.0
      %1440 = vmatmul.mubr.f32.gmra.mrb[0].mxu0 %v772
      %v1441 = vpop.f32.mrb[0].mxu0
      %v1442 = vadd.f32 %v438, %v1441
      %v1443 = vpop.f32.mrb[0].mxu0
      %1444 = vmatprep.mubr.f32.mxu0 0.0
      %1445 = vmatmul.mubr.f32.gmra.mrb[0].mxu0 %v775
      %v1446 = vpop.f32.mrb[0].mxu0
      %v1447 = vadd.f32 %v438, %v1446
      %v1448 = vpop.f32.mrb[0].mxu0
      %1449 = vmatprep.mubr.f32.mxu0 0.0
      %1450 = vmatmul.mubr.f32.gmra.mrb[0].mxu0 %v778
      %v1451 = vpop.f32.mrb[0].mxu0
      %v1452 = vadd.f32 %v438, %v1451
      %v1453 = vpop.f32.mrb[0].mxu0
      %1454 = vmatprep.mubr.f32.mxu0 0.0
      %1455 = vmatmul.mubr.f32.gmra.mrb[0].mxu0 %v781
      %v1456 = vpop.f32.mrb[0].mxu0
      %v1457 = vadd.f32 %v438, %v1456
      %v1458 = vpop.f32.mrb[0].mxu0
      %1459 = vmatprep.mubr.f32.mxu0 0.0
      %1460 = vmatmul.mubr.f32.gmra.mrb[0].mxu0 %v784
      %v1461 = vpop.f32.mrb[0].mxu0
      %v1462 = vadd.f32 %v438, %v1461
      %v1463 = vpop.f32.mrb[0].mxu0
      %1464 = vmatprep.mubr.f32.mxu0 0.0
      %1465 = vmatmul.mubr.f32.gmra.mrb[0].mxu0 %v787
      %v1466 = vpop.f32.mrb[0].mxu0
      %v1467 = vadd.f32 %v438, %v1466
      %v1468 = vpop.f32.mrb[0].mxu0
      %1469 = vmatprep.mubr.f32.mxu0 0.0
      %1470 = vmatmul.mubr.f32.gmra.mrb[0].mxu0 %v790
      %v1471 = vpop.f32.mrb[0].mxu0
      %v1472 = vadd.f32 %v438, %v1471
      %v1473 = vpop.f32.mrb[0].mxu0
      %1474 = vmatprep.mubr.f32.mxu0 0.0
      %1475 = vmatmul.mubr.f32.gmra.mrb[0].mxu0 %v793
      %v1476 = vpop.f32.mrb[0].mxu0
      %v1477 = vadd.f32 %v438, %v1476
      %v1478 = vpop.f32.mrb[0].mxu0
      %1479 = vmatprep.mubr.f32.mxu0 0.0
      %1480 = vmatmul.mubr.f32.gmra.mrb[0].mxu0 %v796
      %v1481 = vpop.f32.mrb[0].mxu0
      %v1482 = vadd.f32 %v438, %v1481
      %v1483 = vpop.f32.mrb[0].mxu0
      %1484 = vmatprep.mubr.f32.mxu0 0.0
      %1485 = vmatmul.mubr.f32.gmra.mrb[0].mxu0 %v799
      %v1486 = vpop.f32.mrb[0].mxu0
      %v1487 = vadd.f32 %v438, %v1486
      %v1488 = vpop.f32.mrb[0].mxu0
      %1489 = vmatprep.mubr.f32.mxu0 0.0
      %1490 = vmatmul.mubr.f32.gmra.mrb[0].mxu0 %v802
      %v1491 = vpop.f32.mrb[0].mxu0
      %v1492 = vadd.f32 %v438, %v1491
      %v1493 = vpop.f32.mrb[0].mxu0
      %1494 = vmatprep.mubr.f32.mxu0 0.0
      %1495 = vmatmul.mubr.f32.gmra.mrb[0].mxu0 %v805
      %v1496 = vpop.f32.mrb[0].mxu0
      %v1497 = vadd.f32 %v438, %v1496
      %v1498 = vpop.f32.mrb[0].mxu0
      %1499 = vmatprep.mubr.f32.mxu0 0.0
      %1500 = vmatmul.mubr.f32.gmra.mrb[0].mxu0 %v808
      %v1501 = vpop.f32.mrb[0].mxu0
      %v1502 = vadd.f32 %v438, %v1501
      %v1503 = vpop.f32.mrb[0].mxu0
      %1504 = vmatprep.mubr.f32.mxu0 0.0
      %1505 = vmatmul.mubr.f32.gmra.mrb[0].mxu0 %v811
      %v1506 = vpop.f32.mrb[0].mxu0
      %v1507 = vadd.f32 %v438, %v1506
      %v1508 = vpop.f32.mrb[0].mxu0
      %1509 = vmatprep.mubr.f32.mxu0 0.0
      %1510 = vmatmul.mubr.f32.gmra.mrb[0].mxu0 %v814
      %v1511 = vpop.f32.mrb[0].mxu0
      %v1512 = vadd.f32 %v438, %v1511
      %v1513 = vpop.f32.mrb[0].mxu0
      %1514 = vmatprep.mubr.f32.mxu0 0.0
      %1515 = vmatmul.mubr.f32.gmra.mrb[0].mxu0 %v817
      %v1516 = vpop.f32.mrb[0].mxu0
      %v1517 = vadd.f32 %v438, %v1516
      %v1518 = vpop.f32.mrb[0].mxu0
      %1519 = vmatprep.mubr.f32.mxu0 0.0
      %1520 = vmatmul.mubr.f32.gmra.mrb[0].mxu0 %v820
      %v1521 = vpop.f32.mrb[0].mxu0
      %v1522 = vadd.f32 %v438, %v1521
      %v1523 = vpop.f32.mrb[0].mxu0
      %1524 = vmatprep.mubr.f32.mxu0 0.0
      %1525 = vmatmul.mubr.f32.gmra.mrb[0].mxu0 %v823
      %v1526 = vpop.f32.mrb[0].mxu0
      %v1527 = vadd.f32 %v438, %v1526
      %v1528 = vpop.f32.mrb[0].mxu0
      %1529 = vdwg.mxu0
      %v1530 = vmax.f32 %v892, 0.0
      %v1531 = vmax.f32 %v897, 0.0
      %v1532 = vmax.f32 %v902, 0.0
      %v1533 = vmax.f32 %v907, 0.0
      %v1534 = vmax.f32 %v912, 0.0
      %v1535 = vmax.f32 %v917, 0.0
      %v1536 = vmax.f32 %v922, 0.0
      %v1537 = vmax.f32 %v927, 0.0
      %v1538 = vmax.f32 %v932, 0.0
      %v1539 = vmax.f32 %v937, 0.0
      %v1540 = vmax.f32 %v942, 0.0
      %v1541 = vmax.f32 %v947, 0.0
      %v1542 = vmax.f32 %v952, 0.0
      %v1543 = vmax.f32 %v957, 0.0
      %v1544 = vmax.f32 %v962, 0.0
      %v1545 = vmax.f32 %v967, 0.0
      %v1546 = vmax.f32 %v972, 0.0
      %v1547 = vmax.f32 %v977, 0.0
      %v1548 = vmax.f32 %v982, 0.0
      %v1549 = vmax.f32 %v987, 0.0
      %v1550 = vmax.f32 %v992, 0.0
      %v1551 = vmax.f32 %v997, 0.0
      %v1552 = vmax.f32 %v1002, 0.0
      %v1553 = vmax.f32 %v1007, 0.0
      %v1554 = vmax.f32 %v1012, 0.0
      %v1555 = vmax.f32 %v1017, 0.0
      %v1556 = vmax.f32 %v1022, 0.0
      %v1557 = vmax.f32 %v1027, 0.0
      %v1558 = vmax.f32 %v1032, 0.0
      %v1559 = vmax.f32 %v1037, 0.0
      %v1560 = vmax.f32 %v1042, 0.0
      %v1561 = vmax.f32 %v1047, 0.0
      %v1562 = vmax.f32 %v1052, 0.0
      %v1563 = vmax.f32 %v1057, 0.0
      %v1564 = vmax.f32 %v1062, 0.0
      %v1565 = vmax.f32 %v1067, 0.0
      %v1566 = vmax.f32 %v1072, 0.0
      %v1567 = vmax.f32 %v1077, 0.0
      %v1568 = vmax.f32 %v1082, 0.0
      %v1569 = vmax.f32 %v1087, 0.0
      %v1570 = vmax.f32 %v1092, 0.0
      %v1571 = vmax.f32 %v1097, 0.0
      %v1572 = vmax.f32 %v1102, 0.0
      %v1573 = vmax.f32 %v1107, 0.0
      %v1574 = vmax.f32 %v1112, 0.0
      %v1575 = vmax.f32 %v1117, 0.0
      %v1576 = vmax.f32 %v1122, 0.0
      %v1577 = vmax.f32 %v1127, 0.0
      %v1578 = vmax.f32 %v1132, 0.0
      %v1579 = vmax.f32 %v1137, 0.0
      %v1580 = vmax.f32 %v1142, 0.0
      %v1581 = vmax.f32 %v1147, 0.0
      %v1582 = vmax.f32 %v1152, 0.0
      %v1583 = vmax.f32 %v1157, 0.0
      %v1584 = vmax.f32 %v1162, 0.0
      %v1585 = vmax.f32 %v1167, 0.0
      %v1586 = vmax.f32 %v1172, 0.0
      %v1587 = vmax.f32 %v1177, 0.0
      %v1588 = vmax.f32 %v1182, 0.0
      %v1589 = vmax.f32 %v1187, 0.0
      %v1590 = vmax.f32 %v1192, 0.0
      %v1591 = vmax.f32 %v1197, 0.0
      %v1592 = vmax.f32 %v1202, 0.0
      %v1593 = vmax.f32 %v1207, 0.0
      %v1594 = vmax.f32 %v1212, 0.0
      %v1595 = vmax.f32 %v1217, 0.0
      %v1596 = vmax.f32 %v1222, 0.0
      %v1597 = vmax.f32 %v1227, 0.0
      %v1598 = vmax.f32 %v1232, 0.0
      %v1599 = vmax.f32 %v1237, 0.0
      %v1600 = vmax.f32 %v1242, 0.0
      %v1601 = vmax.f32 %v1247, 0.0
      %v1602 = vmax.f32 %v1252, 0.0
      %v1603 = vmax.f32 %v1257, 0.0
      %v1604 = vmax.f32 %v1262, 0.0
      %v1605 = vmax.f32 %v1267, 0.0
      %v1606 = vmax.f32 %v1272, 0.0
      %v1607 = vmax.f32 %v1277, 0.0
      %v1608 = vmax.f32 %v1282, 0.0
      %v1609 = vmax.f32 %v1287, 0.0
      %v1610 = vmax.f32 %v1292, 0.0
      %v1611 = vmax.f32 %v1297, 0.0
      %v1612 = vmax.f32 %v1302, 0.0
      %v1613 = vmax.f32 %v1307, 0.0
      %v1614 = vmax.f32 %v1312, 0.0
      %v1615 = vmax.f32 %v1317, 0.0
      %v1616 = vmax.f32 %v1322, 0.0
      %v1617 = vmax.f32 %v1327, 0.0
      %v1618 = vmax.f32 %v1332, 0.0
      %v1619 = vmax.f32 %v1337, 0.0
      %v1620 = vmax.f32 %v1342, 0.0
      %v1621 = vmax.f32 %v1347, 0.0
      %v1622 = vmax.f32 %v1352, 0.0
      %v1623 = vmax.f32 %v1357, 0.0
      %v1624 = vmax.f32 %v1362, 0.0
      %v1625 = vmax.f32 %v1367, 0.0
      %v1626 = vmax.f32 %v1372, 0.0
      %v1627 = vmax.f32 %v1377, 0.0
      %v1628 = vmax.f32 %v1382, 0.0
      %v1629 = vmax.f32 %v1387, 0.0
      %v1630 = vmax.f32 %v1392, 0.0
      %v1631 = vmax.f32 %v1397, 0.0
      %v1632 = vmax.f32 %v1402, 0.0
      %v1633 = vmax.f32 %v1407, 0.0
      %v1634 = vmax.f32 %v1412, 0.0
      %v1635 = vmax.f32 %v1417, 0.0
      %v1636 = vmax.f32 %v1422, 0.0
      %v1637 = vmax.f32 %v1427, 0.0
      %v1638 = vmax.f32 %v1432, 0.0
      %v1639 = vmax.f32 %v1437, 0.0
      %v1640 = vmax.f32 %v1442, 0.0
      %v1641 = vmax.f32 %v1447, 0.0
      %v1642 = vmax.f32 %v1452, 0.0
      %v1643 = vmax.f32 %v1457, 0.0
      %v1644 = vmax.f32 %v1462, 0.0
      %v1645 = vmax.f32 %v1467, 0.0
      %v1646 = vmax.f32 %v1472, 0.0
      %v1647 = vmax.f32 %v1477, 0.0
      %v1648 = vmax.f32 %v1482, 0.0
      %v1649 = vmax.f32 %v1487, 0.0
      %v1650 = vmax.f32 %v1492, 0.0
      %v1651 = vmax.f32 %v1497, 0.0
      %v1652 = vmax.f32 %v1502, 0.0
      %v1653 = vmax.f32 %v1507, 0.0
      %v1654 = vmax.f32 %v1512, 0.0
      %v1655 = vmax.f32 %v1517, 0.0
      %v1656 = vmax.f32 %v1522, 0.0
      %v1657 = vmax.f32 %v1527, 0.0
      %v1658 = vpack.c.bf16 %v1531, %v1530
      %v1659 = vpack.c.bf16 %v1533, %v1532
      %v1660 = vpack.c.bf16 %v1535, %v1534
      %v1661 = vpack.c.bf16 %v1537, %v1536
      %v1662 = vpack.c.bf16 %v1539, %v1538
      %v1663 = vpack.c.bf16 %v1541, %v1540
      %v1664 = vpack.c.bf16 %v1543, %v1542
      %v1665 = vpack.c.bf16 %v1545, %v1544
      %v1666 = vpack.c.bf16 %v1547, %v1546
      %v1667 = vpack.c.bf16 %v1549, %v1548
      %v1668 = vpack.c.bf16 %v1551, %v1550
      %v1669 = vpack.c.bf16 %v1553, %v1552
      %v1670 = vpack.c.bf16 %v1555, %v1554
      %v1671 = vpack.c.bf16 %v1557, %v1556
      %v1672 = vpack.c.bf16 %v1559, %v1558
      %v1673 = vpack.c.bf16 %v1561, %v1560
      %v1674 = vpack.c.bf16 %v1563, %v1562
      %v1675 = vpack.c.bf16 %v1565, %v1564
      %v1676 = vpack.c.bf16 %v1567, %v1566
      %v1677 = vpack.c.bf16 %v1569, %v1568
      %v1678 = vpack.c.bf16 %v1571, %v1570
      %v1679 = vpack.c.bf16 %v1573, %v1572
      %v1680 = vpack.c.bf16 %v1575, %v1574
      %v1681 = vpack.c.bf16 %v1577, %v1576
      %v1682 = vpack.c.bf16 %v1579, %v1578
      %v1683 = vpack.c.bf16 %v1581, %v1580
      %v1684 = vpack.c.bf16 %v1583, %v1582
      %v1685 = vpack.c.bf16 %v1585, %v1584
      %v1686 = vpack.c.bf16 %v1587, %v1586
      %v1687 = vpack.c.bf16 %v1589, %v1588
      %v1688 = vpack.c.bf16 %v1591, %v1590
      %v1689 = vpack.c.bf16 %v1593, %v1592
      %v1690 = vpack.c.bf16 %v1595, %v1594
      %v1691 = vpack.c.bf16 %v1597, %v1596
      %v1692 = vpack.c.bf16 %v1599, %v1598
      %v1693 = vpack.c.bf16 %v1601, %v1600
      %v1694 = vpack.c.bf16 %v1603, %v1602
      %v1695 = vpack.c.bf16 %v1605, %v1604
      %v1696 = vpack.c.bf16 %v1607, %v1606
      %v1697 = vpack.c.bf16 %v1609, %v1608
      %v1698 = vpack.c.bf16 %v1611, %v1610
      %v1699 = vpack.c.bf16 %v1613, %v1612
      %v1700 = vpack.c.bf16 %v1615, %v1614
      %v1701 = vpack.c.bf16 %v1617, %v1616
      %v1702 = vpack.c.bf16 %v1619, %v1618
      %v1703 = vpack.c.bf16 %v1621, %v1620
      %v1704 = vpack.c.bf16 %v1623, %v1622
      %v1705 = vpack.c.bf16 %v1625, %v1624
      %v1706 = vpack.c.bf16 %v1627, %v1626
      %v1707 = vpack.c.bf16 %v1629, %v1628
      %v1708 = vpack.c.bf16 %v1631, %v1630
      %v1709 = vpack.c.bf16 %v1633, %v1632
      %v1710 = vpack.c.bf16 %v1635, %v1634
      %v1711 = vpack.c.bf16 %v1637, %v1636
      %v1712 = vpack.c.bf16 %v1639, %v1638
      %v1713 = vpack.c.bf16 %v1641, %v1640
      %v1714 = vpack.c.bf16 %v1643, %v1642
      %v1715 = vpack.c.bf16 %v1645, %v1644
      %v1716 = vpack.c.bf16 %v1647, %v1646
      %v1717 = vpack.c.bf16 %v1649, %v1648
      %v1718 = vpack.c.bf16 %v1651, %v1650
      %v1719 = vpack.c.bf16 %v1653, %v1652
      %v1720 = vpack.c.bf16 %v1655, %v1654
      %v1721 = vpack.c.bf16 %v1657, %v1656
      %v1722 = vld [vmem:[%s3] sm:$0xf]
      %v1723 = vld [vmem:[%s3 + $0x4] sm:$0xf]
      %v1724 = vld [vmem:[%s3 + $0x8] sm:$0xf]
      %v1725 = vld [vmem:[%s3 + $0xc] sm:$0xf]
      %v1726 = vld [vmem:[%s3 + $0x10] sm:$0xf]
      %v1727 = vld [vmem:[%s3 + $0x14] sm:$0xf]
      %v1728 = vld [vmem:[%s3 + $0x18] sm:$0xf]
      %v1729 = vld [vmem:[%s3 + $0x1c] sm:$0xf]
      %v1730 = vld [vmem:[%s3 + $0x20] sm:$0xf]
      %v1731 = vld [vmem:[%s3 + $0x24] sm:$0xf]
      %v1732 = vld [vmem:[%s3 + $0x28] sm:$0xf]
      %v1733 = vld [vmem:[%s3 + $0x2c] sm:$0xf]
      %v1734 = vld [vmem:[%s3 + $0x30] sm:$0xf]
      %v1735 = vld [vmem:[%s3 + $0x34] sm:$0xf]
      %v1736 = vld [vmem:[%s3 + $0x38] sm:$0xf]
      %v1737 = vld [vmem:[%s3 + $0x3c] sm:$0xf]
      %v1738 = vld [vmem:[%s4] sm:$0x1]
      %v1740 = vlaneseq
      %v1741 = vshrl.u32 %v1740, 7
      %v1742 = vsub.s32 0, %v1741
      %v1743 = vrot.slane %v1738, %v1742
      %v1761 = vunpack.c.l.b16 %v1722
      %v1762 = vunpack.c.l.b16 %v1723
      %v1763 = vunpack.c.l.b16 %v1724
      %v1764 = vunpack.c.l.b16 %v1725
      %v1765 = vunpack.c.l.b16 %v1726
      %v1766 = vunpack.c.l.b16 %v1727
      %v1767 = vunpack.c.l.b16 %v1728
      %v1768 = vunpack.c.l.b16 %v1729
      %v1769 = vunpack.c.l.b16 %v1730
      %v1770 = vunpack.c.l.b16 %v1731
      %v1771 = vunpack.c.l.b16 %v1732
      %v1772 = vunpack.c.l.b16 %v1733
      %v1773 = vunpack.c.l.b16 %v1734
      %v1774 = vunpack.c.l.b16 %v1735
      %v1775 = vunpack.c.l.b16 %v1736
      %v1776 = vunpack.c.l.b16 %v1737
      %v1777 = vpack.c.b16 %v1762, %v1761
      %v1778 = vpack.c.b16 %v1764, %v1763
      %v1779 = vpack.c.b16 %v1766, %v1765
      %v1780 = vpack.c.b16 %v1768, %v1767
      %v1781 = vpack.c.b16 %v1770, %v1769
      %v1782 = vpack.c.b16 %v1772, %v1771
      %v1783 = vpack.c.b16 %v1774, %v1773
      %v1784 = vpack.c.b16 %v1776, %v1775
      %1793 = vmatprep.subr.bf16.mxu0 0
      %1794 = vmatpush1.bf16.msra.mxu0 %v1777
      %1795 = vmatprep.subr.bf16.mxu0 0
      %1796 = vmatpush1.bf16.msra.mxu0 %v1778
      %1797 = vmatprep.subr.bf16.mxu0 0
      %1798 = vmatpush1.bf16.msra.mxu0 %v1779
      %1799 = vmatprep.subr.bf16.mxu0 0
      %1800 = vmatpush1.bf16.msra.mxu0 %v1780
      %1801 = vmatprep.subr.bf16.mxu0 0
      %1802 = vmatpush1.bf16.msra.mxu0 %v1781
      %1803 = vmatprep.subr.bf16.mxu0 0
      %1804 = vmatpush1.bf16.msra.mxu0 %v1782
      %1805 = vmatprep.subr.bf16.mxu0 0
      %1806 = vmatpush1.bf16.msra.mxu0 %v1783
      %1807 = vmatprep.subr.bf16.mxu0 0
      %1808 = vmatpush1.bf16.msra.mxu0 %v1784
      %1809 = vmatprep.subr.bf16.mxu0 0
      %1810 = vmatpush1.bf16.msra.mxu0 0
      %1811 = vmatprep.subr.bf16.mxu0 0
      %1812 = vmatpush1.bf16.msra.mxu0 0
      %1813 = vmatprep.subr.bf16.mxu0 0
      %1814 = vmatpush1.bf16.msra.mxu0 0
      %1815 = vmatprep.subr.bf16.mxu0 0
      %1816 = vmatpush1.bf16.msra.mxu0 0
      %1817 = vmatprep.subr.bf16.mxu0 0
      %1818 = vmatpush1.bf16.msra.mxu0 0
      %1819 = vmatprep.subr.bf16.mxu0 0
      %1820 = vmatpush1.bf16.msra.mxu0 0
      %1821 = vmatprep.subr.bf16.mxu0 0
      %1822 = vmatpush1.bf16.msra.mxu0 0
      %1823 = vmatprep.subr.bf16.mxu0 0
      %1824 = vmatpush1.bf16.msra.mxu0 0
      %1825 = vmatprep.mubr.bf16.mxu0 0
      %1826 = vmatmul.mubr.bf16.gmra.mrb[0].mxu0 %v1658
      %v1827 = vpop.f32.mrb[0].mxu0
      %v1828 = vadd.f32 %v1743, %v1827
      %v1829 = vpop.f32.mrb[0].mxu0
      %v1830 = vpop.f32.mrb[0].mxu0
      %v1831 = vadd.f32 %v1743, %v1830
      %v1832 = vpop.f32.mrb[0].mxu0
      %1833 = vmatprep.mubr.bf16.mxu0 0
      %1834 = vmatmul.mubr.bf16.gmra.mrb[0].mxu0 %v1659
      %v1835 = vpop.f32.mrb[0].mxu0
      %v1836 = vadd.f32 %v1743, %v1835
      %v1837 = vpop.f32.mrb[0].mxu0
      %v1838 = vpop.f32.mrb[0].mxu0
      %v1839 = vadd.f32 %v1743, %v1838
      %v1840 = vpop.f32.mrb[0].mxu0
      %1841 = vmatprep.mubr.bf16.mxu0 0
      %1842 = vmatmul.mubr.bf16.gmra.mrb[0].mxu0 %v1660
      %v1843 = vpop.f32.mrb[0].mxu0
      %v1844 = vadd.f32 %v1743, %v1843
      %v1845 = vpop.f32.mrb[0].mxu0
      %v1846 = vpop.f32.mrb[0].mxu0
      %v1847 = vadd.f32 %v1743, %v1846
      %v1848 = vpop.f32.mrb[0].mxu0
      %1849 = vmatprep.mubr.bf16.mxu0 0
      %1850 = vmatmul.mubr.bf16.gmra.mrb[0].mxu0 %v1661
      %v1851 = vpop.f32.mrb[0].mxu0
      %v1852 = vadd.f32 %v1743, %v1851
      %v1853 = vpop.f32.mrb[0].mxu0
      %v1854 = vpop.f32.mrb[0].mxu0
      %v1855 = vadd.f32 %v1743, %v1854
      %v1856 = vpop.f32.mrb[0].mxu0
      %1857 = vmatprep.mubr.bf16.mxu0 0
      %1858 = vmatmul.mubr.bf16.gmra.mrb[0].mxu0 %v1662
      %v1859 = vpop.f32.mrb[0].mxu0
      %v1860 = vadd.f32 %v1743, %v1859
      %v1861 = vpop.f32.mrb[0].mxu0
      %v1862 = vpop.f32.mrb[0].mxu0
      %v1863 = vadd.f32 %v1743, %v1862
      %v1864 = vpop.f32.mrb[0].mxu0
      %1865 = vmatprep.mubr.bf16.mxu0 0
      %1866 = vmatmul.mubr.bf16.gmra.mrb[0].mxu0 %v1663
      %v1867 = vpop.f32.mrb[0].mxu0
      %v1868 = vadd.f32 %v1743, %v1867
      %v1869 = vpop.f32.mrb[0].mxu0
      %v1870 = vpop.f32.mrb[0].mxu0
      %v1871 = vadd.f32 %v1743, %v1870
      %v1872 = vpop.f32.mrb[0].mxu0
      %1873 = vmatprep.mubr.bf16.mxu0 0
      %1874 = vmatmul.mubr.bf16.gmra.mrb[0].mxu0 %v1664
      %v1875 = vpop.f32.mrb[0].mxu0
      %v1876 = vadd.f32 %v1743, %v1875
      %v1877 = vpop.f32.mrb[0].mxu0
      %v1878 = vpop.f32.mrb[0].mxu0
      %v1879 = vadd.f32 %v1743, %v1878
      %v1880 = vpop.f32.mrb[0].mxu0
      %1881 = vmatprep.mubr.bf16.mxu0 0
      %1882 = vmatmul.mubr.bf16.gmra.mrb[0].mxu0 %v1665
      %v1883 = vpop.f32.mrb[0].mxu0
      %v1884 = vadd.f32 %v1743, %v1883
      %v1885 = vpop.f32.mrb[0].mxu0
      %v1886 = vpop.f32.mrb[0].mxu0
      %v1887 = vadd.f32 %v1743, %v1886
      %v1888 = vpop.f32.mrb[0].mxu0
      %1889 = vmatprep.mubr.bf16.mxu0 0
      %1890 = vmatmul.mubr.bf16.gmra.mrb[0].mxu0 %v1666
      %v1891 = vpop.f32.mrb[0].mxu0
      %v1892 = vadd.f32 %v1743, %v1891
      %v1893 = vpop.f32.mrb[0].mxu0
      %v1894 = vpop.f32.mrb[0].mxu0
      %v1895 = vadd.f32 %v1743, %v1894
      %v1896 = vpop.f32.mrb[0].mxu0
      %1897 = vmatprep.mubr.bf16.mxu0 0
      %1898 = vmatmul.mubr.bf16.gmra.mrb[0].mxu0 %v1667
      %v1899 = vpop.f32.mrb[0].mxu0
      %v1900 = vadd.f32 %v1743, %v1899
      %v1901 = vpop.f32.mrb[0].mxu0
      %v1902 = vpop.f32.mrb[0].mxu0
      %v1903 = vadd.f32 %v1743, %v1902
      %v1904 = vpop.f32.mrb[0].mxu0
      %1905 = vmatprep.mubr.bf16.mxu0 0
      %1906 = vmatmul.mubr.bf16.gmra.mrb[0].mxu0 %v1668
      %v1907 = vpop.f32.mrb[0].mxu0
      %v1908 = vadd.f32 %v1743, %v1907
      %v1909 = vpop.f32.mrb[0].mxu0
      %v1910 = vpop.f32.mrb[0].mxu0
      %v1911 = vadd.f32 %v1743, %v1910
      %v1912 = vpop.f32.mrb[0].mxu0
      %1913 = vmatprep.mubr.bf16.mxu0 0
      %1914 = vmatmul.mubr.bf16.gmra.mrb[0].mxu0 %v1669
      %v1915 = vpop.f32.mrb[0].mxu0
      %v1916 = vadd.f32 %v1743, %v1915
      %v1917 = vpop.f32.mrb[0].mxu0
      %v1918 = vpop.f32.mrb[0].mxu0
      %v1919 = vadd.f32 %v1743, %v1918
      %v1920 = vpop.f32.mrb[0].mxu0
      %1921 = vmatprep.mubr.bf16.mxu0 0
      %1922 = vmatmul.mubr.bf16.gmra.mrb[0].mxu0 %v1670
      %v1923 = vpop.f32.mrb[0].mxu0
      %v1924 = vadd.f32 %v1743, %v1923
      %v1925 = vpop.f32.mrb[0].mxu0
      %v1926 = vpop.f32.mrb[0].mxu0
      %v1927 = vadd.f32 %v1743, %v1926
      %v1928 = vpop.f32.mrb[0].mxu0
      %1929 = vmatprep.mubr.bf16.mxu0 0
      %1930 = vmatmul.mubr.bf16.gmra.mrb[0].mxu0 %v1671
      %v1931 = vpop.f32.mrb[0].mxu0
      %v1932 = vadd.f32 %v1743, %v1931
      %v1933 = vpop.f32.mrb[0].mxu0
      %v1934 = vpop.f32.mrb[0].mxu0
      %v1935 = vadd.f32 %v1743, %v1934
      %v1936 = vpop.f32.mrb[0].mxu0
      %1937 = vmatprep.mubr.bf16.mxu0 0
      %1938 = vmatmul.mubr.bf16.gmra.mrb[0].mxu0 %v1672
      %v1939 = vpop.f32.mrb[0].mxu0
      %v1940 = vadd.f32 %v1743, %v1939
      %v1941 = vpop.f32.mrb[0].mxu0
      %v1942 = vpop.f32.mrb[0].mxu0
      %v1943 = vadd.f32 %v1743, %v1942
      %v1944 = vpop.f32.mrb[0].mxu0
      %1945 = vmatprep.mubr.bf16.mxu0 0
      %1946 = vmatmul.mubr.bf16.gmra.mrb[0].mxu0 %v1673
      %v1947 = vpop.f32.mrb[0].mxu0
      %v1948 = vadd.f32 %v1743, %v1947
      %v1949 = vpop.f32.mrb[0].mxu0
      %v1950 = vpop.f32.mrb[0].mxu0
      %v1951 = vadd.f32 %v1743, %v1950
      %v1952 = vpop.f32.mrb[0].mxu0
      %1953 = vmatprep.mubr.bf16.mxu0 0
      %1954 = vmatmul.mubr.bf16.gmra.mrb[0].mxu0 %v1674
      %v1955 = vpop.f32.mrb[0].mxu0
      %v1956 = vadd.f32 %v1743, %v1955
      %v1957 = vpop.f32.mrb[0].mxu0
      %v1958 = vpop.f32.mrb[0].mxu0
      %v1959 = vadd.f32 %v1743, %v1958
      %v1960 = vpop.f32.mrb[0].mxu0
      %1961 = vmatprep.mubr.bf16.mxu0 0
      %1962 = vmatmul.mubr.bf16.gmra.mrb[0].mxu0 %v1675
      %v1963 = vpop.f32.mrb[0].mxu0
      %v1964 = vadd.f32 %v1743, %v1963
      %v1965 = vpop.f32.mrb[0].mxu0
      %v1966 = vpop.f32.mrb[0].mxu0
      %v1967 = vadd.f32 %v1743, %v1966
      %v1968 = vpop.f32.mrb[0].mxu0
      %1969 = vmatprep.mubr.bf16.mxu0 0
      %1970 = vmatmul.mubr.bf16.gmra.mrb[0].mxu0 %v1676
      %v1971 = vpop.f32.mrb[0].mxu0
      %v1972 = vadd.f32 %v1743, %v1971
      %v1973 = vpop.f32.mrb[0].mxu0
      %v1974 = vpop.f32.mrb[0].mxu0
      %v1975 = vadd.f32 %v1743, %v1974
      %v1976 = vpop.f32.mrb[0].mxu0
      %1977 = vmatprep.mubr.bf16.mxu0 0
      %1978 = vmatmul.mubr.bf16.gmra.mrb[0].mxu0 %v1677
      %v1979 = vpop.f32.mrb[0].mxu0
      %v1980 = vadd.f32 %v1743, %v1979
      %v1981 = vpop.f32.mrb[0].mxu0
      %v1982 = vpop.f32.mrb[0].mxu0
      %v1983 = vadd.f32 %v1743, %v1982
      %v1984 = vpop.f32.mrb[0].mxu0
      %1985 = vmatprep.mubr.bf16.mxu0 0
      %1986 = vmatmul.mubr.bf16.gmra.mrb[0].mxu0 %v1678
      %v1987 = vpop.f32.mrb[0].mxu0
      %v1988 = vadd.f32 %v1743, %v1987
      %v1989 = vpop.f32.mrb[0].mxu0
      %v1990 = vpop.f32.mrb[0].mxu0
      %v1991 = vadd.f32 %v1743, %v1990
      %v1992 = vpop.f32.mrb[0].mxu0
      %1993 = vmatprep.mubr.bf16.mxu0 0
      %1994 = vmatmul.mubr.bf16.gmra.mrb[0].mxu0 %v1679
      %v1995 = vpop.f32.mrb[0].mxu0
      %v1996 = vadd.f32 %v1743, %v1995
      %v1997 = vpop.f32.mrb[0].mxu0
      %v1998 = vpop.f32.mrb[0].mxu0
      %v1999 = vadd.f32 %v1743, %v1998
      %v2000 = vpop.f32.mrb[0].mxu0
      %2001 = vmatprep.mubr.bf16.mxu0 0
      %2002 = vmatmul.mubr.bf16.gmra.mrb[0].mxu0 %v1680
      %v2003 = vpop.f32.mrb[0].mxu0
      %v2004 = vadd.f32 %v1743, %v2003
      %v2005 = vpop.f32.mrb[0].mxu0
      %v2006 = vpop.f32.mrb[0].mxu0
      %v2007 = vadd.f32 %v1743, %v2006
      %v2008 = vpop.f32.mrb[0].mxu0
      %2009 = vmatprep.mubr.bf16.mxu0 0
      %2010 = vmatmul.mubr.bf16.gmra.mrb[0].mxu0 %v1681
      %v2011 = vpop.f32.mrb[0].mxu0
      %v2012 = vadd.f32 %v1743, %v2011
      %v2013 = vpop.f32.mrb[0].mxu0
      %v2014 = vpop.f32.mrb[0].mxu0
      %v2015 = vadd.f32 %v1743, %v2014
      %v2016 = vpop.f32.mrb[0].mxu0
      %2017 = vmatprep.mubr.bf16.mxu0 0
      %2018 = vmatmul.mubr.bf16.gmra.mrb[0].mxu0 %v1682
      %v2019 = vpop.f32.mrb[0].mxu0
      %v2020 = vadd.f32 %v1743, %v2019
      %v2021 = vpop.f32.mrb[0].mxu0
      %v2022 = vpop.f32.mrb[0].mxu0
      %v2023 = vadd.f32 %v1743, %v2022
      %v2024 = vpop.f32.mrb[0].mxu0
      %2025 = vmatprep.mubr.bf16.mxu0 0
      %2026 = vmatmul.mubr.bf16.gmra.mrb[0].mxu0 %v1683
      %v2027 = vpop.f32.mrb[0].mxu0
      %v2028 = vadd.f32 %v1743, %v2027
      %v2029 = vpop.f32.mrb[0].mxu0
      %v2030 = vpop.f32.mrb[0].mxu0
      %v2031 = vadd.f32 %v1743, %v2030
      %v2032 = vpop.f32.mrb[0].mxu0
      %2033 = vmatprep.mubr.bf16.mxu0 0
      %2034 = vmatmul.mubr.bf16.gmra.mrb[0].mxu0 %v1684
      %v2035 = vpop.f32.mrb[0].mxu0
      %v2036 = vadd.f32 %v1743, %v2035
      %v2037 = vpop.f32.mrb[0].mxu0
      %v2038 = vpop.f32.mrb[0].mxu0
      %v2039 = vadd.f32 %v1743, %v2038
      %v2040 = vpop.f32.mrb[0].mxu0
      %2041 = vmatprep.mubr.bf16.mxu0 0
      %2042 = vmatmul.mubr.bf16.gmra.mrb[0].mxu0 %v1685
      %v2043 = vpop.f32.mrb[0].mxu0
      %v2044 = vadd.f32 %v1743, %v2043
      %v2045 = vpop.f32.mrb[0].mxu0
      %v2046 = vpop.f32.mrb[0].mxu0
      %v2047 = vadd.f32 %v1743, %v2046
      %v2048 = vpop.f32.mrb[0].mxu0
      %2049 = vmatprep.mubr.bf16.mxu0 0
      %2050 = vmatmul.mubr.bf16.gmra.mrb[0].mxu0 %v1686
      %v2051 = vpop.f32.mrb[0].mxu0
      %v2052 = vadd.f32 %v1743, %v2051
      %v2053 = vpop.f32.mrb[0].mxu0
      %v2054 = vpop.f32.mrb[0].mxu0
      %v2055 = vadd.f32 %v1743, %v2054
      %v2056 = vpop.f32.mrb[0].mxu0
      %2057 = vmatprep.mubr.bf16.mxu0 0
      %2058 = vmatmul.mubr.bf16.gmra.mrb[0].mxu0 %v1687
      %v2059 = vpop.f32.mrb[0].mxu0
      %v2060 = vadd.f32 %v1743, %v2059
      %v2061 = vpop.f32.mrb[0].mxu0
      %v2062 = vpop.f32.mrb[0].mxu0
      %v2063 = vadd.f32 %v1743, %v2062
      %v2064 = vpop.f32.mrb[0].mxu0
      %2065 = vmatprep.mubr.bf16.mxu0 0
      %2066 = vmatmul.mubr.bf16.gmra.mrb[0].mxu0 %v1688
      %v2067 = vpop.f32.mrb[0].mxu0
      %v2068 = vadd.f32 %v1743, %v2067
      %v2069 = vpop.f32.mrb[0].mxu0
      %v2070 = vpop.f32.mrb[0].mxu0
      %v2071 = vadd.f32 %v1743, %v2070
      %v2072 = vpop.f32.mrb[0].mxu0
      %2073 = vmatprep.mubr.bf16.mxu0 0
      %2074 = vmatmul.mubr.bf16.gmra.mrb[0].mxu0 %v1689
      %v2075 = vpop.f32.mrb[0].mxu0
      %v2076 = vadd.f32 %v1743, %v2075
      %v2077 = vpop.f32.mrb[0].mxu0
      %v2078 = vpop.f32.mrb[0].mxu0
      %v2079 = vadd.f32 %v1743, %v2078
      %v2080 = vpop.f32.mrb[0].mxu0
      %2081 = vmatprep.mubr.bf16.mxu0 0
      %2082 = vmatmul.mubr.bf16.gmra.mrb[0].mxu0 %v1690
      %v2083 = vpop.f32.mrb[0].mxu0
      %v2084 = vadd.f32 %v1743, %v2083
      %v2085 = vpop.f32.mrb[0].mxu0
      %v2086 = vpop.f32.mrb[0].mxu0
      %v2087 = vadd.f32 %v1743, %v2086
      %v2088 = vpop.f32.mrb[0].mxu0
      %2089 = vmatprep.mubr.bf16.mxu0 0
      %2090 = vmatmul.mubr.bf16.gmra.mrb[0].mxu0 %v1691
      %v2091 = vpop.f32.mrb[0].mxu0
      %v2092 = vadd.f32 %v1743, %v2091
      %v2093 = vpop.f32.mrb[0].mxu0
      %v2094 = vpop.f32.mrb[0].mxu0
      %v2095 = vadd.f32 %v1743, %v2094
      %v2096 = vpop.f32.mrb[0].mxu0
      %2097 = vmatprep.mubr.bf16.mxu0 0
      %2098 = vmatmul.mubr.bf16.gmra.mrb[0].mxu0 %v1692
      %v2099 = vpop.f32.mrb[0].mxu0
      %v2100 = vadd.f32 %v1743, %v2099
      %v2101 = vpop.f32.mrb[0].mxu0
      %v2102 = vpop.f32.mrb[0].mxu0
      %v2103 = vadd.f32 %v1743, %v2102
      %v2104 = vpop.f32.mrb[0].mxu0
      %2105 = vmatprep.mubr.bf16.mxu0 0
      %2106 = vmatmul.mubr.bf16.gmra.mrb[0].mxu0 %v1693
      %v2107 = vpop.f32.mrb[0].mxu0
      %v2108 = vadd.f32 %v1743, %v2107
      %v2109 = vpop.f32.mrb[0].mxu0
      %v2110 = vpop.f32.mrb[0].mxu0
      %v2111 = vadd.f32 %v1743, %v2110
      %v2112 = vpop.f32.mrb[0].mxu0
      %2113 = vmatprep.mubr.bf16.mxu0 0
      %2114 = vmatmul.mubr.bf16.gmra.mrb[0].mxu0 %v1694
      %v2115 = vpop.f32.mrb[0].mxu0
      %v2116 = vadd.f32 %v1743, %v2115
      %v2117 = vpop.f32.mrb[0].mxu0
      %v2118 = vpop.f32.mrb[0].mxu0
      %v2119 = vadd.f32 %v1743, %v2118
      %v2120 = vpop.f32.mrb[0].mxu0
      %2121 = vmatprep.mubr.bf16.mxu0 0
      %2122 = vmatmul.mubr.bf16.gmra.mrb[0].mxu0 %v1695
      %v2123 = vpop.f32.mrb[0].mxu0
      %v2124 = vadd.f32 %v1743, %v2123
      %v2125 = vpop.f32.mrb[0].mxu0
      %v2126 = vpop.f32.mrb[0].mxu0
      %v2127 = vadd.f32 %v1743, %v2126
      %v2128 = vpop.f32.mrb[0].mxu0
      %2129 = vmatprep.mubr.bf16.mxu0 0
      %2130 = vmatmul.mubr.bf16.gmra.mrb[0].mxu0 %v1696
      %v2131 = vpop.f32.mrb[0].mxu0
      %v2132 = vadd.f32 %v1743, %v2131
      %v2133 = vpop.f32.mrb[0].mxu0
      %v2134 = vpop.f32.mrb[0].mxu0
      %v2135 = vadd.f32 %v1743, %v2134
      %v2136 = vpop.f32.mrb[0].mxu0
      %2137 = vmatprep.mubr.bf16.mxu0 0
      %2138 = vmatmul.mubr.bf16.gmra.mrb[0].mxu0 %v1697
      %v2139 = vpop.f32.mrb[0].mxu0
      %v2140 = vadd.f32 %v1743, %v2139
      %v2141 = vpop.f32.mrb[0].mxu0
      %v2142 = vpop.f32.mrb[0].mxu0
      %v2143 = vadd.f32 %v1743, %v2142
      %v2144 = vpop.f32.mrb[0].mxu0
      %2145 = vmatprep.mubr.bf16.mxu0 0
      %2146 = vmatmul.mubr.bf16.gmra.mrb[0].mxu0 %v1698
      %v2147 = vpop.f32.mrb[0].mxu0
      %v2148 = vadd.f32 %v1743, %v2147
      %v2149 = vpop.f32.mrb[0].mxu0
      %v2150 = vpop.f32.mrb[0].mxu0
      %v2151 = vadd.f32 %v1743, %v2150
      %v2152 = vpop.f32.mrb[0].mxu0
      %2153 = vmatprep.mubr.bf16.mxu0 0
      %2154 = vmatmul.mubr.bf16.gmra.mrb[0].mxu0 %v1699
      %v2155 = vpop.f32.mrb[0].mxu0
      %v2156 = vadd.f32 %v1743, %v2155
      %v2157 = vpop.f32.mrb[0].mxu0
      %v2158 = vpop.f32.mrb[0].mxu0
      %v2159 = vadd.f32 %v1743, %v2158
      %v2160 = vpop.f32.mrb[0].mxu0
      %2161 = vmatprep.mubr.bf16.mxu0 0
      %2162 = vmatmul.mubr.bf16.gmra.mrb[0].mxu0 %v1700
      %v2163 = vpop.f32.mrb[0].mxu0
      %v2164 = vadd.f32 %v1743, %v2163
      %v2165 = vpop.f32.mrb[0].mxu0
      %v2166 = vpop.f32.mrb[0].mxu0
      %v2167 = vadd.f32 %v1743, %v2166
      %v2168 = vpop.f32.mrb[0].mxu0
      %2169 = vmatprep.mubr.bf16.mxu0 0
      %2170 = vmatmul.mubr.bf16.gmra.mrb[0].mxu0 %v1701
      %v2171 = vpop.f32.mrb[0].mxu0
      %v2172 = vadd.f32 %v1743, %v2171
      %v2173 = vpop.f32.mrb[0].mxu0
      %v2174 = vpop.f32.mrb[0].mxu0
      %v2175 = vadd.f32 %v1743, %v2174
      %v2176 = vpop.f32.mrb[0].mxu0
      %2177 = vmatprep.mubr.bf16.mxu0 0
      %2178 = vmatmul.mubr.bf16.gmra.mrb[0].mxu0 %v1702
      %v2179 = vpop.f32.mrb[0].mxu0
      %v2180 = vadd.f32 %v1743, %v2179
      %v2181 = vpop.f32.mrb[0].mxu0
      %v2182 = vpop.f32.mrb[0].mxu0
      %v2183 = vadd.f32 %v1743, %v2182
      %v2184 = vpop.f32.mrb[0].mxu0
      %2185 = vmatprep.mubr.bf16.mxu0 0
      %2186 = vmatmul.mubr.bf16.gmra.mrb[0].mxu0 %v1703
      %v2187 = vpop.f32.mrb[0].mxu0
      %v2188 = vadd.f32 %v1743, %v2187
      %v2189 = vpop.f32.mrb[0].mxu0
      %v2190 = vpop.f32.mrb[0].mxu0
      %v2191 = vadd.f32 %v1743, %v2190
      %v2192 = vpop.f32.mrb[0].mxu0
      %2193 = vmatprep.mubr.bf16.mxu0 0
      %2194 = vmatmul.mubr.bf16.gmra.mrb[0].mxu0 %v1704
      %v2195 = vpop.f32.mrb[0].mxu0
      %v2196 = vadd.f32 %v1743, %v2195
      %v2197 = vpop.f32.mrb[0].mxu0
      %v2198 = vpop.f32.mrb[0].mxu0
      %v2199 = vadd.f32 %v1743, %v2198
      %v2200 = vpop.f32.mrb[0].mxu0
      %2201 = vmatprep.mubr.bf16.mxu0 0
      %2202 = vmatmul.mubr.bf16.gmra.mrb[0].mxu0 %v1705
      %v2203 = vpop.f32.mrb[0].mxu0
      %v2204 = vadd.f32 %v1743, %v2203
      %v2205 = vpop.f32.mrb[0].mxu0
      %v2206 = vpop.f32.mrb[0].mxu0
      %v2207 = vadd.f32 %v1743, %v2206
      %v2208 = vpop.f32.mrb[0].mxu0
      %2209 = vmatprep.mubr.bf16.mxu0 0
      %2210 = vmatmul.mubr.bf16.gmra.mrb[0].mxu0 %v1706
      %v2211 = vpop.f32.mrb[0].mxu0
      %v2212 = vadd.f32 %v1743, %v2211
      %v2213 = vpop.f32.mrb[0].mxu0
      %v2214 = vpop.f32.mrb[0].mxu0
      %v2215 = vadd.f32 %v1743, %v2214
      %v2216 = vpop.f32.mrb[0].mxu0
      %2217 = vmatprep.mubr.bf16.mxu0 0
      %2218 = vmatmul.mubr.bf16.gmra.mrb[0].mxu0 %v1707
      %v2219 = vpop.f32.mrb[0].mxu0
      %v2220 = vadd.f32 %v1743, %v2219
      %v2221 = vpop.f32.mrb[0].mxu0
      %v2222 = vpop.f32.mrb[0].mxu0
      %v2223 = vadd.f32 %v1743, %v2222
      %v2224 = vpop.f32.mrb[0].mxu0
      %2225 = vmatprep.mubr.bf16.mxu0 0
      %2226 = vmatmul.mubr.bf16.gmra.mrb[0].mxu0 %v1708
      %v2227 = vpop.f32.mrb[0].mxu0
      %v2228 = vadd.f32 %v1743, %v2227
      %v2229 = vpop.f32.mrb[0].mxu0
      %v2230 = vpop.f32.mrb[0].mxu0
      %v2231 = vadd.f32 %v1743, %v2230
      %v2232 = vpop.f32.mrb[0].mxu0
      %2233 = vmatprep.mubr.bf16.mxu0 0
      %2234 = vmatmul.mubr.bf16.gmra.mrb[0].mxu0 %v1709
      %v2235 = vpop.f32.mrb[0].mxu0
      %v2236 = vadd.f32 %v1743, %v2235
      %v2237 = vpop.f32.mrb[0].mxu0
      %v2238 = vpop.f32.mrb[0].mxu0
      %v2239 = vadd.f32 %v1743, %v2238
      %v2240 = vpop.f32.mrb[0].mxu0
      %2241 = vmatprep.mubr.bf16.mxu0 0
      %2242 = vmatmul.mubr.bf16.gmra.mrb[0].mxu0 %v1710
      %v2243 = vpop.f32.mrb[0].mxu0
      %v2244 = vadd.f32 %v1743, %v2243
      %v2245 = vpop.f32.mrb[0].mxu0
      %v2246 = vpop.f32.mrb[0].mxu0
      %v2247 = vadd.f32 %v1743, %v2246
      %v2248 = vpop.f32.mrb[0].mxu0
      %2249 = vmatprep.mubr.bf16.mxu0 0
      %2250 = vmatmul.mubr.bf16.gmra.mrb[0].mxu0 %v1711
      %v2251 = vpop.f32.mrb[0].mxu0
      %v2252 = vadd.f32 %v1743, %v2251
      %v2253 = vpop.f32.mrb[0].mxu0
      %v2254 = vpop.f32.mrb[0].mxu0
      %v2255 = vadd.f32 %v1743, %v2254
      %v2256 = vpop.f32.mrb[0].mxu0
      %2257 = vmatprep.mubr.bf16.mxu0 0
      %2258 = vmatmul.mubr.bf16.gmra.mrb[0].mxu0 %v1712
      %v2259 = vpop.f32.mrb[0].mxu0
      %v2260 = vadd.f32 %v1743, %v2259
      %v2261 = vpop.f32.mrb[0].mxu0
      %v2262 = vpop.f32.mrb[0].mxu0
      %v2263 = vadd.f32 %v1743, %v2262
      %v2264 = vpop.f32.mrb[0].mxu0
      %2265 = vmatprep.mubr.bf16.mxu0 0
      %2266 = vmatmul.mubr.bf16.gmra.mrb[0].mxu0 %v1713
      %v2267 = vpop.f32.mrb[0].mxu0
      %v2268 = vadd.f32 %v1743, %v2267
      %v2269 = vpop.f32.mrb[0].mxu0
      %v2270 = vpop.f32.mrb[0].mxu0
      %v2271 = vadd.f32 %v1743, %v2270
      %v2272 = vpop.f32.mrb[0].mxu0
      %2273 = vmatprep.mubr.bf16.mxu0 0
      %2274 = vmatmul.mubr.bf16.gmra.mrb[0].mxu0 %v1714
      %v2275 = vpop.f32.mrb[0].mxu0
      %v2276 = vadd.f32 %v1743, %v2275
      %v2277 = vpop.f32.mrb[0].mxu0
      %v2278 = vpop.f32.mrb[0].mxu0
      %v2279 = vadd.f32 %v1743, %v2278
      %v2280 = vpop.f32.mrb[0].mxu0
      %2281 = vmatprep.mubr.bf16.mxu0 0
      %2282 = vmatmul.mubr.bf16.gmra.mrb[0].mxu0 %v1715
      %v2283 = vpop.f32.mrb[0].mxu0
      %v2284 = vadd.f32 %v1743, %v2283
      %v2285 = vpop.f32.mrb[0].mxu0
      %v2286 = vpop.f32.mrb[0].mxu0
      %v2287 = vadd.f32 %v1743, %v2286
      %v2288 = vpop.f32.mrb[0].mxu0
      %2289 = vmatprep.mubr.bf16.mxu0 0
      %2290 = vmatmul.mubr.bf16.gmra.mrb[0].mxu0 %v1716
      %v2291 = vpop.f32.mrb[0].mxu0
      %v2292 = vadd.f32 %v1743, %v2291
      %v2293 = vpop.f32.mrb[0].mxu0
      %v2294 = vpop.f32.mrb[0].mxu0
      %v2295 = vadd.f32 %v1743, %v2294
      %v2296 = vpop.f32.mrb[0].mxu0
      %2297 = vmatprep.mubr.bf16.mxu0 0
      %2298 = vmatmul.mubr.bf16.gmra.mrb[0].mxu0 %v1717
      %v2299 = vpop.f32.mrb[0].mxu0
      %v2300 = vadd.f32 %v1743, %v2299
      %v2301 = vpop.f32.mrb[0].mxu0
      %v2302 = vpop.f32.mrb[0].mxu0
      %v2303 = vadd.f32 %v1743, %v2302
      %v2304 = vpop.f32.mrb[0].mxu0
      %2305 = vmatprep.mubr.bf16.mxu0 0
      %2306 = vmatmul.mubr.bf16.gmra.mrb[0].mxu0 %v1718
      %v2307 = vpop.f32.mrb[0].mxu0
      %v2308 = vadd.f32 %v1743, %v2307
      %v2309 = vpop.f32.mrb[0].mxu0
      %v2310 = vpop.f32.mrb[0].mxu0
      %v2311 = vadd.f32 %v1743, %v2310
      %v2312 = vpop.f32.mrb[0].mxu0
      %2313 = vmatprep.mubr.bf16.mxu0 0
      %2314 = vmatmul.mubr.bf16.gmra.mrb[0].mxu0 %v1719
      %v2315 = vpop.f32.mrb[0].mxu0
      %v2316 = vadd.f32 %v1743, %v2315
      %v2317 = vpop.f32.mrb[0].mxu0
      %v2318 = vpop.f32.mrb[0].mxu0
      %v2319 = vadd.f32 %v1743, %v2318
      %v2320 = vpop.f32.mrb[0].mxu0
      %2321 = vmatprep.mubr.bf16.mxu0 0
      %2322 = vmatmul.mubr.bf16.gmra.mrb[0].mxu0 %v1720
      %v2323 = vpop.f32.mrb[0].mxu0
      %v2324 = vadd.f32 %v1743, %v2323
      %v2325 = vpop.f32.mrb[0].mxu0
      %v2326 = vpop.f32.mrb[0].mxu0
      %v2327 = vadd.f32 %v1743, %v2326
      %v2328 = vpop.f32.mrb[0].mxu0
      %2329 = vmatprep.mubr.bf16.mxu0 0
      %2330 = vmatmul.mubr.bf16.gmra.mrb[0].mxu0 %v1721
      %v2331 = vpop.f32.mrb[0].mxu0
      %v2332 = vadd.f32 %v1743, %v2331
      %v2333 = vpop.f32.mrb[0].mxu0
      %v2334 = vpop.f32.mrb[0].mxu0
      %v2335 = vadd.f32 %v1743, %v2334
      %v2336 = vpop.f32.mrb[0].mxu0
      %2337 = vdwg.mxu0
      %v2338 = vmax.f32 %v1828, 0.0
      %v2339 = vmax.f32 %v1831, 0.0
      %v2340 = vmax.f32 %v1836, 0.0
      %v2341 = vmax.f32 %v1839, 0.0
      %v2342 = vmax.f32 %v1844, 0.0
      %v2343 = vmax.f32 %v1847, 0.0
      %v2344 = vmax.f32 %v1852, 0.0
      %v2345 = vmax.f32 %v1855, 0.0
      %v2346 = vmax.f32 %v1860, 0.0
      %v2347 = vmax.f32 %v1863, 0.0
      %v2348 = vmax.f32 %v1868, 0.0
      %v2349 = vmax.f32 %v1871, 0.0
      %v2350 = vmax.f32 %v1876, 0.0
      %v2351 = vmax.f32 %v1879, 0.0
      %v2352 = vmax.f32 %v1884, 0.0
      %v2353 = vmax.f32 %v1887, 0.0
      %v2354 = vmax.f32 %v1892, 0.0
      %v2355 = vmax.f32 %v1895, 0.0
      %v2356 = vmax.f32 %v1900, 0.0
      %v2357 = vmax.f32 %v1903, 0.0
      %v2358 = vmax.f32 %v1908, 0.0
      %v2359 = vmax.f32 %v1911, 0.0
      %v2360 = vmax.f32 %v1916, 0.0
      %v2361 = vmax.f32 %v1919, 0.0
      %v2362 = vmax.f32 %v1924, 0.0
      %v2363 = vmax.f32 %v1927, 0.0
      %v2364 = vmax.f32 %v1932, 0.0
      %v2365 = vmax.f32 %v1935, 0.0
      %v2366 = vmax.f32 %v1940, 0.0
      %v2367 = vmax.f32 %v1943, 0.0
      %v2368 = vmax.f32 %v1948, 0.0
      %v2369 = vmax.f32 %v1951, 0.0
      %v2370 = vmax.f32 %v1956, 0.0
      %v2371 = vmax.f32 %v1959, 0.0
      %v2372 = vmax.f32 %v1964, 0.0
      %v2373 = vmax.f32 %v1967, 0.0
      %v2374 = vmax.f32 %v1972, 0.0
      %v2375 = vmax.f32 %v1975, 0.0
      %v2376 = vmax.f32 %v1980, 0.0
      %v2377 = vmax.f32 %v1983, 0.0
      %v2378 = vmax.f32 %v1988, 0.0
      %v2379 = vmax.f32 %v1991, 0.0
      %v2380 = vmax.f32 %v1996, 0.0
      %v2381 = vmax.f32 %v1999, 0.0
      %v2382 = vmax.f32 %v2004, 0.0
      %v2383 = vmax.f32 %v2007, 0.0
      %v2384 = vmax.f32 %v2012, 0.0
      %v2385 = vmax.f32 %v2015, 0.0
      %v2386 = vmax.f32 %v2020, 0.0
      %v2387 = vmax.f32 %v2023, 0.0
      %v2388 = vmax.f32 %v2028, 0.0
      %v2389 = vmax.f32 %v2031, 0.0
      %v2390 = vmax.f32 %v2036, 0.0
      %v2391 = vmax.f32 %v2039, 0.0
      %v2392 = vmax.f32 %v2044, 0.0
      %v2393 = vmax.f32 %v2047, 0.0
      %v2394 = vmax.f32 %v2052, 0.0
      %v2395 = vmax.f32 %v2055, 0.0
      %v2396 = vmax.f32 %v2060, 0.0
      %v2397 = vmax.f32 %v2063, 0.0
      %v2398 = vmax.f32 %v2068, 0.0
      %v2399 = vmax.f32 %v2071, 0.0
      %v2400 = vmax.f32 %v2076, 0.0
      %v2401 = vmax.f32 %v2079, 0.0
      %v2402 = vmax.f32 %v2084, 0.0
      %v2403 = vmax.f32 %v2087, 0.0
      %v2404 = vmax.f32 %v2092, 0.0
      %v2405 = vmax.f32 %v2095, 0.0
      %v2406 = vmax.f32 %v2100, 0.0
      %v2407 = vmax.f32 %v2103, 0.0
      %v2408 = vmax.f32 %v2108, 0.0
      %v2409 = vmax.f32 %v2111, 0.0
      %v2410 = vmax.f32 %v2116, 0.0
      %v2411 = vmax.f32 %v2119, 0.0
      %v2412 = vmax.f32 %v2124, 0.0
      %v2413 = vmax.f32 %v2127, 0.0
      %v2414 = vmax.f32 %v2132, 0.0
      %v2415 = vmax.f32 %v2135, 0.0
      %v2416 = vmax.f32 %v2140, 0.0
      %v2417 = vmax.f32 %v2143, 0.0
      %v2418 = vmax.f32 %v2148, 0.0
      %v2419 = vmax.f32 %v2151, 0.0
      %v2420 = vmax.f32 %v2156, 0.0
      %v2421 = vmax.f32 %v2159, 0.0
      %v2422 = vmax.f32 %v2164, 0.0
      %v2423 = vmax.f32 %v2167, 0.0
      %v2424 = vmax.f32 %v2172, 0.0
      %v2425 = vmax.f32 %v2175, 0.0
      %v2426 = vmax.f32 %v2180, 0.0
      %v2427 = vmax.f32 %v2183, 0.0
      %v2428 = vmax.f32 %v2188, 0.0
      %v2429 = vmax.f32 %v2191, 0.0
      %v2430 = vmax.f32 %v2196, 0.0
      %v2431 = vmax.f32 %v2199, 0.0
      %v2432 = vmax.f32 %v2204, 0.0
      %v2433 = vmax.f32 %v2207, 0.0
      %v2434 = vmax.f32 %v2212, 0.0
      %v2435 = vmax.f32 %v2215, 0.0
      %v2436 = vmax.f32 %v2220, 0.0
      %v2437 = vmax.f32 %v2223, 0.0
      %v2438 = vmax.f32 %v2228, 0.0
      %v2439 = vmax.f32 %v2231, 0.0
      %v2440 = vmax.f32 %v2236, 0.0
      %v2441 = vmax.f32 %v2239, 0.0
      %v2442 = vmax.f32 %v2244, 0.0
      %v2443 = vmax.f32 %v2247, 0.0
      %v2444 = vmax.f32 %v2252, 0.0
      %v2445 = vmax.f32 %v2255, 0.0
      %v2446 = vmax.f32 %v2260, 0.0
      %v2447 = vmax.f32 %v2263, 0.0
      %v2448 = vmax.f32 %v2268, 0.0
      %v2449 = vmax.f32 %v2271, 0.0
      %v2450 = vmax.f32 %v2276, 0.0
      %v2451 = vmax.f32 %v2279, 0.0
      %v2452 = vmax.f32 %v2284, 0.0
      %v2453 = vmax.f32 %v2287, 0.0
      %v2454 = vmax.f32 %v2292, 0.0
      %v2455 = vmax.f32 %v2295, 0.0
      %v2456 = vmax.f32 %v2300, 0.0
      %v2457 = vmax.f32 %v2303, 0.0
      %v2458 = vmax.f32 %v2308, 0.0
      %v2459 = vmax.f32 %v2311, 0.0
      %v2460 = vmax.f32 %v2316, 0.0
      %v2461 = vmax.f32 %v2319, 0.0
      %v2462 = vmax.f32 %v2324, 0.0
      %v2463 = vmax.f32 %v2327, 0.0
      %v2464 = vmax.f32 %v2332, 0.0
      %v2465 = vmax.f32 %v2335, 0.0
      %v2466 = vld [vmem:[%s5] sm:$0x1]
      %v2468 = vlaneseq
      %v2469 = vshrl.u32 %v2468, 7
      %v2470 = vsub.s32 0, %v2469
      %v2471 = vrot.slane %v2466, %v2470
      %v2473 = vmul.f32 %v2338, %v2471
      %v2474 = vmul.f32 %v2339, %v2471
      %v2475 = vmul.f32 %v2340, %v2471
      %v2476 = vmul.f32 %v2341, %v2471
      %v2477 = vmul.f32 %v2342, %v2471
      %v2478 = vmul.f32 %v2343, %v2471
      %v2479 = vmul.f32 %v2344, %v2471
      %v2480 = vmul.f32 %v2345, %v2471
      %v2481 = vmul.f32 %v2346, %v2471
      %v2482 = vmul.f32 %v2347, %v2471
      %v2483 = vmul.f32 %v2348, %v2471
      %v2484 = vmul.f32 %v2349, %v2471
      %v2485 = vmul.f32 %v2350, %v2471
      %v2486 = vmul.f32 %v2351, %v2471
      %v2487 = vmul.f32 %v2352, %v2471
      %v2488 = vmul.f32 %v2353, %v2471
      %v2489 = vmul.f32 %v2354, %v2471
      %v2490 = vmul.f32 %v2355, %v2471
      %v2491 = vmul.f32 %v2356, %v2471
      %v2492 = vmul.f32 %v2357, %v2471
      %v2493 = vmul.f32 %v2358, %v2471
      %v2494 = vmul.f32 %v2359, %v2471
      %v2495 = vmul.f32 %v2360, %v2471
      %v2496 = vmul.f32 %v2361, %v2471
      %v2497 = vmul.f32 %v2362, %v2471
      %v2498 = vmul.f32 %v2363, %v2471
      %v2499 = vmul.f32 %v2364, %v2471
      %v2500 = vmul.f32 %v2365, %v2471
      %v2501 = vmul.f32 %v2366, %v2471
      %v2502 = vmul.f32 %v2367, %v2471
      %v2503 = vmul.f32 %v2368, %v2471
      %v2504 = vmul.f32 %v2369, %v2471
      %v2505 = vmul.f32 %v2370, %v2471
      %v2506 = vmul.f32 %v2371, %v2471
      %v2507 = vmul.f32 %v2372, %v2471
      %v2508 = vmul.f32 %v2373, %v2471
      %v2509 = vmul.f32 %v2374, %v2471
      %v2510 = vmul.f32 %v2375, %v2471
      %v2511 = vmul.f32 %v2376, %v2471
      %v2512 = vmul.f32 %v2377, %v2471
      %v2513 = vmul.f32 %v2378, %v2471
      %v2514 = vmul.f32 %v2379, %v2471
      %v2515 = vmul.f32 %v2380, %v2471
      %v2516 = vmul.f32 %v2381, %v2471
      %v2517 = vmul.f32 %v2382, %v2471
      %v2518 = vmul.f32 %v2383, %v2471
      %v2519 = vmul.f32 %v2384, %v2471
      %v2520 = vmul.f32 %v2385, %v2471
      %v2521 = vmul.f32 %v2386, %v2471
      %v2522 = vmul.f32 %v2387, %v2471
      %v2523 = vmul.f32 %v2388, %v2471
      %v2524 = vmul.f32 %v2389, %v2471
      %v2525 = vmul.f32 %v2390, %v2471
      %v2526 = vmul.f32 %v2391, %v2471
      %v2527 = vmul.f32 %v2392, %v2471
      %v2528 = vmul.f32 %v2393, %v2471
      %v2529 = vmul.f32 %v2394, %v2471
      %v2530 = vmul.f32 %v2395, %v2471
      %v2531 = vmul.f32 %v2396, %v2471
      %v2532 = vmul.f32 %v2397, %v2471
      %v2533 = vmul.f32 %v2398, %v2471
      %v2534 = vmul.f32 %v2399, %v2471
      %v2535 = vmul.f32 %v2400, %v2471
      %v2536 = vmul.f32 %v2401, %v2471
      %v2537 = vmul.f32 %v2402, %v2471
      %v2538 = vmul.f32 %v2403, %v2471
      %v2539 = vmul.f32 %v2404, %v2471
      %v2540 = vmul.f32 %v2405, %v2471
      %v2541 = vmul.f32 %v2406, %v2471
      %v2542 = vmul.f32 %v2407, %v2471
      %v2543 = vmul.f32 %v2408, %v2471
      %v2544 = vmul.f32 %v2409, %v2471
      %v2545 = vmul.f32 %v2410, %v2471
      %v2546 = vmul.f32 %v2411, %v2471
      %v2547 = vmul.f32 %v2412, %v2471
      %v2548 = vmul.f32 %v2413, %v2471
      %v2549 = vmul.f32 %v2414, %v2471
      %v2550 = vmul.f32 %v2415, %v2471
      %v2551 = vmul.f32 %v2416, %v2471
      %v2552 = vmul.f32 %v2417, %v2471
      %v2553 = vmul.f32 %v2418, %v2471
      %v2554 = vmul.f32 %v2419, %v2471
      %v2555 = vmul.f32 %v2420, %v2471
      %v2556 = vmul.f32 %v2421, %v2471
      %v2557 = vmul.f32 %v2422, %v2471
      %v2558 = vmul.f32 %v2423, %v2471
      %v2559 = vmul.f32 %v2424, %v2471
      %v2560 = vmul.f32 %v2425, %v2471
      %v2561 = vmul.f32 %v2426, %v2471
      %v2562 = vmul.f32 %v2427, %v2471
      %v2563 = vmul.f32 %v2428, %v2471
      %v2564 = vmul.f32 %v2429, %v2471
      %v2565 = vmul.f32 %v2430, %v2471
      %v2566 = vmul.f32 %v2431, %v2471
      %v2567 = vmul.f32 %v2432, %v2471
      %v2568 = vmul.f32 %v2433, %v2471
      %v2569 = vmul.f32 %v2434, %v2471
      %v2570 = vmul.f32 %v2435, %v2471
      %v2571 = vmul.f32 %v2436, %v2471
      %v2572 = vmul.f32 %v2437, %v2471
      %v2573 = vmul.f32 %v2438, %v2471
      %v2574 = vmul.f32 %v2439, %v2471
      %v2575 = vmul.f32 %v2440, %v2471
      %v2576 = vmul.f32 %v2441, %v2471
      %v2577 = vmul.f32 %v2442, %v2471
      %v2578 = vmul.f32 %v2443, %v2471
      %v2579 = vmul.f32 %v2444, %v2471
      %v2580 = vmul.f32 %v2445, %v2471
      %v2581 = vmul.f32 %v2446, %v2471
      %v2582 = vmul.f32 %v2447, %v2471
      %v2583 = vmul.f32 %v2448, %v2471
      %v2584 = vmul.f32 %v2449, %v2471
      %v2585 = vmul.f32 %v2450, %v2471
      %v2586 = vmul.f32 %v2451, %v2471
      %v2587 = vmul.f32 %v2452, %v2471
      %v2588 = vmul.f32 %v2453, %v2471
      %v2589 = vmul.f32 %v2454, %v2471
      %v2590 = vmul.f32 %v2455, %v2471
      %v2591 = vmul.f32 %v2456, %v2471
      %v2592 = vmul.f32 %v2457, %v2471
      %v2593 = vmul.f32 %v2458, %v2471
      %v2594 = vmul.f32 %v2459, %v2471
      %v2595 = vmul.f32 %v2460, %v2471
      %v2596 = vmul.f32 %v2461, %v2471
      %v2597 = vmul.f32 %v2462, %v2471
      %v2598 = vmul.f32 %v2463, %v2471
      %v2599 = vmul.f32 %v2464, %v2471
      %v2600 = vmul.f32 %v2465, %v2471
      %2601 = vadd.xlane.f32.xlu0 %v2473
      %v2602 = vpop.xlane.xlu0 %2601
      %2603 = vadd.xlane.f32.xlu0 %v2474
      %v2604 = vpop.xlane.xlu0 %2603
      %2605 = vadd.xlane.f32.xlu0 %v2475
      %v2606 = vpop.xlane.xlu0 %2605
      %2607 = vadd.xlane.f32.xlu0 %v2476
      %v2608 = vpop.xlane.xlu0 %2607
      %2609 = vadd.xlane.f32.xlu0 %v2477
      %v2610 = vpop.xlane.xlu0 %2609
      %2611 = vadd.xlane.f32.xlu0 %v2478
      %v2612 = vpop.xlane.xlu0 %2611
      %2613 = vadd.xlane.f32.xlu0 %v2479
      %v2614 = vpop.xlane.xlu0 %2613
      %2615 = vadd.xlane.f32.xlu0 %v2480
      %v2616 = vpop.xlane.xlu0 %2615
      %2617 = vadd.xlane.f32.xlu0 %v2481
      %v2618 = vpop.xlane.xlu0 %2617
      %2619 = vadd.xlane.f32.xlu0 %v2482
      %v2620 = vpop.xlane.xlu0 %2619
      %2621 = vadd.xlane.f32.xlu0 %v2483
      %v2622 = vpop.xlane.xlu0 %2621
      %2623 = vadd.xlane.f32.xlu0 %v2484
      %v2624 = vpop.xlane.xlu0 %2623
      %2625 = vadd.xlane.f32.xlu0 %v2485
      %v2626 = vpop.xlane.xlu0 %2625
      %2627 = vadd.xlane.f32.xlu0 %v2486
      %v2628 = vpop.xlane.xlu0 %2627
      %2629 = vadd.xlane.f32.xlu0 %v2487
      %v2630 = vpop.xlane.xlu0 %2629
      %2631 = vadd.xlane.f32.xlu0 %v2488
      %v2632 = vpop.xlane.xlu0 %2631
      %2633 = vadd.xlane.f32.xlu0 %v2489
      %v2634 = vpop.xlane.xlu0 %2633
      %2635 = vadd.xlane.f32.xlu0 %v2490
      %v2636 = vpop.xlane.xlu0 %2635
      %2637 = vadd.xlane.f32.xlu0 %v2491
      %v2638 = vpop.xlane.xlu0 %2637
      %2639 = vadd.xlane.f32.xlu0 %v2492
      %v2640 = vpop.xlane.xlu0 %2639
      %2641 = vadd.xlane.f32.xlu0 %v2493
      %v2642 = vpop.xlane.xlu0 %2641
      %2643 = vadd.xlane.f32.xlu0 %v2494
      %v2644 = vpop.xlane.xlu0 %2643
      %2645 = vadd.xlane.f32.xlu0 %v2495
      %v2646 = vpop.xlane.xlu0 %2645
      %2647 = vadd.xlane.f32.xlu0 %v2496
      %v2648 = vpop.xlane.xlu0 %2647
      %2649 = vadd.xlane.f32.xlu0 %v2497
      %v2650 = vpop.xlane.xlu0 %2649
      %2651 = vadd.xlane.f32.xlu0 %v2498
      %v2652 = vpop.xlane.xlu0 %2651
      %2653 = vadd.xlane.f32.xlu0 %v2499
      %v2654 = vpop.xlane.xlu0 %2653
      %2655 = vadd.xlane.f32.xlu0 %v2500
      %v2656 = vpop.xlane.xlu0 %2655
      %2657 = vadd.xlane.f32.xlu0 %v2501
      %v2658 = vpop.xlane.xlu0 %2657
      %2659 = vadd.xlane.f32.xlu0 %v2502
      %v2660 = vpop.xlane.xlu0 %2659
      %2661 = vadd.xlane.f32.xlu0 %v2503
      %v2662 = vpop.xlane.xlu0 %2661
      %2663 = vadd.xlane.f32.xlu0 %v2504
      %v2664 = vpop.xlane.xlu0 %2663
      %2665 = vadd.xlane.f32.xlu0 %v2505
      %v2666 = vpop.xlane.xlu0 %2665
      %2667 = vadd.xlane.f32.xlu0 %v2506
      %v2668 = vpop.xlane.xlu0 %2667
      %2669 = vadd.xlane.f32.xlu0 %v2507
      %v2670 = vpop.xlane.xlu0 %2669
      %2671 = vadd.xlane.f32.xlu0 %v2508
      %v2672 = vpop.xlane.xlu0 %2671
      %2673 = vadd.xlane.f32.xlu0 %v2509
      %v2674 = vpop.xlane.xlu0 %2673
      %2675 = vadd.xlane.f32.xlu0 %v2510
      %v2676 = vpop.xlane.xlu0 %2675
      %2677 = vadd.xlane.f32.xlu0 %v2511
      %v2678 = vpop.xlane.xlu0 %2677
      %2679 = vadd.xlane.f32.xlu0 %v2512
      %v2680 = vpop.xlane.xlu0 %2679
      %2681 = vadd.xlane.f32.xlu0 %v2513
      %v2682 = vpop.xlane.xlu0 %2681
      %2683 = vadd.xlane.f32.xlu0 %v2514
      %v2684 = vpop.xlane.xlu0 %2683
      %2685 = vadd.xlane.f32.xlu0 %v2515
      %v2686 = vpop.xlane.xlu0 %2685
      %2687 = vadd.xlane.f32.xlu0 %v2516
      %v2688 = vpop.xlane.xlu0 %2687
      %2689 = vadd.xlane.f32.xlu0 %v2517
      %v2690 = vpop.xlane.xlu0 %2689
      %2691 = vadd.xlane.f32.xlu0 %v2518
      %v2692 = vpop.xlane.xlu0 %2691
      %2693 = vadd.xlane.f32.xlu0 %v2519
      %v2694 = vpop.xlane.xlu0 %2693
      %2695 = vadd.xlane.f32.xlu0 %v2520
      %v2696 = vpop.xlane.xlu0 %2695
      %2697 = vadd.xlane.f32.xlu0 %v2521
      %v2698 = vpop.xlane.xlu0 %2697
      %2699 = vadd.xlane.f32.xlu0 %v2522
      %v2700 = vpop.xlane.xlu0 %2699
      %2701 = vadd.xlane.f32.xlu0 %v2523
      %v2702 = vpop.xlane.xlu0 %2701
      %2703 = vadd.xlane.f32.xlu0 %v2524
      %v2704 = vpop.xlane.xlu0 %2703
      %2705 = vadd.xlane.f32.xlu0 %v2525
      %v2706 = vpop.xlane.xlu0 %2705
      %2707 = vadd.xlane.f32.xlu0 %v2526
      %v2708 = vpop.xlane.xlu0 %2707
      %2709 = vadd.xlane.f32.xlu0 %v2527
      %v2710 = vpop.xlane.xlu0 %2709
      %2711 = vadd.xlane.f32.xlu0 %v2528
      %v2712 = vpop.xlane.xlu0 %2711
      %2713 = vadd.xlane.f32.xlu0 %v2529
      %v2714 = vpop.xlane.xlu0 %2713
      %2715 = vadd.xlane.f32.xlu0 %v2530
      %v2716 = vpop.xlane.xlu0 %2715
      %2717 = vadd.xlane.f32.xlu0 %v2531
      %v2718 = vpop.xlane.xlu0 %2717
      %2719 = vadd.xlane.f32.xlu0 %v2532
      %v2720 = vpop.xlane.xlu0 %2719
      %2721 = vadd.xlane.f32.xlu0 %v2533
      %v2722 = vpop.xlane.xlu0 %2721
      %2723 = vadd.xlane.f32.xlu0 %v2534
      %v2724 = vpop.xlane.xlu0 %2723
      %2725 = vadd.xlane.f32.xlu0 %v2535
      %v2726 = vpop.xlane.xlu0 %2725
      %2727 = vadd.xlane.f32.xlu0 %v2536
      %v2728 = vpop.xlane.xlu0 %2727
      %2729 = vadd.xlane.f32.xlu0 %v2537
      %v2730 = vpop.xlane.xlu0 %2729
      %2731 = vadd.xlane.f32.xlu0 %v2538
      %v2732 = vpop.xlane.xlu0 %2731
      %2733 = vadd.xlane.f32.xlu0 %v2539
      %v2734 = vpop.xlane.xlu0 %2733
      %2735 = vadd.xlane.f32.xlu0 %v2540
      %v2736 = vpop.xlane.xlu0 %2735
      %2737 = vadd.xlane.f32.xlu0 %v2541
      %v2738 = vpop.xlane.xlu0 %2737
      %2739 = vadd.xlane.f32.xlu0 %v2542
      %v2740 = vpop.xlane.xlu0 %2739
      %2741 = vadd.xlane.f32.xlu0 %v2543
      %v2742 = vpop.xlane.xlu0 %2741
      %2743 = vadd.xlane.f32.xlu0 %v2544
      %v2744 = vpop.xlane.xlu0 %2743
      %2745 = vadd.xlane.f32.xlu0 %v2545
      %v2746 = vpop.xlane.xlu0 %2745
      %2747 = vadd.xlane.f32.xlu0 %v2546
      %v2748 = vpop.xlane.xlu0 %2747
      %2749 = vadd.xlane.f32.xlu0 %v2547
      %v2750 = vpop.xlane.xlu0 %2749
      %2751 = vadd.xlane.f32.xlu0 %v2548
      %v2752 = vpop.xlane.xlu0 %2751
      %2753 = vadd.xlane.f32.xlu0 %v2549
      %v2754 = vpop.xlane.xlu0 %2753
      %2755 = vadd.xlane.f32.xlu0 %v2550
      %v2756 = vpop.xlane.xlu0 %2755
      %2757 = vadd.xlane.f32.xlu0 %v2551
      %v2758 = vpop.xlane.xlu0 %2757
      %2759 = vadd.xlane.f32.xlu0 %v2552
      %v2760 = vpop.xlane.xlu0 %2759
      %2761 = vadd.xlane.f32.xlu0 %v2553
      %v2762 = vpop.xlane.xlu0 %2761
      %2763 = vadd.xlane.f32.xlu0 %v2554
      %v2764 = vpop.xlane.xlu0 %2763
      %2765 = vadd.xlane.f32.xlu0 %v2555
      %v2766 = vpop.xlane.xlu0 %2765
      %2767 = vadd.xlane.f32.xlu0 %v2556
      %v2768 = vpop.xlane.xlu0 %2767
      %2769 = vadd.xlane.f32.xlu0 %v2557
      %v2770 = vpop.xlane.xlu0 %2769
      %2771 = vadd.xlane.f32.xlu0 %v2558
      %v2772 = vpop.xlane.xlu0 %2771
      %2773 = vadd.xlane.f32.xlu0 %v2559
      %v2774 = vpop.xlane.xlu0 %2773
      %2775 = vadd.xlane.f32.xlu0 %v2560
      %v2776 = vpop.xlane.xlu0 %2775
      %2777 = vadd.xlane.f32.xlu0 %v2561
      %v2778 = vpop.xlane.xlu0 %2777
      %2779 = vadd.xlane.f32.xlu0 %v2562
      %v2780 = vpop.xlane.xlu0 %2779
      %2781 = vadd.xlane.f32.xlu0 %v2563
      %v2782 = vpop.xlane.xlu0 %2781
      %2783 = vadd.xlane.f32.xlu0 %v2564
      %v2784 = vpop.xlane.xlu0 %2783
      %2785 = vadd.xlane.f32.xlu0 %v2565
      %v2786 = vpop.xlane.xlu0 %2785
      %2787 = vadd.xlane.f32.xlu0 %v2566
      %v2788 = vpop.xlane.xlu0 %2787
      %2789 = vadd.xlane.f32.xlu0 %v2567
      %v2790 = vpop.xlane.xlu0 %2789
      %2791 = vadd.xlane.f32.xlu0 %v2568
      %v2792 = vpop.xlane.xlu0 %2791
      %2793 = vadd.xlane.f32.xlu0 %v2569
      %v2794 = vpop.xlane.xlu0 %2793
      %2795 = vadd.xlane.f32.xlu0 %v2570
      %v2796 = vpop.xlane.xlu0 %2795
      %2797 = vadd.xlane.f32.xlu0 %v2571
      %v2798 = vpop.xlane.xlu0 %2797
      %2799 = vadd.xlane.f32.xlu0 %v2572
      %v2800 = vpop.xlane.xlu0 %2799
      %2801 = vadd.xlane.f32.xlu0 %v2573
      %v2802 = vpop.xlane.xlu0 %2801
      %2803 = vadd.xlane.f32.xlu0 %v2574
      %v2804 = vpop.xlane.xlu0 %2803
      %2805 = vadd.xlane.f32.xlu0 %v2575
      %v2806 = vpop.xlane.xlu0 %2805
      %2807 = vadd.xlane.f32.xlu0 %v2576
      %v2808 = vpop.xlane.xlu0 %2807
      %2809 = vadd.xlane.f32.xlu0 %v2577
      %v2810 = vpop.xlane.xlu0 %2809
      %2811 = vadd.xlane.f32.xlu0 %v2578
      %v2812 = vpop.xlane.xlu0 %2811
      %2813 = vadd.xlane.f32.xlu0 %v2579
      %v2814 = vpop.xlane.xlu0 %2813
      %2815 = vadd.xlane.f32.xlu0 %v2580
      %v2816 = vpop.xlane.xlu0 %2815
      %2817 = vadd.xlane.f32.xlu0 %v2581
      %v2818 = vpop.xlane.xlu0 %2817
      %2819 = vadd.xlane.f32.xlu0 %v2582
      %v2820 = vpop.xlane.xlu0 %2819
      %2821 = vadd.xlane.f32.xlu0 %v2583
      %v2822 = vpop.xlane.xlu0 %2821
      %2823 = vadd.xlane.f32.xlu0 %v2584
      %v2824 = vpop.xlane.xlu0 %2823
      %2825 = vadd.xlane.f32.xlu0 %v2585
      %v2826 = vpop.xlane.xlu0 %2825
      %2827 = vadd.xlane.f32.xlu0 %v2586
      %v2828 = vpop.xlane.xlu0 %2827
      %2829 = vadd.xlane.f32.xlu0 %v2587
      %v2830 = vpop.xlane.xlu0 %2829
      %2831 = vadd.xlane.f32.xlu0 %v2588
      %v2832 = vpop.xlane.xlu0 %2831
      %2833 = vadd.xlane.f32.xlu0 %v2589
      %v2834 = vpop.xlane.xlu0 %2833
      %2835 = vadd.xlane.f32.xlu0 %v2590
      %v2836 = vpop.xlane.xlu0 %2835
      %2837 = vadd.xlane.f32.xlu0 %v2591
      %v2838 = vpop.xlane.xlu0 %2837
      %2839 = vadd.xlane.f32.xlu0 %v2592
      %v2840 = vpop.xlane.xlu0 %2839
      %2841 = vadd.xlane.f32.xlu0 %v2593
      %v2842 = vpop.xlane.xlu0 %2841
      %2843 = vadd.xlane.f32.xlu0 %v2594
      %v2844 = vpop.xlane.xlu0 %2843
      %2845 = vadd.xlane.f32.xlu0 %v2595
      %v2846 = vpop.xlane.xlu0 %2845
      %2847 = vadd.xlane.f32.xlu0 %v2596
      %v2848 = vpop.xlane.xlu0 %2847
      %2849 = vadd.xlane.f32.xlu0 %v2597
      %v2850 = vpop.xlane.xlu0 %2849
      %2851 = vadd.xlane.f32.xlu0 %v2598
      %v2852 = vpop.xlane.xlu0 %2851
      %2853 = vadd.xlane.f32.xlu0 %v2599
      %v2854 = vpop.xlane.xlu0 %2853
      %2855 = vadd.xlane.f32.xlu0 %v2600
      %v2856 = vpop.xlane.xlu0 %2855
      %s2857 = sld [smem:[#allocation2]]
      %v2858 = vstv %s2857
      %v2859 = vadd.f32 %v2602, %v2858
      %v2860 = vadd.f32 %v2604, %v2858
      %v2861 = vadd.f32 %v2606, %v2858
      %v2862 = vadd.f32 %v2608, %v2858
      %v2863 = vadd.f32 %v2610, %v2858
      %v2864 = vadd.f32 %v2612, %v2858
      %v2865 = vadd.f32 %v2614, %v2858
      %v2866 = vadd.f32 %v2616, %v2858
      %v2867 = vadd.f32 %v2618, %v2858
      %v2868 = vadd.f32 %v2620, %v2858
      %v2869 = vadd.f32 %v2622, %v2858
      %v2870 = vadd.f32 %v2624, %v2858
      %v2871 = vadd.f32 %v2626, %v2858
      %v2872 = vadd.f32 %v2628, %v2858
      %v2873 = vadd.f32 %v2630, %v2858
      %v2874 = vadd.f32 %v2632, %v2858
      %v2875 = vadd.f32 %v2634, %v2858
      %v2876 = vadd.f32 %v2636, %v2858
      %v2877 = vadd.f32 %v2638, %v2858
      %v2878 = vadd.f32 %v2640, %v2858
      %v2879 = vadd.f32 %v2642, %v2858
      %v2880 = vadd.f32 %v2644, %v2858
      %v2881 = vadd.f32 %v2646, %v2858
      %v2882 = vadd.f32 %v2648, %v2858
      %v2883 = vadd.f32 %v2650, %v2858
      %v2884 = vadd.f32 %v2652, %v2858
      %v2885 = vadd.f32 %v2654, %v2858
      %v2886 = vadd.f32 %v2656, %v2858
      %v2887 = vadd.f32 %v2658, %v2858
      %v2888 = vadd.f32 %v2660, %v2858
      %v2889 = vadd.f32 %v2662, %v2858
      %v2890 = vadd.f32 %v2664, %v2858
      %v2891 = vadd.f32 %v2666, %v2858
      %v2892 = vadd.f32 %v2668, %v2858
      %v2893 = vadd.f32 %v2670, %v2858
      %v2894 = vadd.f32 %v2672, %v2858
      %v2895 = vadd.f32 %v2674, %v2858
      %v2896 = vadd.f32 %v2676, %v2858
      %v2897 = vadd.f32 %v2678, %v2858
      %v2898 = vadd.f32 %v2680, %v2858
      %v2899 = vadd.f32 %v2682, %v2858
      %v2900 = vadd.f32 %v2684, %v2858
      %v2901 = vadd.f32 %v2686, %v2858
      %v2902 = vadd.f32 %v2688, %v2858
      %v2903 = vadd.f32 %v2690, %v2858
      %v2904 = vadd.f32 %v2692, %v2858
      %v2905 = vadd.f32 %v2694, %v2858
      %v2906 = vadd.f32 %v2696, %v2858
      %v2907 = vadd.f32 %v2698, %v2858
      %v2908 = vadd.f32 %v2700, %v2858
      %v2909 = vadd.f32 %v2702, %v2858
      %v2910 = vadd.f32 %v2704, %v2858
      %v2911 = vadd.f32 %v2706, %v2858
      %v2912 = vadd.f32 %v2708, %v2858
      %v2913 = vadd.f32 %v2710, %v2858
      %v2914 = vadd.f32 %v2712, %v2858
      %v2915 = vadd.f32 %v2714, %v2858
      %v2916 = vadd.f32 %v2716, %v2858
      %v2917 = vadd.f32 %v2718, %v2858
      %v2918 = vadd.f32 %v2720, %v2858
      %v2919 = vadd.f32 %v2722, %v2858
      %v2920 = vadd.f32 %v2724, %v2858
      %v2921 = vadd.f32 %v2726, %v2858
      %v2922 = vadd.f32 %v2728, %v2858
      %v2923 = vadd.f32 %v2730, %v2858
      %v2924 = vadd.f32 %v2732, %v2858
      %v2925 = vadd.f32 %v2734, %v2858
      %v2926 = vadd.f32 %v2736, %v2858
      %v2927 = vadd.f32 %v2738, %v2858
      %v2928 = vadd.f32 %v2740, %v2858
      %v2929 = vadd.f32 %v2742, %v2858
      %v2930 = vadd.f32 %v2744, %v2858
      %v2931 = vadd.f32 %v2746, %v2858
      %v2932 = vadd.f32 %v2748, %v2858
      %v2933 = vadd.f32 %v2750, %v2858
      %v2934 = vadd.f32 %v2752, %v2858
      %v2935 = vadd.f32 %v2754, %v2858
      %v2936 = vadd.f32 %v2756, %v2858
      %v2937 = vadd.f32 %v2758, %v2858
      %v2938 = vadd.f32 %v2760, %v2858
      %v2939 = vadd.f32 %v2762, %v2858
      %v2940 = vadd.f32 %v2764, %v2858
      %v2941 = vadd.f32 %v2766, %v2858
      %v2942 = vadd.f32 %v2768, %v2858
      %v2943 = vadd.f32 %v2770, %v2858
      %v2944 = vadd.f32 %v2772, %v2858
      %v2945 = vadd.f32 %v2774, %v2858
      %v2946 = vadd.f32 %v2776, %v2858
      %v2947 = vadd.f32 %v2778, %v2858
      %v2948 = vadd.f32 %v2780, %v2858
      %v2949 = vadd.f32 %v2782, %v2858
      %v2950 = vadd.f32 %v2784, %v2858
      %v2951 = vadd.f32 %v2786, %v2858
      %v2952 = vadd.f32 %v2788, %v2858
      %v2953 = vadd.f32 %v2790, %v2858
      %v2954 = vadd.f32 %v2792, %v2858
      %v2955 = vadd.f32 %v2794, %v2858
      %v2956 = vadd.f32 %v2796, %v2858
      %v2957 = vadd.f32 %v2798, %v2858
      %v2958 = vadd.f32 %v2800, %v2858
      %v2959 = vadd.f32 %v2802, %v2858
      %v2960 = vadd.f32 %v2804, %v2858
      %v2961 = vadd.f32 %v2806, %v2858
      %v2962 = vadd.f32 %v2808, %v2858
      %v2963 = vadd.f32 %v2810, %v2858
      %v2964 = vadd.f32 %v2812, %v2858
      %v2965 = vadd.f32 %v2814, %v2858
      %v2966 = vadd.f32 %v2816, %v2858
      %v2967 = vadd.f32 %v2818, %v2858
      %v2968 = vadd.f32 %v2820, %v2858
      %v2969 = vadd.f32 %v2822, %v2858
      %v2970 = vadd.f32 %v2824, %v2858
      %v2971 = vadd.f32 %v2826, %v2858
      %v2972 = vadd.f32 %v2828, %v2858
      %v2973 = vadd.f32 %v2830, %v2858
      %v2974 = vadd.f32 %v2832, %v2858
      %v2975 = vadd.f32 %v2834, %v2858
      %v2976 = vadd.f32 %v2836, %v2858
      %v2977 = vadd.f32 %v2838, %v2858
      %v2978 = vadd.f32 %v2840, %v2858
      %v2979 = vadd.f32 %v2842, %v2858
      %v2980 = vadd.f32 %v2844, %v2858
      %v2981 = vadd.f32 %v2846, %v2858
      %v2982 = vadd.f32 %v2848, %v2858
      %v2983 = vadd.f32 %v2850, %v2858
      %v2984 = vadd.f32 %v2852, %v2858
      %v2985 = vadd.f32 %v2854, %v2858
      %v2986 = vadd.f32 %v2856, %v2858
      %v3115 = vlaneseq
      %v3116 = vand.u32 %v3115, 127
      %v3117 = vlaneseq
      %v3118 = vshrl.u32 %v3117, 7
      %v3119 = vsub.s32 %v3116, %v3118
      %v3120 = vrot.slane %v2859, %v3119
      %v3121 = vadd.s32 %v3116, 4294967288
      %v3122 = vlaneseq
      %v3123 = vshrl.u32 %v3122, 7
      %v3124 = vsub.s32 %v3121, %v3123
      %v3125 = vrot.slane %v2860, %v3124
      %vm3126 = vcmask 130112
      %v3127 = vsel %vm3126, %v3125, %v3120
      %v3128 = vadd.s32 %v3116, 4294967280
      %v3129 = vlaneseq
      %v3130 = vshrl.u32 %v3129, 7
      %v3131 = vsub.s32 %v3128, %v3130
      %v3132 = vrot.slane %v2861, %v3131
      %vm3133 = vcmask 195712
      %v3134 = vsel %vm3133, %v3132, %v3127
      %v3135 = vadd.s32 %v3116, 4294967272
      %v3136 = vlaneseq
      %v3137 = vshrl.u32 %v3136, 7
      %v3138 = vsub.s32 %v3135, %v3137
      %v3139 = vrot.slane %v2862, %v3138
      %vm3140 = vcmask 261312
      %v3141 = vsel %vm3140, %v3139, %v3134
      %v3142 = vadd.s32 %v3116, 4294967264
      %v3143 = vlaneseq
      %v3144 = vshrl.u32 %v3143, 7
      %v3145 = vsub.s32 %v3142, %v3144
      %v3146 = vrot.slane %v2863, %v3145
      %vm3147 = vcmask 326912
      %v3148 = vsel %vm3147, %v3146, %v3141
      %v3149 = vadd.s32 %v3116, 4294967256
      %v3150 = vlaneseq
      %v3151 = vshrl.u32 %v3150, 7
      %v3152 = vsub.s32 %v3149, %v3151
      %v3153 = vrot.slane %v2864, %v3152
      %vm3154 = vcmask 392512
      %v3155 = vsel %vm3154, %v3153, %v3148
      %v3156 = vadd.s32 %v3116, 4294967248
      %v3157 = vlaneseq
      %v3158 = vshrl.u32 %v3157, 7
      %v3159 = vsub.s32 %v3156, %v3158
      %v3160 = vrot.slane %v2865, %v3159
      %vm3161 = vcmask 458112
      %v3162 = vsel %vm3161, %v3160, %v3155
      %v3163 = vadd.s32 %v3116, 4294967240
      %v3164 = vlaneseq
      %v3165 = vshrl.u32 %v3164, 7
      %v3166 = vsub.s32 %v3163, %v3165
      %v3167 = vrot.slane %v2866, %v3166
      %vm3168 = vcmask 523712
      %v3169 = vsel %vm3168, %v3167, %v3162
      %v3170 = vadd.s32 %v3116, 4294967232
      %v3171 = vlaneseq
      %v3172 = vshrl.u32 %v3171, 7
      %v3173 = vsub.s32 %v3170, %v3172
      %v3174 = vrot.slane %v2867, %v3173
      %vm3175 = vcmask 589312
      %v3176 = vsel %vm3175, %v3174, %v3169
      %v3177 = vadd.s32 %v3116, 4294967224
      %v3178 = vlaneseq
      %v3179 = vshrl.u32 %v3178, 7
      %v3180 = vsub.s32 %v3177, %v3179
      %v3181 = vrot.slane %v2868, %v3180
      %vm3182 = vcmask 654912
      %v3183 = vsel %vm3182, %v3181, %v3176
      %v3184 = vadd.s32 %v3116, 4294967216
      %v3185 = vlaneseq
      %v3186 = vshrl.u32 %v3185, 7
      %v3187 = vsub.s32 %v3184, %v3186
      %v3188 = vrot.slane %v2869, %v3187
      %vm3189 = vcmask 720512
      %v3190 = vsel %vm3189, %v3188, %v3183
      %v3191 = vadd.s32 %v3116, 4294967208
      %v3192 = vlaneseq
      %v3193 = vshrl.u32 %v3192, 7
      %v3194 = vsub.s32 %v3191, %v3193
      %v3195 = vrot.slane %v2870, %v3194
      %vm3196 = vcmask 786112
      %v3197 = vsel %vm3196, %v3195, %v3190
      %v3198 = vadd.s32 %v3116, 4294967200
      %v3199 = vlaneseq
      %v3200 = vshrl.u32 %v3199, 7
      %v3201 = vsub.s32 %v3198, %v3200
      %v3202 = vrot.slane %v2871, %v3201
      %vm3203 = vcmask 851712
      %v3204 = vsel %vm3203, %v3202, %v3197
      %v3205 = vadd.s32 %v3116, 4294967192
      %v3206 = vlaneseq
      %v3207 = vshrl.u32 %v3206, 7
      %v3208 = vsub.s32 %v3205, %v3207
      %v3209 = vrot.slane %v2872, %v3208
      %vm3210 = vcmask 917312
      %v3211 = vsel %vm3210, %v3209, %v3204
      %v3212 = vadd.s32 %v3116, 4294967184
      %v3213 = vlaneseq
      %v3214 = vshrl.u32 %v3213, 7
      %v3215 = vsub.s32 %v3212, %v3214
      %v3216 = vrot.slane %v2873, %v3215
      %vm3217 = vcmask 982912
      %v3218 = vsel %vm3217, %v3216, %v3211
      %v3219 = vadd.s32 %v3116, 4294967176
      %v3220 = vlaneseq
      %v3221 = vshrl.u32 %v3220, 7
      %v3222 = vsub.s32 %v3219, %v3221
      %v3223 = vrot.slane %v2874, %v3222
      %vm3224 = vcmask 1048512
      %v3225 = vsel %vm3224, %v3223, %v3218
      %v3226 = vlaneseq
      %v3227 = vshrl.u32 %v3226, 7
      %v3228 = vsub.s32 %v3116, %v3227
      %v3229 = vrot.slane %v2875, %v3228
      %v3230 = vlaneseq
      %v3231 = vshrl.u32 %v3230, 7
      %v3232 = vsub.s32 %v3121, %v3231
      %v3233 = vrot.slane %v2876, %v3232
      %v3234 = vsel %vm3126, %v3233, %v3229
      %v3235 = vlaneseq
      %v3236 = vshrl.u32 %v3235, 7
      %v3237 = vsub.s32 %v3128, %v3236
      %v3238 = vrot.slane %v2877, %v3237
      %v3239 = vsel %vm3133, %v3238, %v3234
      %v3240 = vlaneseq
      %v3241 = vshrl.u32 %v3240, 7
      %v3242 = vsub.s32 %v3135, %v3241
      %v3243 = vrot.slane %v2878, %v3242
      %v3244 = vsel %vm3140, %v3243, %v3239
      %v3245 = vlaneseq
      %v3246 = vshrl.u32 %v3245, 7
      %v3247 = vsub.s32 %v3142, %v3246
      %v3248 = vrot.slane %v2879, %v3247
      %v3249 = vsel %vm3147, %v3248, %v3244
      %v3250 = vlaneseq
      %v3251 = vshrl.u32 %v3250, 7
      %v3252 = vsub.s32 %v3149, %v3251
      %v3253 = vrot.slane %v2880, %v3252
      %v3254 = vsel %vm3154, %v3253, %v3249
      %v3255 = vlaneseq
      %v3256 = vshrl.u32 %v3255, 7
      %v3257 = vsub.s32 %v3156, %v3256
      %v3258 = vrot.slane %v2881, %v3257
      %v3259 = vsel %vm3161, %v3258, %v3254
      %v3260 = vlaneseq
      %v3261 = vshrl.u32 %v3260, 7
      %v3262 = vsub.s32 %v3163, %v3261
      %v3263 = vrot.slane %v2882, %v3262
      %v3264 = vsel %vm3168, %v3263, %v3259
      %v3265 = vlaneseq
      %v3266 = vshrl.u32 %v3265, 7
      %v3267 = vsub.s32 %v3170, %v3266
      %v3268 = vrot.slane %v2883, %v3267
      %v3269 = vsel %vm3175, %v3268, %v3264
      %v3270 = vlaneseq
      %v3271 = vshrl.u32 %v3270, 7
      %v3272 = vsub.s32 %v3177, %v3271
      %v3273 = vrot.slane %v2884, %v3272
      %v3274 = vsel %vm3182, %v3273, %v3269
      %v3275 = vlaneseq
      %v3276 = vshrl.u32 %v3275, 7
      %v3277 = vsub.s32 %v3184, %v3276
      %v3278 = vrot.slane %v2885, %v3277
      %v3279 = vsel %vm3189, %v3278, %v3274
      %v3280 = vlaneseq
      %v3281 = vshrl.u32 %v3280, 7
      %v3282 = vsub.s32 %v3191, %v3281
      %v3283 = vrot.slane %v2886, %v3282
      %v3284 = vsel %vm3196, %v3283, %v3279
      %v3285 = vlaneseq
      %v3286 = vshrl.u32 %v3285, 7
      %v3287 = vsub.s32 %v3198, %v3286
      %v3288 = vrot.slane %v2887, %v3287
      %v3289 = vsel %vm3203, %v3288, %v3284
      %v3290 = vlaneseq
      %v3291 = vshrl.u32 %v3290, 7
      %v3292 = vsub.s32 %v3205, %v3291
      %v3293 = vrot.slane %v2888, %v3292
      %v3294 = vsel %vm3210, %v3293, %v3289
      %v3295 = vlaneseq
      %v3296 = vshrl.u32 %v3295, 7
      %v3297 = vsub.s32 %v3212, %v3296
      %v3298 = vrot.slane %v2889, %v3297
      %v3299 = vsel %vm3217, %v3298, %v3294
      %v3300 = vlaneseq
      %v3301 = vshrl.u32 %v3300, 7
      %v3302 = vsub.s32 %v3219, %v3301
      %v3303 = vrot.slane %v2890, %v3302
      %v3304 = vsel %vm3224, %v3303, %v3299
      %v3305 = vlaneseq
      %v3306 = vshrl.u32 %v3305, 7
      %v3307 = vsub.s32 %v3116, %v3306
      %v3308 = vrot.slane %v2891, %v3307
      %v3309 = vlaneseq
      %v3310 = vshrl.u32 %v3309, 7
      %v3311 = vsub.s32 %v3121, %v3310
      %v3312 = vrot.slane %v2892, %v3311
      %v3313 = vsel %vm3126, %v3312, %v3308
      %v3314 = vlaneseq
      %v3315 = vshrl.u32 %v3314, 7
      %v3316 = vsub.s32 %v3128, %v3315
      %v3317 = vrot.slane %v2893, %v3316
      %v3318 = vsel %vm3133, %v3317, %v3313
      %v3319 = vlaneseq
      %v3320 = vshrl.u32 %v3319, 7
      %v3321 = vsub.s32 %v3135, %v3320
      %v3322 = vrot.slane %v2894, %v3321
      %v3323 = vsel %vm3140, %v3322, %v3318
      %v3324 = vlaneseq
      %v3325 = vshrl.u32 %v3324, 7
      %v3326 = vsub.s32 %v3142, %v3325
      %v3327 = vrot.slane %v2895, %v3326
      %v3328 = vsel %vm3147, %v3327, %v3323
      %v3329 = vlaneseq
      %v3330 = vshrl.u32 %v3329, 7
      %v3331 = vsub.s32 %v3149, %v3330
      %v3332 = vrot.slane %v2896, %v3331
      %v3333 = vsel %vm3154, %v3332, %v3328
      %v3334 = vlaneseq
      %v3335 = vshrl.u32 %v3334, 7
      %v3336 = vsub.s32 %v3156, %v3335
      %v3337 = vrot.slane %v2897, %v3336
      %v3338 = vsel %vm3161, %v3337, %v3333
      %v3339 = vlaneseq
      %v3340 = vshrl.u32 %v3339, 7
      %v3341 = vsub.s32 %v3163, %v3340
      %v3342 = vrot.slane %v2898, %v3341
      %v3343 = vsel %vm3168, %v3342, %v3338
      %v3344 = vlaneseq
      %v3345 = vshrl.u32 %v3344, 7
      %v3346 = vsub.s32 %v3170, %v3345
      %v3347 = vrot.slane %v2899, %v3346
      %v3348 = vsel %vm3175, %v3347, %v3343
      %v3349 = vlaneseq
      %v3350 = vshrl.u32 %v3349, 7
      %v3351 = vsub.s32 %v3177, %v3350
      %v3352 = vrot.slane %v2900, %v3351
      %v3353 = vsel %vm3182, %v3352, %v3348
      %v3354 = vlaneseq
      %v3355 = vshrl.u32 %v3354, 7
      %v3356 = vsub.s32 %v3184, %v3355
      %v3357 = vrot.slane %v2901, %v3356
      %v3358 = vsel %vm3189, %v3357, %v3353
      %v3359 = vlaneseq
      %v3360 = vshrl.u32 %v3359, 7
      %v3361 = vsub.s32 %v3191, %v3360
      %v3362 = vrot.slane %v2902, %v3361
      %v3363 = vsel %vm3196, %v3362, %v3358
      %v3364 = vlaneseq
      %v3365 = vshrl.u32 %v3364, 7
      %v3366 = vsub.s32 %v3198, %v3365
      %v3367 = vrot.slane %v2903, %v3366
      %v3368 = vsel %vm3203, %v3367, %v3363
      %v3369 = vlaneseq
      %v3370 = vshrl.u32 %v3369, 7
      %v3371 = vsub.s32 %v3205, %v3370
      %v3372 = vrot.slane %v2904, %v3371
      %v3373 = vsel %vm3210, %v3372, %v3368
      %v3374 = vlaneseq
      %v3375 = vshrl.u32 %v3374, 7
      %v3376 = vsub.s32 %v3212, %v3375
      %v3377 = vrot.slane %v2905, %v3376
      %v3378 = vsel %vm3217, %v3377, %v3373
      %v3379 = vlaneseq
      %v3380 = vshrl.u32 %v3379, 7
      %v3381 = vsub.s32 %v3219, %v3380
      %v3382 = vrot.slane %v2906, %v3381
      %v3383 = vsel %vm3224, %v3382, %v3378
      %v3384 = vlaneseq
      %v3385 = vshrl.u32 %v3384, 7
      %v3386 = vsub.s32 %v3116, %v3385
      %v3387 = vrot.slane %v2907, %v3386
      %v3388 = vlaneseq
      %v3389 = vshrl.u32 %v3388, 7
      %v3390 = vsub.s32 %v3121, %v3389
      %v3391 = vrot.slane %v2908, %v3390
      %v3392 = vsel %vm3126, %v3391, %v3387
      %v3393 = vlaneseq
      %v3394 = vshrl.u32 %v3393, 7
      %v3395 = vsub.s32 %v3128, %v3394
      %v3396 = vrot.slane %v2909, %v3395
      %v3397 = vsel %vm3133, %v3396, %v3392
      %v3398 = vlaneseq
      %v3399 = vshrl.u32 %v3398, 7
      %v3400 = vsub.s32 %v3135, %v3399
      %v3401 = vrot.slane %v2910, %v3400
      %v3402 = vsel %vm3140, %v3401, %v3397
      %v3403 = vlaneseq
      %v3404 = vshrl.u32 %v3403, 7
      %v3405 = vsub.s32 %v3142, %v3404
      %v3406 = vrot.slane %v2911, %v3405
      %v3407 = vsel %vm3147, %v3406, %v3402
      %v3408 = vlaneseq
      %v3409 = vshrl.u32 %v3408, 7
      %v3410 = vsub.s32 %v3149, %v3409
      %v3411 = vrot.slane %v2912, %v3410
      %v3412 = vsel %vm3154, %v3411, %v3407
      %v3413 = vlaneseq
      %v3414 = vshrl.u32 %v3413, 7
      %v3415 = vsub.s32 %v3156, %v3414
      %v3416 = vrot.slane %v2913, %v3415
      %v3417 = vsel %vm3161, %v3416, %v3412
      %v3418 = vlaneseq
      %v3419 = vshrl.u32 %v3418, 7
      %v3420 = vsub.s32 %v3163, %v3419
      %v3421 = vrot.slane %v2914, %v3420
      %v3422 = vsel %vm3168, %v3421, %v3417
      %v3423 = vlaneseq
      %v3424 = vshrl.u32 %v3423, 7
      %v3425 = vsub.s32 %v3170, %v3424
      %v3426 = vrot.slane %v2915, %v3425
      %v3427 = vsel %vm3175, %v3426, %v3422
      %v3428 = vlaneseq
      %v3429 = vshrl.u32 %v3428, 7
      %v3430 = vsub.s32 %v3177, %v3429
      %v3431 = vrot.slane %v2916, %v3430
      %v3432 = vsel %vm3182, %v3431, %v3427
      %v3433 = vlaneseq
      %v3434 = vshrl.u32 %v3433, 7
      %v3435 = vsub.s32 %v3184, %v3434
      %v3436 = vrot.slane %v2917, %v3435
      %v3437 = vsel %vm3189, %v3436, %v3432
      %v3438 = vlaneseq
      %v3439 = vshrl.u32 %v3438, 7
      %v3440 = vsub.s32 %v3191, %v3439
      %v3441 = vrot.slane %v2918, %v3440
      %v3442 = vsel %vm3196, %v3441, %v3437
      %v3443 = vlaneseq
      %v3444 = vshrl.u32 %v3443, 7
      %v3445 = vsub.s32 %v3198, %v3444
      %v3446 = vrot.slane %v2919, %v3445
      %v3447 = vsel %vm3203, %v3446, %v3442
      %v3448 = vlaneseq
      %v3449 = vshrl.u32 %v3448, 7
      %v3450 = vsub.s32 %v3205, %v3449
      %v3451 = vrot.slane %v2920, %v3450
      %v3452 = vsel %vm3210, %v3451, %v3447
      %v3453 = vlaneseq
      %v3454 = vshrl.u32 %v3453, 7
      %v3455 = vsub.s32 %v3212, %v3454
      %v3456 = vrot.slane %v2921, %v3455
      %v3457 = vsel %vm3217, %v3456, %v3452
      %v3458 = vlaneseq
      %v3459 = vshrl.u32 %v3458, 7
      %v3460 = vsub.s32 %v3219, %v3459
      %v3461 = vrot.slane %v2922, %v3460
      %v3462 = vsel %vm3224, %v3461, %v3457
      %v3463 = vlaneseq
      %v3464 = vshrl.u32 %v3463, 7
      %v3465 = vsub.s32 %v3116, %v3464
      %v3466 = vrot.slane %v2923, %v3465
      %v3467 = vlaneseq
      %v3468 = vshrl.u32 %v3467, 7
      %v3469 = vsub.s32 %v3121, %v3468
      %v3470 = vrot.slane %v2924, %v3469
      %v3471 = vsel %vm3126, %v3470, %v3466
      %v3472 = vlaneseq
      %v3473 = vshrl.u32 %v3472, 7
      %v3474 = vsub.s32 %v3128, %v3473
      %v3475 = vrot.slane %v2925, %v3474
      %v3476 = vsel %vm3133, %v3475, %v3471
      %v3477 = vlaneseq
      %v3478 = vshrl.u32 %v3477, 7
      %v3479 = vsub.s32 %v3135, %v3478
      %v3480 = vrot.slane %v2926, %v3479
      %v3481 = vsel %vm3140, %v3480, %v3476
      %v3482 = vlaneseq
      %v3483 = vshrl.u32 %v3482, 7
      %v3484 = vsub.s32 %v3142, %v3483
      %v3485 = vrot.slane %v2927, %v3484
      %v3486 = vsel %vm3147, %v3485, %v3481
      %v3487 = vlaneseq
      %v3488 = vshrl.u32 %v3487, 7
      %v3489 = vsub.s32 %v3149, %v3488
      %v3490 = vrot.slane %v2928, %v3489
      %v3491 = vsel %vm3154, %v3490, %v3486
      %v3492 = vlaneseq
      %v3493 = vshrl.u32 %v3492, 7
      %v3494 = vsub.s32 %v3156, %v3493
      %v3495 = vrot.slane %v2929, %v3494
      %v3496 = vsel %vm3161, %v3495, %v3491
      %v3497 = vlaneseq
      %v3498 = vshrl.u32 %v3497, 7
      %v3499 = vsub.s32 %v3163, %v3498
      %v3500 = vrot.slane %v2930, %v3499
      %v3501 = vsel %vm3168, %v3500, %v3496
      %v3502 = vlaneseq
      %v3503 = vshrl.u32 %v3502, 7
      %v3504 = vsub.s32 %v3170, %v3503
      %v3505 = vrot.slane %v2931, %v3504
      %v3506 = vsel %vm3175, %v3505, %v3501
      %v3507 = vlaneseq
      %v3508 = vshrl.u32 %v3507, 7
      %v3509 = vsub.s32 %v3177, %v3508
      %v3510 = vrot.slane %v2932, %v3509
      %v3511 = vsel %vm3182, %v3510, %v3506
      %v3512 = vlaneseq
      %v3513 = vshrl.u32 %v3512, 7
      %v3514 = vsub.s32 %v3184, %v3513
      %v3515 = vrot.slane %v2933, %v3514
      %v3516 = vsel %vm3189, %v3515, %v3511
      %v3517 = vlaneseq
      %v3518 = vshrl.u32 %v3517, 7
      %v3519 = vsub.s32 %v3191, %v3518
      %v3520 = vrot.slane %v2934, %v3519
      %v3521 = vsel %vm3196, %v3520, %v3516
      %v3522 = vlaneseq
      %v3523 = vshrl.u32 %v3522, 7
      %v3524 = vsub.s32 %v3198, %v3523
      %v3525 = vrot.slane %v2935, %v3524
      %v3526 = vsel %vm3203, %v3525, %v3521
      %v3527 = vlaneseq
      %v3528 = vshrl.u32 %v3527, 7
      %v3529 = vsub.s32 %v3205, %v3528
      %v3530 = vrot.slane %v2936, %v3529
      %v3531 = vsel %vm3210, %v3530, %v3526
      %v3532 = vlaneseq
      %v3533 = vshrl.u32 %v3532, 7
      %v3534 = vsub.s32 %v3212, %v3533
      %v3535 = vrot.slane %v2937, %v3534
      %v3536 = vsel %vm3217, %v3535, %v3531
      %v3537 = vlaneseq
      %v3538 = vshrl.u32 %v3537, 7
      %v3539 = vsub.s32 %v3219, %v3538
      %v3540 = vrot.slane %v2938, %v3539
      %v3541 = vsel %vm3224, %v3540, %v3536
      %v3542 = vlaneseq
      %v3543 = vshrl.u32 %v3542, 7
      %v3544 = vsub.s32 %v3116, %v3543
      %v3545 = vrot.slane %v2939, %v3544
      %v3546 = vlaneseq
      %v3547 = vshrl.u32 %v3546, 7
      %v3548 = vsub.s32 %v3121, %v3547
      %v3549 = vrot.slane %v2940, %v3548
      %v3550 = vsel %vm3126, %v3549, %v3545
      %v3551 = vlaneseq
      %v3552 = vshrl.u32 %v3551, 7
      %v3553 = vsub.s32 %v3128, %v3552
      %v3554 = vrot.slane %v2941, %v3553
      %v3555 = vsel %vm3133, %v3554, %v3550
      %v3556 = vlaneseq
      %v3557 = vshrl.u32 %v3556, 7
      %v3558 = vsub.s32 %v3135, %v3557
      %v3559 = vrot.slane %v2942, %v3558
      %v3560 = vsel %vm3140, %v3559, %v3555
      %v3561 = vlaneseq
      %v3562 = vshrl.u32 %v3561, 7
      %v3563 = vsub.s32 %v3142, %v3562
      %v3564 = vrot.slane %v2943, %v3563
      %v3565 = vsel %vm3147, %v3564, %v3560
      %v3566 = vlaneseq
      %v3567 = vshrl.u32 %v3566, 7
      %v3568 = vsub.s32 %v3149, %v3567
      %v3569 = vrot.slane %v2944, %v3568
      %v3570 = vsel %vm3154, %v3569, %v3565
      %v3571 = vlaneseq
      %v3572 = vshrl.u32 %v3571, 7
      %v3573 = vsub.s32 %v3156, %v3572
      %v3574 = vrot.slane %v2945, %v3573
      %v3575 = vsel %vm3161, %v3574, %v3570
      %v3576 = vlaneseq
      %v3577 = vshrl.u32 %v3576, 7
      %v3578 = vsub.s32 %v3163, %v3577
      %v3579 = vrot.slane %v2946, %v3578
      %v3580 = vsel %vm3168, %v3579, %v3575
      %v3581 = vlaneseq
      %v3582 = vshrl.u32 %v3581, 7
      %v3583 = vsub.s32 %v3170, %v3582
      %v3584 = vrot.slane %v2947, %v3583
      %v3585 = vsel %vm3175, %v3584, %v3580
      %v3586 = vlaneseq
      %v3587 = vshrl.u32 %v3586, 7
      %v3588 = vsub.s32 %v3177, %v3587
      %v3589 = vrot.slane %v2948, %v3588
      %v3590 = vsel %vm3182, %v3589, %v3585
      %v3591 = vlaneseq
      %v3592 = vshrl.u32 %v3591, 7
      %v3593 = vsub.s32 %v3184, %v3592
      %v3594 = vrot.slane %v2949, %v3593
      %v3595 = vsel %vm3189, %v3594, %v3590
      %v3596 = vlaneseq
      %v3597 = vshrl.u32 %v3596, 7
      %v3598 = vsub.s32 %v3191, %v3597
      %v3599 = vrot.slane %v2950, %v3598
      %v3600 = vsel %vm3196, %v3599, %v3595
      %v3601 = vlaneseq
      %v3602 = vshrl.u32 %v3601, 7
      %v3603 = vsub.s32 %v3198, %v3602
      %v3604 = vrot.slane %v2951, %v3603
      %v3605 = vsel %vm3203, %v3604, %v3600
      %v3606 = vlaneseq
      %v3607 = vshrl.u32 %v3606, 7
      %v3608 = vsub.s32 %v3205, %v3607
      %v3609 = vrot.slane %v2952, %v3608
      %v3610 = vsel %vm3210, %v3609, %v3605
      %v3611 = vlaneseq
      %v3612 = vshrl.u32 %v3611, 7
      %v3613 = vsub.s32 %v3212, %v3612
      %v3614 = vrot.slane %v2953, %v3613
      %v3615 = vsel %vm3217, %v3614, %v3610
      %v3616 = vlaneseq
      %v3617 = vshrl.u32 %v3616, 7
      %v3618 = vsub.s32 %v3219, %v3617
      %v3619 = vrot.slane %v2954, %v3618
      %v3620 = vsel %vm3224, %v3619, %v3615
      %v3621 = vlaneseq
      %v3622 = vshrl.u32 %v3621, 7
      %v3623 = vsub.s32 %v3116, %v3622
      %v3624 = vrot.slane %v2955, %v3623
      %v3625 = vlaneseq
      %v3626 = vshrl.u32 %v3625, 7
      %v3627 = vsub.s32 %v3121, %v3626
      %v3628 = vrot.slane %v2956, %v3627
      %v3629 = vsel %vm3126, %v3628, %v3624
      %v3630 = vlaneseq
      %v3631 = vshrl.u32 %v3630, 7
      %v3632 = vsub.s32 %v3128, %v3631
      %v3633 = vrot.slane %v2957, %v3632
      %v3634 = vsel %vm3133, %v3633, %v3629
      %v3635 = vlaneseq
      %v3636 = vshrl.u32 %v3635, 7
      %v3637 = vsub.s32 %v3135, %v3636
      %v3638 = vrot.slane %v2958, %v3637
      %v3639 = vsel %vm3140, %v3638, %v3634
      %v3640 = vlaneseq
      %v3641 = vshrl.u32 %v3640, 7
      %v3642 = vsub.s32 %v3142, %v3641
      %v3643 = vrot.slane %v2959, %v3642
      %v3644 = vsel %vm3147, %v3643, %v3639
      %v3645 = vlaneseq
      %v3646 = vshrl.u32 %v3645, 7
      %v3647 = vsub.s32 %v3149, %v3646
      %v3648 = vrot.slane %v2960, %v3647
      %v3649 = vsel %vm3154, %v3648, %v3644
      %v3650 = vlaneseq
      %v3651 = vshrl.u32 %v3650, 7
      %v3652 = vsub.s32 %v3156, %v3651
      %v3653 = vrot.slane %v2961, %v3652
      %v3654 = vsel %vm3161, %v3653, %v3649
      %v3655 = vlaneseq
      %v3656 = vshrl.u32 %v3655, 7
      %v3657 = vsub.s32 %v3163, %v3656
      %v3658 = vrot.slane %v2962, %v3657
      %v3659 = vsel %vm3168, %v3658, %v3654
      %v3660 = vlaneseq
      %v3661 = vshrl.u32 %v3660, 7
      %v3662 = vsub.s32 %v3170, %v3661
      %v3663 = vrot.slane %v2963, %v3662
      %v3664 = vsel %vm3175, %v3663, %v3659
      %v3665 = vlaneseq
      %v3666 = vshrl.u32 %v3665, 7
      %v3667 = vsub.s32 %v3177, %v3666
      %v3668 = vrot.slane %v2964, %v3667
      %v3669 = vsel %vm3182, %v3668, %v3664
      %v3670 = vlaneseq
      %v3671 = vshrl.u32 %v3670, 7
      %v3672 = vsub.s32 %v3184, %v3671
      %v3673 = vrot.slane %v2965, %v3672
      %v3674 = vsel %vm3189, %v3673, %v3669
      %v3675 = vlaneseq
      %v3676 = vshrl.u32 %v3675, 7
      %v3677 = vsub.s32 %v3191, %v3676
      %v3678 = vrot.slane %v2966, %v3677
      %v3679 = vsel %vm3196, %v3678, %v3674
      %v3680 = vlaneseq
      %v3681 = vshrl.u32 %v3680, 7
      %v3682 = vsub.s32 %v3198, %v3681
      %v3683 = vrot.slane %v2967, %v3682
      %v3684 = vsel %vm3203, %v3683, %v3679
      %v3685 = vlaneseq
      %v3686 = vshrl.u32 %v3685, 7
      %v3687 = vsub.s32 %v3205, %v3686
      %v3688 = vrot.slane %v2968, %v3687
      %v3689 = vsel %vm3210, %v3688, %v3684
      %v3690 = vlaneseq
      %v3691 = vshrl.u32 %v3690, 7
      %v3692 = vsub.s32 %v3212, %v3691
      %v3693 = vrot.slane %v2969, %v3692
      %v3694 = vsel %vm3217, %v3693, %v3689
      %v3695 = vlaneseq
      %v3696 = vshrl.u32 %v3695, 7
      %v3697 = vsub.s32 %v3219, %v3696
      %v3698 = vrot.slane %v2970, %v3697
      %v3699 = vsel %vm3224, %v3698, %v3694
      %v3700 = vlaneseq
      %v3701 = vshrl.u32 %v3700, 7
      %v3702 = vsub.s32 %v3116, %v3701
      %v3703 = vrot.slane %v2971, %v3702
      %v3704 = vlaneseq
      %v3705 = vshrl.u32 %v3704, 7
      %v3706 = vsub.s32 %v3121, %v3705
      %v3707 = vrot.slane %v2972, %v3706
      %v3708 = vsel %vm3126, %v3707, %v3703
      %v3709 = vlaneseq
      %v3710 = vshrl.u32 %v3709, 7
      %v3711 = vsub.s32 %v3128, %v3710
      %v3712 = vrot.slane %v2973, %v3711
      %v3713 = vsel %vm3133, %v3712, %v3708
      %v3714 = vlaneseq
      %v3715 = vshrl.u32 %v3714, 7
      %v3716 = vsub.s32 %v3135, %v3715
      %v3717 = vrot.slane %v2974, %v3716
      %v3718 = vsel %vm3140, %v3717, %v3713
      %v3719 = vlaneseq
      %v3720 = vshrl.u32 %v3719, 7
      %v3721 = vsub.s32 %v3142, %v3720
      %v3722 = vrot.slane %v2975, %v3721
      %v3723 = vsel %vm3147, %v3722, %v3718
      %v3724 = vlaneseq
      %v3725 = vshrl.u32 %v3724, 7
      %v3726 = vsub.s32 %v3149, %v3725
      %v3727 = vrot.slane %v2976, %v3726
      %v3728 = vsel %vm3154, %v3727, %v3723
      %v3729 = vlaneseq
      %v3730 = vshrl.u32 %v3729, 7
      %v3731 = vsub.s32 %v3156, %v3730
      %v3732 = vrot.slane %v2977, %v3731
      %v3733 = vsel %vm3161, %v3732, %v3728
      %v3734 = vlaneseq
      %v3735 = vshrl.u32 %v3734, 7
      %v3736 = vsub.s32 %v3163, %v3735
      %v3737 = vrot.slane %v2978, %v3736
      %v3738 = vsel %vm3168, %v3737, %v3733
      %v3739 = vlaneseq
      %v3740 = vshrl.u32 %v3739, 7
      %v3741 = vsub.s32 %v3170, %v3740
      %v3742 = vrot.slane %v2979, %v3741
      %v3743 = vsel %vm3175, %v3742, %v3738
      %v3744 = vlaneseq
      %v3745 = vshrl.u32 %v3744, 7
      %v3746 = vsub.s32 %v3177, %v3745
      %v3747 = vrot.slane %v2980, %v3746
      %v3748 = vsel %vm3182, %v3747, %v3743
      %v3749 = vlaneseq
      %v3750 = vshrl.u32 %v3749, 7
      %v3751 = vsub.s32 %v3184, %v3750
      %v3752 = vrot.slane %v2981, %v3751
      %v3753 = vsel %vm3189, %v3752, %v3748
      %v3754 = vlaneseq
      %v3755 = vshrl.u32 %v3754, 7
      %v3756 = vsub.s32 %v3191, %v3755
      %v3757 = vrot.slane %v2982, %v3756
      %v3758 = vsel %vm3196, %v3757, %v3753
      %v3759 = vlaneseq
      %v3760 = vshrl.u32 %v3759, 7
      %v3761 = vsub.s32 %v3198, %v3760
      %v3762 = vrot.slane %v2983, %v3761
      %v3763 = vsel %vm3203, %v3762, %v3758
      %v3764 = vlaneseq
      %v3765 = vshrl.u32 %v3764, 7
      %v3766 = vsub.s32 %v3205, %v3765
      %v3767 = vrot.slane %v2984, %v3766
      %v3768 = vsel %vm3210, %v3767, %v3763
      %v3769 = vlaneseq
      %v3770 = vshrl.u32 %v3769, 7
      %v3771 = vsub.s32 %v3212, %v3770
      %v3772 = vrot.slane %v2985, %v3771
      %v3773 = vsel %vm3217, %v3772, %v3768
      %v3774 = vlaneseq
      %v3775 = vshrl.u32 %v3774, 7
      %v3776 = vsub.s32 %v3219, %v3775
      %v3777 = vrot.slane %v2986, %v3776
      %v3778 = vsel %vm3224, %v3777, %v3773
      %vm3779 = vcmask 1041409
      %v3780 = vsel %vm3779, %v3304, %v3225
      %vm3781 = vcmask 1042434
      %v3782 = vsel %vm3781, %v3383, %v3780
      %vm3783 = vcmask 1043459
      %v3784 = vsel %vm3783, %v3462, %v3782
      %vm3785 = vcmask 1044484
      %v3786 = vsel %vm3785, %v3541, %v3784
      %vm3787 = vcmask 1045509
      %v3788 = vsel %vm3787, %v3620, %v3786
      %vm3789 = vcmask 1046534
      %v3790 = vsel %vm3789, %v3699, %v3788
      %vm3791 = vcmask 1047559
      %v3792 = vsel %vm3791, %v3778, %v3790
      %3794 = vst [vmem:[%s299] sm:$0xff] %v3792
      %p3795 = scmp.lt.s32.totalorder %s19, 2
      %s3796 = scalar_select %p3795, %s19, 2
      %s3797 = smul.addr %s3796, 8
      %s3798 = scalar_lea.vmem %s7, %s3797
      // Predicated region
      $region49: #{regular_net_forward.1} parent=47 // pred_check
        %p3799 = pneg %p189
      $region50: #{regular_net_forward.1} parent=47 // pred_check_branch
        %3801 = sbr.rel (%p3799) target = $region52
      $region51: #{regular_net_forward.1} parent=47 // pred_region
        _
      $region52: #{regular_net_forward.1} parent=47 // pred_fallthru
        _
    $region48: #{regular_net_forward.1} parent=5 // pred_fallthru
      _
    %p3802 = scmp.le.s32.totalorder 2, %s14
    // Predicated region
    $region53: #{regular_net_forward.1} parent=5 // pred_check
      %p3803 = pneg %p3802
    $region54: #{regular_net_forward.1} parent=5 // pred_check_branch
      %3805 = sbr.rel (%p3803) target = $region56
    $region55: #{regular_net_forward.1} parent=5 // pred_region
      %s3806 = ssub.s32 %s14, 2
      // Predicated region
      $region57: #{regular_net_forward.1} parent=55 // pred_check
        %p3807 = pneg %p195
      $region58: #{regular_net_forward.1} parent=55 // pred_check_branch
        %3809 = sbr.rel (%p3807) target = $region60
      $region59: #{regular_net_forward.1} parent=55 // pred_region
        %p3810 = scmp.lt.s32.totalorder %s20, 2
        %s3811 = scalar_select %p3810, %s20, 2
        %s3812 = smul.addr %s3811, 8
        %s3813 = scalar_lea.vmem %s7, %s3812
      $region60: #{regular_net_forward.1} parent=55 // pred_fallthru
        _
    $region56: #{regular_net_forward.1} parent=5 // pred_fallthru
      _
  $region6: #{regular_net_forward.1} parent=0 // loop_footer
    %s18 = sadd.s32 1, %s14
  $region7: #{regular_net_forward.1} parent=0 // loop_footer_branch
    %13 = sbr.rel target = $region3
  $region8: #{regular_net_forward.1} parent=0 // loop_exit
    _

</llo_original>
